<compile_context>
chip_gen: v5e
topology: v5e:2x2
jax: 0.10.0
libtpu: 0.0.40
codegen_flags: <defaults>
</compile_context>

<pallas_src>
import functools

import jax
import jax.numpy as jnp
import numpy as np
from jax.experimental import pallas as pl
from jax.experimental.pallas import tpu as pltpu

BN_EPS = 1e-3  # matches nn.BatchNorm2d(out_channels, eps=0.001)

_LANE = 128
_ACC_BUDGET_BYTES = 2 * 1024 * 1024   # f32 accumulator budget per output-row chunk


def _round_up(a, b):
    return (a + b - 1) // b * b


@functools.lru_cache(maxsize=1)
def _vmem_limit_bytes():
    # v5e/v6e have 128 MiB VMEM -> allow 64 MiB; v7x has 64 MiB -> stay at 32 MiB.
    try:
        cap = pltpu.get_tpu_info().vmem_capacity_bytes
    except Exception:
        cap = 64 * 1024 * 1024
    return 64 * 1024 * 1024 if cap >= 128 * 1024 * 1024 else 32 * 1024 * 1024


def _compiler_params(n_grid_dims):
    return pltpu.CompilerParams(
        dimension_semantics=("parallel",) * n_grid_dims,
        vmem_limit_bytes=_vmem_limit_bytes(),
    )


def _resident_spec(block_shape, index_map):
    """BlockSpec for constant-index (resident) operands; single-buffered if supported."""
    try:
        return pl.BlockSpec(block_shape, index_map, pipeline_mode=pl.Buffered(1))
    except (TypeError, AttributeError):
        return pl.BlockSpec(block_shape, index_map)


# --------------------------------------------------------------------------- #
# Pass 1: implicit-im2col conv (KH*KW shifted MXU matmuls) + BN partial stats
# --------------------------------------------------------------------------- #
def _make_conv_stats_kernel(kh, kw, stride, h_out, w_out, rows_chunk, c_pad):
    def kernel(x_ref, w_ref, y_ref, stats_ref):
        # x_ref:     (1, H_pad, W_pad, C_in)   padded NHWC image (matmul dtype)
        # w_ref:     (KH*KW, C_in, C_pad)      per-tap weights (resident)
        # y_ref:     (1, H_out*W_out, C_pad)   conv output (bf16/f32)
        # stats_ref: (1, 2, C_pad) f32         row 0: sum(y), row 1: sum(y^2)
        c_in = x_ref.shape[-1]
        s = jnp.zeros((1, c_pad), jnp.float32)
        ss = jnp.zeros((1, c_pad), jnp.float32)
        r0 = 0
        while r0 < h_out:                       # static Python loop over row chunks
            rc = min(rows_chunk, h_out - r0)
            acc = jnp.zeros((rc * w_out, c_pad), jnp.float32)
            for i in range(kh):
                for j in range(kw):
                    if stride == 1:
                        xs = x_ref[0, pl.ds(r0 + i, rc), pl.ds(j, w_out), :]
                    else:
                        xs = x_ref[0, pl.ds(stride * r0 + i, rc, stride),
                                   pl.ds(j, w_out, stride), :]
                    xs = xs.reshape(rc * w_out, c_in)
                    acc = acc + jnp.dot(xs, w_ref[i * kw + j],
                                        preferred_element_type=jnp.float32)
            # BN partial statistics from the f32 accumulator, before the cast.
            s = s + jnp.sum(acc, axis=0, keepdims=True)
            ss = ss + jnp.sum(acc * acc, axis=0, keepdims=True)
            y_ref[0, pl.ds(r0 * w_out, rc * w_out), :] = acc.astype(y_ref.dtype)
            r0 += rc
        stats_ref[0, pl.ds(0, 1), :] = s
        stats_ref[0, pl.ds(1, 1), :] = ss
    return kernel


# --------------------------------------------------------------------------- #
# Pass 2: folded BatchNorm affine + ReLU  (1 FMA + 1 max per element)
# --------------------------------------------------------------------------- #
def _bn_relu_kernel(y_ref, scale_ref, shift_ref, o_ref):
    # y_ref: (1, mb, C_pad); scale/shift: (1, 1, C_pad) f32; o_ref: (1, mb, C_pad)
    y = y_ref[...].astype(jnp.float32)
    o_ref[...] = jnp.maximum(y * scale_ref[...] + shift_ref[...], 0.0).astype(o_ref.dtype)


def _pick_block_rows(m_img, bytes_per_row, multiple, target_bytes=4 * 1024 * 1024):
    """Largest row count <= target that divides m_img and is a multiple of `multiple`."""
    target = max(multiple, target_bytes // max(1, bytes_per_row))
    if m_img <= target:
        return m_img
    d = (min(m_img, target) // multiple) * multiple
    while d >= multiple:
        if m_img % d == 0:
            return d
        d -= multiple
    return m_img


@functools.partial(
    jax.jit, static_argnames=("stride", "padding", "matmul_dtype", "out_layout"))
def basic_conv2d(x, weight, gamma, beta, *, stride=1, padding=1,
                 matmul_dtype=jnp.bfloat16, out_layout="NCHW"):
    """Forward of BasicConv2d.

    x:      (N, C_in, H, W)        float32, NCHW
    weight: (C_out, C_in, KH, KW)  float32 (nn.Conv2d weight, bias=False)
    gamma:  (C_out,)               BN weight
    beta:   (C_out,)               BN bias
    returns (N, C_out, H_out, W_out) in x.dtype (or NHWC if out_layout="NHWC")
    """
    n, c_in, h, w = x.shape
    c_out, c_in_w, kh, kw = weight.shape
    assert c_in == c_in_w, "channel mismatch between input and conv weight"

    h_out = (h + 2 * padding - kh) // stride + 1
    w_out = (w + 2 * padding - kw) // stride + 1
    m_img = h_out * w_out
    c_pad = _round_up(c_out, _LANE)          # lane-dense output channels
    c_in_pad = _round_up(c_in, 8)            # sublane-aligned contraction dim
    h_in = h + 2 * padding
    w_in = w + 2 * padding

    y_dtype = np.dtype(matmul_dtype)         # bf16 intermediate halves inter-pass HBM
    out_dtype = np.dtype(x.dtype)

    # NCHW -> NHWC, spatial zero-pad, channel pad, cast (one fused XLA pass).
    x_nhwc = jnp.transpose(x, (0, 2, 3, 1))
    x_p = jnp.pad(
        x_nhwc,
        ((0, 0), (padding, padding), (padding, padding), (0, c_in_pad - c_in)),
    ).astype(matmul_dtype)

    # (C_out, C_in, KH, KW) -> (KH*KW, C_in_pad, C_pad): one (C_in, C_pad) mat per tap.
    w_t = jnp.transpose(weight, (2, 3, 1, 0)).reshape(kh * kw, c_in, c_out)
    w_t = jnp.pad(w_t, ((0, 0), (0, c_in_pad - c_in), (0, c_pad - c_out))
                  ).astype(matmul_dtype)

    # Row chunking keeps the f32 accumulator small inside the kernel.
    row_bytes = w_out * c_pad * 4
    rows_chunk = int(max(1, min(h_out, _ACC_BUDGET_BYTES // max(1, row_bytes))))

    # --- pass 1: implicit-im2col conv + per-image BN partial sums ----------- #
    conv_kernel = _make_conv_stats_kernel(kh, kw, stride, h_out, w_out,
                                          rows_chunk, c_pad)
    y_conv, stats = pl.pallas_call(
        conv_kernel,
        grid=(n,),
        in_specs=[
            pl.BlockSpec((1, h_in, w_in, c_in_pad), lambda b: (b, 0, 0, 0)),
            _resident_spec((kh * kw, c_in_pad, c_pad), lambda b: (0, 0, 0)),
        ],
        out_specs=(
            pl.BlockSpec((1, m_img, c_pad), lambda b: (b, 0, 0)),
            pl.BlockSpec((1, 2, c_pad), lambda b: (b, 0, 0)),
        ),
        out_shape=(
            jax.ShapeDtypeStruct((n, m_img, c_pad), y_dtype),
            jax.ShapeDtypeStruct((n, 2, c_pad), jnp.float32),
        ),
        compiler_params=_compiler_params(1),
    )(x_p, w_t)

    # --- tiny global reduction + BN folding (O(C) work, done in XLA) -------- #
    count = n * m_img
    sum_c = jnp.sum(stats[:, 0, :], axis=0)                 # (C_pad,)
    ssq_c = jnp.sum(stats[:, 1, :], axis=0)                 # (C_pad,)
    mean = sum_c / count
    # One-pass biased variance in f32 (PyTorch normalizes with biased batch var).
    # TODO(synk): Welford / shifted accumulation for |mean| >> std regimes.
    var = jnp.maximum(ssq_c / count - mean * mean, 0.0)
    inv_std = jax.lax.rsqrt(var + BN_EPS)
    gamma_p = jnp.pad(gamma.astype(jnp.float32), (0, c_pad - c_out))
    beta_p = jnp.pad(beta.astype(jnp.float32), (0, c_pad - c_out))
    scale = (gamma_p * inv_std).reshape(1, 1, c_pad)
    shift = (beta_p - mean * gamma_p * inv_std).reshape(1, 1, c_pad)

    # --- pass 2: folded BN affine + ReLU ------------------------------------ #
    mult = 16 if y_dtype.itemsize == 2 else 8
    mb = _pick_block_rows(m_img, c_pad * y_dtype.itemsize, mult)
    alias = {0: 0} if (out_dtype == y_dtype) else {}   # in-place over y when possible
    out_flat = pl.pallas_call(
        _bn_relu_kernel,
        grid=(n, m_img // mb),
        in_specs=[
            pl.BlockSpec((1, mb, c_pad), lambda b, i: (b, i, 0)),
            _resident_spec((1, 1, c_pad), lambda b, i: (0, 0, 0)),
            _resident_spec((1, 1, c_pad), lambda b, i: (0, 0, 0)),
        ],
        out_specs=pl.BlockSpec((1, mb, c_pad), lambda b, i: (b, i, 0)),
        out_shape=jax.ShapeDtypeStruct((n, m_img, c_pad), out_dtype),
        compiler_params=_compiler_params(2),
        input_output_aliases=alias,
    )(y_conv, scale, shift)

    # Strip channel padding; output is naturally NHWC-flat (lane-dense).
    out = out_flat[:, :, :c_out].reshape(n, h_out, w_out, c_out)
    if out_layout == "NCHW":     # module semantics; NHWC skips this extra round trip
        out = jnp.transpose(out, (0, 3, 1, 2))
    return out


def _reference(x, weight, gamma, beta, *, stride=1, padding=1):
    """Pure-JAX reference (f32 conv, biased batch variance) for sanity checking."""
    y = jax.lax.conv_general_dilated(
        x, weight, window_strides=(stride, stride),
        padding=[(padding, padding), (padding, padding)],
        dimension_numbers=("NCHW", "OIHW", "NCHW"))
    mean = jnp.mean(y, axis=(0, 2, 3), keepdims=True)
    var = jnp.mean((y - mean) ** 2, axis=(0, 2, 3), keepdims=True)
    y_hat = (y - mean) * jax.lax.rsqrt(var + BN_EPS)
    out = y_hat * gamma.reshape(1, -1, 1, 1) + beta.reshape(1, -1, 1, 1)
    return jnp.maximum(out, 0.0)


if __name__ == "__main__":
    # Small deterministic example consistent with
    # BasicConv2d(in_channels=4, out_channels=8, kernel_size=3, padding=1).
    key = jax.random.PRNGKey(0)
    k_x, k_w, k_g, k_b = jax.random.split(key, 4)

    N, C_IN, H, W = 2, 4, 16, 16
    C_OUT, KH, KW = 8, 3, 3

    x = jax.random.normal(k_x, (N, C_IN, H, W), dtype=jnp.float32)
    weight = jax.random.normal(k_w, (C_OUT, C_IN, KH, KW), dtype=jnp.float32) * 0.1
    gamma = jnp.ones((C_OUT,), jnp.float32) + 0.1 * jax.random.normal(k_g, (C_OUT,), jnp.float32)
    beta = 0.1 * jax.random.normal(k_b, (C_OUT,), jnp.float32)

    ref = jax.block_until_ready(_reference(x, weight, gamma, beta, stride=1, padding=1))

    # Default fast path: bf16 MXU matmuls, bf16 intermediate, f32 stats/affine.
    out_bf16 = jax.block_until_ready(
        basic_conv2d(x, weight, gamma, beta, stride=1, padding=1))
    np.testing.assert_allclose(np.asarray(out_bf16), np.asarray(ref), atol=4e-2, rtol=4e-2)

    # f32 validation path (also exercises the in-place aliased pass 2).
    out_f32 = jax.block_until_ready(
        basic_conv2d(x, weight, gamma, beta, stride=1, padding=1,
                     matmul_dtype=jnp.float32))
    np.testing.assert_allclose(np.asarray(out_f32), np.asarray(ref), atol=1e-3, rtol=1e-3)

    print("KERNEL_OK")
</pallas_src>

<mosaic_0001>
module attributes {stable_mosaic.version = 11 : i64} {
  func.func @kernel(%arg0: i32, %arg1: memref<1x18x18x8xbf16, #tpu.memory_space<vmem>>, %arg2: memref<9x8x128xbf16, #tpu.memory_space<vmem>>, %arg3: memref<1x256x128xbf16, #tpu.memory_space<vmem>>, %arg4: memref<1x2x128xf32, #tpu.memory_space<vmem>>) attributes {dimension_semantics = [#tpu.dimension_semantics<parallel>], iteration_bounds = array<i64: 2>, scalar_prefetch = 0 : i64, scratch_operands = 0 : i64, tpu.core_type = #tpu.core_type<tc>, window_params = [{transform_indices = @transform_0, window_bounds = array<i64: 1, 18, 18, 8>}, {pipeline_mode = #tpu.pipeline_mode<synchronous>, transform_indices = @transform_1, window_bounds = array<i64: 9, 8, 128>}, {transform_indices = @transform_2, window_bounds = array<i64: 1, 256, 128>}, {transform_indices = @transform_3, window_bounds = array<i64: 1, 2, 128>}]} {
    %cst = arith.constant 0.000000e+00 : f32
    %0 = vector.broadcast %cst : f32 to vector<1x128xf32>
    %cst_0 = arith.constant 0.000000e+00 : f32
    %1 = vector.broadcast %cst_0 : f32 to vector<1x128xf32>
    %cst_1 = arith.constant 0.000000e+00 : f32
    %2 = vector.broadcast %cst_1 : f32 to vector<256x128xf32>
    %c0 = arith.constant 0 : index
    %c0_2 = arith.constant 0 : index
    %c0_3 = arith.constant 0 : index
    %c0_4 = arith.constant 0 : index
    %3 = vector.load %arg1[%c0, %c0_2, %c0_3, %c0_4] : memref<1x18x18x8xbf16, #tpu.memory_space<vmem>>, vector<1x16x16x8xbf16>
    %4 = vector.shape_cast %3 : vector<1x16x16x8xbf16> to vector<16x16x8xbf16>
    %5 = vector.shape_cast %4 : vector<16x16x8xbf16> to vector<256x8xbf16>
    %c0_5 = arith.constant 0 : index
    %c0_6 = arith.constant 0 : index
    %c0_7 = arith.constant 0 : index
    %6 = vector.load %arg2[%c0_5, %c0_6, %c0_7] : memref<9x8x128xbf16, #tpu.memory_space<vmem>>, vector<1x8x128xbf16>
    %7 = vector.shape_cast %6 : vector<1x8x128xbf16> to vector<8x128xbf16>
    %cst_8 = arith.constant dense<0.000000e+00> : vector<256x128xf32>
    %8 = tpu.matmul %5, %7, %cst_8 {dimension_numbers = #tpu.dot_dimension_numbers<[1], [0], [0], [1], [0, 0, 1, 1], [], []>} : vector<256x8xbf16>, vector<8x128xbf16>, vector<256x128xf32> -> vector<256x128xf32>
    %9 = arith.addf %2, %8 : vector<256x128xf32>
    %c0_9 = arith.constant 0 : index
    %c0_10 = arith.constant 0 : index
    %c1 = arith.constant 1 : index
    %c0_11 = arith.constant 0 : index
    %10 = vector.load %arg1[%c0_9, %c0_10, %c1, %c0_11] : memref<1x18x18x8xbf16, #tpu.memory_space<vmem>>, vector<1x16x16x8xbf16>
    %11 = vector.shape_cast %10 : vector<1x16x16x8xbf16> to vector<16x16x8xbf16>
    %12 = vector.shape_cast %11 : vector<16x16x8xbf16> to vector<256x8xbf16>
    %c1_12 = arith.constant 1 : index
    %c0_13 = arith.constant 0 : index
    %c0_14 = arith.constant 0 : index
    %13 = vector.load %arg2[%c1_12, %c0_13, %c0_14] : memref<9x8x128xbf16, #tpu.memory_space<vmem>>, vector<1x8x128xbf16>
    %14 = vector.shape_cast %13 : vector<1x8x128xbf16> to vector<8x128xbf16>
    %cst_15 = arith.constant dense<0.000000e+00> : vector<256x128xf32>
    %15 = tpu.matmul %12, %14, %cst_15 {dimension_numbers = #tpu.dot_dimension_numbers<[1], [0], [0], [1], [0, 0, 1, 1], [], []>} : vector<256x8xbf16>, vector<8x128xbf16>, vector<256x128xf32> -> vector<256x128xf32>
    %16 = arith.addf %9, %15 : vector<256x128xf32>
    %c0_16 = arith.constant 0 : index
    %c0_17 = arith.constant 0 : index
    %c2 = arith.constant 2 : index
    %c0_18 = arith.constant 0 : index
    %17 = vector.load %arg1[%c0_16, %c0_17, %c2, %c0_18] : memref<1x18x18x8xbf16, #tpu.memory_space<vmem>>, vector<1x16x16x8xbf16>
    %18 = vector.shape_cast %17 : vector<1x16x16x8xbf16> to vector<16x16x8xbf16>
    %19 = vector.shape_cast %18 : vector<16x16x8xbf16> to vector<256x8xbf16>
    %c2_19 = arith.constant 2 : index
    %c0_20 = arith.constant 0 : index
    %c0_21 = arith.constant 0 : index
    %20 = vector.load %arg2[%c2_19, %c0_20, %c0_21] : memref<9x8x128xbf16, #tpu.memory_space<vmem>>, vector<1x8x128xbf16>
    %21 = vector.shape_cast %20 : vector<1x8x128xbf16> to vector<8x128xbf16>
    %cst_22 = arith.constant dense<0.000000e+00> : vector<256x128xf32>
    %22 = tpu.matmul %19, %21, %cst_22 {dimension_numbers = #tpu.dot_dimension_numbers<[1], [0], [0], [1], [0, 0, 1, 1], [], []>} : vector<256x8xbf16>, vector<8x128xbf16>, vector<256x128xf32> -> vector<256x128xf32>
    %23 = arith.addf %16, %22 : vector<256x128xf32>
    %c0_23 = arith.constant 0 : index
    %c1_24 = arith.constant 1 : index
    %c0_25 = arith.constant 0 : index
    %c0_26 = arith.constant 0 : index
    %24 = vector.load %arg1[%c0_23, %c1_24, %c0_25, %c0_26] : memref<1x18x18x8xbf16, #tpu.memory_space<vmem>>, vector<1x16x16x8xbf16>
    %25 = vector.shape_cast %24 : vector<1x16x16x8xbf16> to vector<16x16x8xbf16>
    %26 = vector.shape_cast %25 : vector<16x16x8xbf16> to vector<256x8xbf16>
    %c3 = arith.constant 3 : index
    %c0_27 = arith.constant 0 : index
    %c0_28 = arith.constant 0 : index
    %27 = vector.load %arg2[%c3, %c0_27, %c0_28] : memref<9x8x128xbf16, #tpu.memory_space<vmem>>, vector<1x8x128xbf16>
    %28 = vector.shape_cast %27 : vector<1x8x128xbf16> to vector<8x128xbf16>
    %cst_29 = arith.constant dense<0.000000e+00> : vector<256x128xf32>
    %29 = tpu.matmul %26, %28, %cst_29 {dimension_numbers = #tpu.dot_dimension_numbers<[1], [0], [0], [1], [0, 0, 1, 1], [], []>} : vector<256x8xbf16>, vector<8x128xbf16>, vector<256x128xf32> -> vector<256x128xf32>
    %30 = arith.addf %23, %29 : vector<256x128xf32>
    %c0_30 = arith.constant 0 : index
    %c1_31 = arith.constant 1 : index
    %c1_32 = arith.constant 1 : index
    %c0_33 = arith.constant 0 : index
    %31 = vector.load %arg1[%c0_30, %c1_31, %c1_32, %c0_33] : memref<1x18x18x8xbf16, #tpu.memory_space<vmem>>, vector<1x16x16x8xbf16>
    %32 = vector.shape_cast %31 : vector<1x16x16x8xbf16> to vector<16x16x8xbf16>
    %33 = vector.shape_cast %32 : vector<16x16x8xbf16> to vector<256x8xbf16>
    %c4 = arith.constant 4 : index
    %c0_34 = arith.constant 0 : index
    %c0_35 = arith.constant 0 : index
    %34 = vector.load %arg2[%c4, %c0_34, %c0_35] : memref<9x8x128xbf16, #tpu.memory_space<vmem>>, vector<1x8x128xbf16>
    %35 = vector.shape_cast %34 : vector<1x8x128xbf16> to vector<8x128xbf16>
    %cst_36 = arith.constant dense<0.000000e+00> : vector<256x128xf32>
    %36 = tpu.matmul %33, %35, %cst_36 {dimension_numbers = #tpu.dot_dimension_numbers<[1], [0], [0], [1], [0, 0, 1, 1], [], []>} : vector<256x8xbf16>, vector<8x128xbf16>, vector<256x128xf32> -> vector<256x128xf32>
    %37 = arith.addf %30, %36 : vector<256x128xf32>
    %c0_37 = arith.constant 0 : index
    %c1_38 = arith.constant 1 : index
    %c2_39 = arith.constant 2 : index
    %c0_40 = arith.constant 0 : index
    %38 = vector.load %arg1[%c0_37, %c1_38, %c2_39, %c0_40] : memref<1x18x18x8xbf16, #tpu.memory_space<vmem>>, vector<1x16x16x8xbf16>
    %39 = vector.shape_cast %38 : vector<1x16x16x8xbf16> to vector<16x16x8xbf16>
    %40 = vector.shape_cast %39 : vector<16x16x8xbf16> to vector<256x8xbf16>
    %c5 = arith.constant 5 : index
    %c0_41 = arith.constant 0 : index
    %c0_42 = arith.constant 0 : index
    %41 = vector.load %arg2[%c5, %c0_41, %c0_42] : memref<9x8x128xbf16, #tpu.memory_space<vmem>>, vector<1x8x128xbf16>
    %42 = vector.shape_cast %41 : vector<1x8x128xbf16> to vector<8x128xbf16>
    %cst_43 = arith.constant dense<0.000000e+00> : vector<256x128xf32>
    %43 = tpu.matmul %40, %42, %cst_43 {dimension_numbers = #tpu.dot_dimension_numbers<[1], [0], [0], [1], [0, 0, 1, 1], [], []>} : vector<256x8xbf16>, vector<8x128xbf16>, vector<256x128xf32> -> vector<256x128xf32>
    %44 = arith.addf %37, %43 : vector<256x128xf32>
    %c0_44 = arith.constant 0 : index
    %c2_45 = arith.constant 2 : index
    %c0_46 = arith.constant 0 : index
    %c0_47 = arith.constant 0 : index
    %45 = vector.load %arg1[%c0_44, %c2_45, %c0_46, %c0_47] : memref<1x18x18x8xbf16, #tpu.memory_space<vmem>>, vector<1x16x16x8xbf16>
    %46 = vector.shape_cast %45 : vector<1x16x16x8xbf16> to vector<16x16x8xbf16>
    %47 = vector.shape_cast %46 : vector<16x16x8xbf16> to vector<256x8xbf16>
    %c6 = arith.constant 6 : index
    %c0_48 = arith.constant 0 : index
    %c0_49 = arith.constant 0 : index
    %48 = vector.load %arg2[%c6, %c0_48, %c0_49] : memref<9x8x128xbf16, #tpu.memory_space<vmem>>, vector<1x8x128xbf16>
    %49 = vector.shape_cast %48 : vector<1x8x128xbf16> to vector<8x128xbf16>
    %cst_50 = arith.constant dense<0.000000e+00> : vector<256x128xf32>
    %50 = tpu.matmul %47, %49, %cst_50 {dimension_numbers = #tpu.dot_dimension_numbers<[1], [0], [0], [1], [0, 0, 1, 1], [], []>} : vector<256x8xbf16>, vector<8x128xbf16>, vector<256x128xf32> -> vector<256x128xf32>
    %51 = arith.addf %44, %50 : vector<256x128xf32>
    %c0_51 = arith.constant 0 : index
    %c2_52 = arith.constant 2 : index
    %c1_53 = arith.constant 1 : index
    %c0_54 = arith.constant 0 : index
    %52 = vector.load %arg1[%c0_51, %c2_52, %c1_53, %c0_54] : memref<1x18x18x8xbf16, #tpu.memory_space<vmem>>, vector<1x16x16x8xbf16>
    %53 = vector.shape_cast %52 : vector<1x16x16x8xbf16> to vector<16x16x8xbf16>
    %54 = vector.shape_cast %53 : vector<16x16x8xbf16> to vector<256x8xbf16>
    %c7 = arith.constant 7 : index
    %c0_55 = arith.constant 0 : index
    %c0_56 = arith.constant 0 : index
    %55 = vector.load %arg2[%c7, %c0_55, %c0_56] : memref<9x8x128xbf16, #tpu.memory_space<vmem>>, vector<1x8x128xbf16>
    %56 = vector.shape_cast %55 : vector<1x8x128xbf16> to vector<8x128xbf16>
    %cst_57 = arith.constant dense<0.000000e+00> : vector<256x128xf32>
    %57 = tpu.matmul %54, %56, %cst_57 {dimension_numbers = #tpu.dot_dimension_numbers<[1], [0], [0], [1], [0, 0, 1, 1], [], []>} : vector<256x8xbf16>, vector<8x128xbf16>, vector<256x128xf32> -> vector<256x128xf32>
    %58 = arith.addf %51, %57 : vector<256x128xf32>
    %c0_58 = arith.constant 0 : index
    %c2_59 = arith.constant 2 : index
    %c2_60 = arith.constant 2 : index
    %c0_61 = arith.constant 0 : index
    %59 = vector.load %arg1[%c0_58, %c2_59, %c2_60, %c0_61] : memref<1x18x18x8xbf16, #tpu.memory_space<vmem>>, vector<1x16x16x8xbf16>
    %60 = vector.shape_cast %59 : vector<1x16x16x8xbf16> to vector<16x16x8xbf16>
    %61 = vector.shape_cast %60 : vector<16x16x8xbf16> to vector<256x8xbf16>
    %c8 = arith.constant 8 : index
    %c0_62 = arith.constant 0 : index
    %c0_63 = arith.constant 0 : index
    %62 = vector.load %arg2[%c8, %c0_62, %c0_63] : memref<9x8x128xbf16, #tpu.memory_space<vmem>>, vector<1x8x128xbf16>
    %63 = vector.shape_cast %62 : vector<1x8x128xbf16> to vector<8x128xbf16>
    %cst_64 = arith.constant dense<0.000000e+00> : vector<256x128xf32>
    %64 = tpu.matmul %61, %63, %cst_64 {dimension_numbers = #tpu.dot_dimension_numbers<[1], [0], [0], [1], [0, 0, 1, 1], [], []>} : vector<256x8xbf16>, vector<8x128xbf16>, vector<256x128xf32> -> vector<256x128xf32>
    %65 = arith.addf %58, %64 : vector<256x128xf32>
    %cst_65 = arith.constant dense<0.000000e+00> : vector<128xf32>
    %66 = vector.multi_reduction <add>, %65, %cst_65 [0] : vector<256x128xf32> to vector<128xf32>
    %67 = vector.shape_cast %66 : vector<128xf32> to vector<1x128xf32>
    %68 = arith.addf %0, %67 : vector<1x128xf32>
    %69 = arith.mulf %65, %65 : vector<256x128xf32>
    %cst_66 = arith.constant dense<0.000000e+00> : vector<128xf32>
    %70 = vector.multi_reduction <add>, %69, %cst_66 [0] : vector<256x128xf32> to vector<128xf32>
    %71 = vector.shape_cast %70 : vector<128xf32> to vector<1x128xf32>
    %72 = arith.addf %1, %71 : vector<1x128xf32>
    %73 = arith.truncf %65 : vector<256x128xf32> to vector<256x128xbf16>
    %c0_67 = arith.constant 0 : index
    %c0_68 = arith.constant 0 : index
    %c0_69 = arith.constant 0 : index
    %74 = vector.load %arg3[%c0_67, %c0_68, %c0_69] : memref<1x256x128xbf16, #tpu.memory_space<vmem>>, vector<1x256x128xbf16>
    %75 = vector.shape_cast %74 : vector<1x256x128xbf16> to vector<256x128xbf16>
    %76 = vector.shape_cast %73 : vector<256x128xbf16> to vector<1x256x128xbf16>
    tpu.vector_store %arg3[%c0_67, %c0_68, %c0_69], %76 {strides = array<i32>} : memref<1x256x128xbf16, #tpu.memory_space<vmem>>, vector<1x256x128xbf16>,
    %c0_70 = arith.constant 0 : index
    %c0_71 = arith.constant 0 : index
    %c0_72 = arith.constant 0 : index
    %77 = vector.load %arg4[%c0_70, %c0_71, %c0_72] : memref<1x2x128xf32, #tpu.memory_space<vmem>>, vector<1x1x128xf32>
    %78 = vector.shape_cast %77 : vector<1x1x128xf32> to vector<1x128xf32>
    %79 = vector.shape_cast %68 : vector<1x128xf32> to vector<1x1x128xf32>
    tpu.vector_store %arg4[%c0_70, %c0_71, %c0_72], %79 {strides = array<i32>} : memref<1x2x128xf32, #tpu.memory_space<vmem>>, vector<1x1x128xf32>,
    %c0_73 = arith.constant 0 : index
    %c1_74 = arith.constant 1 : index
    %c0_75 = arith.constant 0 : index
    %80 = vector.load %arg4[%c0_73, %c1_74, %c0_75] : memref<1x2x128xf32, #tpu.memory_space<vmem>>, vector<1x1x128xf32>
    %81 = vector.shape_cast %80 : vector<1x1x128xf32> to vector<1x128xf32>
    %82 = vector.shape_cast %72 : vector<1x128xf32> to vector<1x1x128xf32>
    tpu.vector_store %arg4[%c0_73, %c1_74, %c0_75], %82 {strides = array<i32>} : memref<1x2x128xf32, #tpu.memory_space<vmem>>, vector<1x1x128xf32>,
    return
  }
  func.func @transform_0(%arg0: i32) -> (i32, i32, i32, i32) {
    %c0_i32 = arith.constant 0 : i32
    %c0_i32_0 = arith.constant 0 : i32
    %c0_i32_1 = arith.constant 0 : i32
    %c0_i32_2 = arith.constant 0 : i32
    return %arg0, %c0_i32, %c0_i32_0, %c0_i32_1 : i32, i32, i32, i32
  }
  func.func @transform_1(%arg0: i32) -> (i32, i32, i32) {
    %c0_i32 = arith.constant 0 : i32
    %c0_i32_0 = arith.constant 0 : i32
    %c0_i32_1 = arith.constant 0 : i32
    %c0_i32_2 = arith.constant 0 : i32
    return %c0_i32, %c0_i32_0, %c0_i32_1 : i32, i32, i32
  }
  func.func @transform_2(%arg0: i32) -> (i32, i32, i32) {
    %c0_i32 = arith.constant 0 : i32
    %c0_i32_0 = arith.constant 0 : i32
    %c0_i32_1 = arith.constant 0 : i32
    return %arg0, %c0_i32, %c0_i32_0 : i32, i32, i32
  }
  func.func @transform_3(%arg0: i32) -> (i32, i32, i32) {
    %c0_i32 = arith.constant 0 : i32
    %c0_i32_0 = arith.constant 0 : i32
    %c0_i32_1 = arith.constant 0 : i32
    return %arg0, %c0_i32, %c0_i32_0 : i32, i32, i32
  }
}

module attributes {stable_mosaic.version = 11 : i64} {
  func.func @_bn_relu_kernel(%arg0: i32, %arg1: i32, %arg2: memref<1x256x128xbf16, #tpu.memory_space<vmem>>, %arg3: memref<1x1x128xf32, #tpu.memory_space<vmem>>, %arg4: memref<1x1x128xf32, #tpu.memory_space<vmem>>, %arg5: memref<1x256x128xf32, #tpu.memory_space<vmem>>) attributes {dimension_semantics = [#tpu.dimension_semantics<parallel>, #tpu.dimension_semantics<parallel>], iteration_bounds = array<i64: 2, 1>, scalar_prefetch = 0 : i64, scratch_operands = 0 : i64, tpu.core_type = #tpu.core_type<tc>, window_params = [{transform_indices = @transform_0, window_bounds = array<i64: 1, 256, 128>}, {pipeline_mode = #tpu.pipeline_mode<synchronous>, transform_indices = @transform_1, window_bounds = array<i64: 1, 1, 128>}, {pipeline_mode = #tpu.pipeline_mode<synchronous>, transform_indices = @transform_2, window_bounds = array<i64: 1, 1, 128>}, {transform_indices = @transform_3, window_bounds = array<i64: 1, 256, 128>}]} {
    %c0 = arith.constant 0 : index
    %c0_0 = arith.constant 0 : index
    %c0_1 = arith.constant 0 : index
    %0 = vector.load %arg2[%c0, %c0_0, %c0_1] : memref<1x256x128xbf16, #tpu.memory_space<vmem>>, vector<1x256x128xbf16>
    %1 = arith.extf %0 : vector<1x256x128xbf16> to vector<1x256x128xf32>
    %c0_2 = arith.constant 0 : index
    %c0_3 = arith.constant 0 : index
    %c0_4 = arith.constant 0 : index
    %2 = vector.load %arg3[%c0_2, %c0_3, %c0_4] : memref<1x1x128xf32, #tpu.memory_space<vmem>>, vector<1x1x128xf32>
    %3 = vector.broadcast %2 : vector<1x1x128xf32> to vector<1x256x128xf32>
    %4 = arith.mulf %1, %3 : vector<1x256x128xf32>
    %c0_5 = arith.constant 0 : index
    %c0_6 = arith.constant 0 : index
    %c0_7 = arith.constant 0 : index
    %5 = vector.load %arg4[%c0_5, %c0_6, %c0_7] : memref<1x1x128xf32, #tpu.memory_space<vmem>>, vector<1x1x128xf32>
    %6 = vector.broadcast %5 : vector<1x1x128xf32> to vector<1x256x128xf32>
    %7 = arith.addf %4, %6 : vector<1x256x128xf32>
    %cst = arith.constant 0.000000e+00 : f32
    %8 = vector.broadcast %cst : f32 to vector<1x256x128xf32>
    %9 = arith.maximumf %7, %8 : vector<1x256x128xf32>
    %c0_8 = arith.constant 0 : index
    %c0_9 = arith.constant 0 : index
    %c0_10 = arith.constant 0 : index
    %10 = vector.load %arg5[%c0_8, %c0_9, %c0_10] : memref<1x256x128xf32, #tpu.memory_space<vmem>>, vector<1x256x128xf32>
    tpu.vector_store %arg5[%c0_8, %c0_9, %c0_10], %9 {strides = array<i32>} : memref<1x256x128xf32, #tpu.memory_space<vmem>>, vector<1x256x128xf32>,
    return
  }
  func.func @transform_0(%arg0: i32, %arg1: i32) -> (i32, i32, i32) {
    %c0_i32 = arith.constant 0 : i32
    %c0_i32_0 = arith.constant 0 : i32
    return %arg0, %arg1, %c0_i32 : i32, i32, i32
  }
  func.func @transform_1(%arg0: i32, %arg1: i32) -> (i32, i32, i32) {
    %c0_i32 = arith.constant 0 : i32
    %c0_i32_0 = arith.constant 0 : i32
    %c0_i32_1 = arith.constant 0 : i32
    %c0_i32_2 = arith.constant 0 : i32
    return %c0_i32, %c0_i32_0, %c0_i32_1 : i32, i32, i32
  }
  func.func @transform_2(%arg0: i32, %arg1: i32) -> (i32, i32, i32) {
    %c0_i32 = arith.constant 0 : i32
    %c0_i32_0 = arith.constant 0 : i32
    %c0_i32_1 = arith.constant 0 : i32
    %c0_i32_2 = arith.constant 0 : i32
    return %c0_i32, %c0_i32_0, %c0_i32_1 : i32, i32, i32
  }
  func.func @transform_3(%arg0: i32, %arg1: i32) -> (i32, i32, i32) {
    %c0_i32 = arith.constant 0 : i32
    %c0_i32_0 = arith.constant 0 : i32
    return %arg0, %arg1, %c0_i32 : i32, i32, i32
  }
}

</mosaic_0001>

<llo_original>
// kernel: basic_conv2d.3
$region0: #{basic_conv2d.3}
  #allocation0 [shape = 'u32[]', space=smem, size = 0x4, offset = 0x4, fixed_abs, tag = 'smem constant byte address 0x4 - core index']
  #allocation1 [shape = 'u32[72,128]{1,0:T(1,128)}', space=vmem, size = 0x9000, scoped, tag = 'internal scratch']
  %s0 = inlined_call_operand.vmem [shape: bf16[2,256,128], index: 0, kind: input, shape index: {}]
  %s1 = inlined_call_operand.vmem [shape: f32[1,1,128], index: 1, kind: input, shape index: {}]
  %s2 = inlined_call_operand.vmem [shape: f32[1,1,128], index: 2, kind: input, shape index: {}]
  %s3 = inlined_call_operand.vmem [shape: f32[2,256,128], index: 3, kind: output, shape index: {}]
  %s4 = sld [smem:[#allocation0]]
  $region45: #{basic_conv2d.3} parent=0
    _
  %s6 = ssub.s32 1, %s4
  %s7 = scalar_select 0, %s6, %s4
  loop: start=0, step=1, limit=4
  $region2: #{basic_conv2d.3} parent=0 // loop_pre_header
    _
  $region3: #{basic_conv2d.3} parent=0 // loop_header
    %s9 = sphi 0, %s13
    %p10 = scmp.ge.s32.totalorder %s9, 4
    %s16 = sphi 0, %s28
    %s17 = sphi 0, %s24
    %s18 = sphi 0, %s16
    %s19 = sphi 0, %s17
    %s20 = sphi 0, %s18
    %s21 = sphi 0, %s19
    %s33 = sphi 0, %s35
    %s36 = sphi 0, %s33
    %s37 = sphi 0, %s36
    %s53 = sphi 0, %s37
    %s57 = sphi 0, %s57
    %s59 = sphi 0, %s57
    %s60 = sphi 0, %s59
    %s74 = sphi 0, %s60
    %s78 = sphi 0, %s78
    %s80 = sphi 0, %s78
    %s81 = sphi 0, %s80
    %s95 = sphi 0, %s81
    %s103 = sphi 0, %s105
    %s106 = sphi 0, %s103
    %s107 = sphi 0, %s106
    %s123 = sphi 0, %s107
  $region4: #{basic_conv2d.3} parent=0 // loop_header_branch
    %12 = sbr.rel (%p10) target = $region8
  $region5: #{basic_conv2d.3} parent=0 // loop_body
    %s14 = ssub.s32 %s9, 1
    %s15 = ssub.s32 %s9, 2
    %s22 = sadd.s32 1, %s17
    %p23 = scmp.ge.s32.totalorder %s22, 1
    %s24 = scalar_select %p23, 0, %s22
    %s25 = sadd.s32 1, %s16
    %s26 = scalar_select %p23, %s25, %s16
    %p27 = scmp.ge.s32.totalorder %s26, 2
    %s28 = scalar_select %p27, 0, %s26
    %s29 = ssub.s32 %s16, %s28
    %s30 = ssub.s32 %s17, %s24
    %s31 = sor.u32 %s29, %s30
    %p32 = scmp.eq.s32.totalorder %s31, 0
    %s34 = sadd.s32 %s33, 1
    %s35 = scalar_select %p32, %s33, %s34
    %p38 = pneg %p32
    %p39 = scmp.eq.s32.totalorder %s9, 1
    %p40 = por %p38, %p39
    %p41 = scmp.ne.s32.totalorder %s33, %s36
    %p42 = scmp.eq.s32.totalorder %s9, 0
    %p43 = por %p41, %p42
    %p44 = scmp.ne.s32.totalorder %s33, %s36
    %p45 = scmp.eq.s32.totalorder %s14, 1
    %p46 = por %p44, %p45
    %p47 = scmp.ne.s32.totalorder %s36, %s37
    %p48 = scmp.eq.s32.totalorder %s14, 0
    %p49 = por %p47, %p48
    %p50 = scmp.ne.s32.totalorder %s36, %s37
    %p51 = scmp.eq.s32.totalorder %s15, 1
    %p52 = por %p50, %p51
    %p54 = scmp.ne.s32.totalorder %s37, %s53
    %p55 = scmp.eq.s32.totalorder %s15, 0
    %p56 = por %p54, %p55
    %s58 = sadd.s32 %s57, 1
    %p61 = scmp.eq.s32.totalorder %s9, 1
    %p62 = scmp.ne.s32.totalorder %s57, %s59
    %p63 = scmp.eq.s32.totalorder %s9, 0
    %p64 = por %p62, %p63
    %p65 = scmp.ne.s32.totalorder %s57, %s59
    %p66 = scmp.eq.s32.totalorder %s14, 1
    %p67 = por %p65, %p66
    %p68 = scmp.ne.s32.totalorder %s59, %s60
    %p69 = scmp.eq.s32.totalorder %s14, 0
    %p70 = por %p68, %p69
    %p71 = scmp.ne.s32.totalorder %s59, %s60
    %p72 = scmp.eq.s32.totalorder %s15, 1
    %p73 = por %p71, %p72
    %p75 = scmp.ne.s32.totalorder %s60, %s74
    %p76 = scmp.eq.s32.totalorder %s15, 0
    %p77 = por %p75, %p76
    %s79 = sadd.s32 %s78, 1
    %p82 = scmp.eq.s32.totalorder %s9, 1
    %p83 = scmp.ne.s32.totalorder %s78, %s80
    %p84 = scmp.eq.s32.totalorder %s9, 0
    %p85 = por %p83, %p84
    %p86 = scmp.ne.s32.totalorder %s78, %s80
    %p87 = scmp.eq.s32.totalorder %s14, 1
    %p88 = por %p86, %p87
    %p89 = scmp.ne.s32.totalorder %s80, %s81
    %p90 = scmp.eq.s32.totalorder %s14, 0
    %p91 = por %p89, %p90
    %p92 = scmp.ne.s32.totalorder %s80, %s81
    %p93 = scmp.eq.s32.totalorder %s15, 1
    %p94 = por %p92, %p93
    %p96 = scmp.ne.s32.totalorder %s81, %s95
    %p97 = scmp.eq.s32.totalorder %s15, 0
    %p98 = por %p96, %p97
    %s99 = ssub.s32 %s16, %s28
    %s100 = ssub.s32 %s17, %s24
    %s101 = sor.u32 %s99, %s100
    %p102 = scmp.eq.s32.totalorder %s101, 0
    %s104 = sadd.s32 %s103, 1
    %s105 = scalar_select %p102, %s103, %s104
    %p108 = pneg %p102
    %p109 = scmp.eq.s32.totalorder %s9, 1
    %p110 = por %p108, %p109
    %p111 = scmp.ne.s32.totalorder %s103, %s106
    %p112 = scmp.eq.s32.totalorder %s9, 0
    %p113 = por %p111, %p112
    %p114 = scmp.ne.s32.totalorder %s103, %s106
    %p115 = scmp.eq.s32.totalorder %s14, 1
    %p116 = por %p114, %p115
    %p117 = scmp.ne.s32.totalorder %s106, %s107
    %p118 = scmp.eq.s32.totalorder %s14, 0
    %p119 = por %p117, %p118
    %p120 = scmp.ne.s32.totalorder %s106, %s107
    %p121 = scmp.eq.s32.totalorder %s15, 1
    %p122 = por %p120, %p121
    %p124 = scmp.ne.s32.totalorder %s107, %s123
    %p125 = scmp.eq.s32.totalorder %s15, 0
    %p126 = por %p124, %p125
    %p127 = scmp.le.s32.totalorder 1, %s9
    %p128 = scmp.lt.s32.totalorder %s9, 3
    %p129 = pnand %p127, %p128
    %p130 = pneg %p129
    // Predicated region
    $region9: #{basic_conv2d.3} parent=5 // pred_check
      _
    $region10: #{basic_conv2d.3} parent=5 // pred_check_branch
      %132 = sbr.rel (%p129) target = $region12
    $region11: #{basic_conv2d.3} parent=5 // pred_region
      %s133 = ssub.s32 %s9, 1
      // Predicated region
      $region13: #{basic_conv2d.3} parent=11 // pred_check
        %p134 = pneg %p70
      $region14: #{basic_conv2d.3} parent=11 // pred_check_branch
        %136 = sbr.rel (%p134) target = $region16
      $region15: #{basic_conv2d.3} parent=11 // pred_region
        _
      $region16: #{basic_conv2d.3} parent=11 // pred_fallthru
        _
      // Predicated region
      $region17: #{basic_conv2d.3} parent=11 // pred_check
        %p137 = pneg %p91
      $region18: #{basic_conv2d.3} parent=11 // pred_check_branch
        %139 = sbr.rel (%p137) target = $region20
      $region19: #{basic_conv2d.3} parent=11 // pred_region
        _
      $region20: #{basic_conv2d.3} parent=11 // pred_fallthru
        _
    $region12: #{basic_conv2d.3} parent=5 // pred_fallthru
      _
    %p140 = scmp.lt.s32.totalorder %s9, 2
    // Predicated region
    $region21: #{basic_conv2d.3} parent=5 // pred_check
      %p141 = pneg %p140
    $region22: #{basic_conv2d.3} parent=5 // pred_check_branch
      %143 = sbr.rel (%p141) target = $region24
    $region23: #{basic_conv2d.3} parent=5 // pred_region
      // Predicated region
      $region25: #{basic_conv2d.3} parent=23 // pred_check
        %p144 = pneg %p43
      $region26: #{basic_conv2d.3} parent=23 // pred_check_branch
        %146 = sbr.rel (%p144) target = $region28
      $region27: #{basic_conv2d.3} parent=23 // pred_region
        %s147 = smul.u32 32, %s17
        %p148 = scmp.lt.s32.totalorder %s16, 1
        %s149 = scalar_select %p148, %s16, 1
        %p150 = scmp.lt.s32.totalorder %s147, 31
        %s151 = scalar_select %p150, %s147, 31
        %s152 = smul.addr %s149, 32
        %s153 = sadd.s32 %s151, %s152
        %s154 = smul.addr %s153, 4
        %s155 = scalar_lea.vmem %s0, %s154
        %s156 = smul.u32 32, %s17
      $region28: #{basic_conv2d.3} parent=23 // pred_fallthru
        _
    $region24: #{basic_conv2d.3} parent=5 // pred_fallthru
      _
    %p157 = scmp.le.s32.totalorder 1, %s9
    %p158 = scmp.lt.s32.totalorder %s9, 3
    %p159 = pnand %p157, %p158
    %p160 = pneg %p159
    // Predicated region
    $region29: #{basic_conv2d.3} parent=5 // pred_check
      _
    $region30: #{basic_conv2d.3} parent=5 // pred_check_branch
      %162 = sbr.rel (%p159) target = $region32
    $region31: #{basic_conv2d.3} parent=5 // pred_region
      %s163 = ssub.s32 %s9, 1
      %s164 = smul.u32 32, %s19
      %p165 = scmp.lt.s32.totalorder %s18, 1
      %s166 = scalar_select %p165, %s18, 1
      %p167 = scmp.lt.s32.totalorder %s164, 31
      %s168 = scalar_select %p167, %s164, 31
      %s169 = smul.addr %s166, 32
      %s170 = sadd.s32 %s168, %s169
      %s171 = smul.addr %s170, 4
      %s172 = scalar_lea.vmem %s0, %s171
      %p173 = pneg %p49
      %p174 = pneg %p46
      %p175 = pneg %p70
      %p176 = pneg %p67
      %p177 = pneg %p91
      %p178 = pneg %p88
      %p179 = pneg %p119
      %p180 = pneg %p116
      %s181 = smul.u32 32, %s19
      %p182 = scmp.lt.s32.totalorder %s18, 1
      %s183 = scalar_select %p182, %s18, 1
      %p184 = scmp.lt.s32.totalorder %s181, 31
      %s185 = scalar_select %p184, %s181, 31
      %s186 = smul.addr %s183, 32
      %s187 = sadd.s32 %s185, %s186
      %s188 = smul.addr %s187, 8
      %s189 = scalar_lea.vmem %s3, %s188
      %s190 = smul.u32 32, %s19
      %p191 = scmp.lt.s32.totalorder %s18, 1
      %s192 = scalar_select %p191, %s18, 1
      %p193 = scmp.lt.s32.totalorder %s190, 31
      %s194 = scalar_select %p193, %s190, 31
      %s195 = smul.addr %s192, 32
      %s196 = sadd.s32 %s194, %s195
      %s197 = smul.addr %s196, 4
      %s198 = scalar_lea.vmem %s0, %s197
      %s199 = smul.u32 32, %s19
      %s200 = smul.u32 32, %s19
      %p201 = scmp.lt.s32.totalorder %s18, 1
      %s202 = scalar_select %p201, %s18, 1
      %p203 = scmp.lt.s32.totalorder %s200, 31
      %s204 = scalar_select %p203, %s200, 31
      %s205 = smul.addr %s202, 32
      %s206 = sadd.s32 %s204, %s205
      %s207 = smul.addr %s206, 8
      %s208 = scalar_lea.vmem %s3, %s207
      %s209 = smul.u32 32, %s19
      %v210 = vld [vmem:[%s198] sm:$0xf]
      %v211 = vld [vmem:[%s198 + $0x4] sm:$0xf]
      %v212 = vld [vmem:[%s198 + $0x8] sm:$0xf]
      %v213 = vld [vmem:[%s198 + $0xc] sm:$0xf]
      %v214 = vld [vmem:[%s198 + $0x10] sm:$0xf]
      %v215 = vld [vmem:[%s198 + $0x14] sm:$0xf]
      %v216 = vld [vmem:[%s198 + $0x18] sm:$0xf]
      %v217 = vld [vmem:[%s198 + $0x1c] sm:$0xf]
      %v218 = vld [vmem:[%s198 + $0x20] sm:$0xf]
      %v219 = vld [vmem:[%s198 + $0x24] sm:$0xf]
      %v220 = vld [vmem:[%s198 + $0x28] sm:$0xf]
      %v221 = vld [vmem:[%s198 + $0x2c] sm:$0xf]
      %v222 = vld [vmem:[%s198 + $0x30] sm:$0xf]
      %v223 = vld [vmem:[%s198 + $0x34] sm:$0xf]
      %v224 = vld [vmem:[%s198 + $0x38] sm:$0xf]
      %v225 = vld [vmem:[%s198 + $0x3c] sm:$0xf]
      %v226 = vld [vmem:[%s198 + $0x40] sm:$0xf]
      %v227 = vld [vmem:[%s198 + $0x44] sm:$0xf]
      %v228 = vld [vmem:[%s198 + $0x48] sm:$0xf]
      %v229 = vld [vmem:[%s198 + $0x4c] sm:$0xf]
      %v230 = vld [vmem:[%s198 + $0x50] sm:$0xf]
      %v231 = vld [vmem:[%s198 + $0x54] sm:$0xf]
      %v232 = vld [vmem:[%s198 + $0x58] sm:$0xf]
      %v233 = vld [vmem:[%s198 + $0x5c] sm:$0xf]
      %v234 = vld [vmem:[%s198 + $0x60] sm:$0xf]
      %v235 = vld [vmem:[%s198 + $0x64] sm:$0xf]
      %v236 = vld [vmem:[%s198 + $0x68] sm:$0xf]
      %v237 = vld [vmem:[%s198 + $0x6c] sm:$0xf]
      %v238 = vld [vmem:[%s198 + $0x70] sm:$0xf]
      %v239 = vld [vmem:[%s198 + $0x74] sm:$0xf]
      %v240 = vld [vmem:[%s198 + $0x78] sm:$0xf]
      %v241 = vld [vmem:[%s198 + $0x7c] sm:$0xf]
      %v242 = vunpack.c.l.bf16 %v210
      %v243 = vunpack.c.l.bf16 %v211
      %v244 = vunpack.c.l.bf16 %v212
      %v245 = vunpack.c.l.bf16 %v213
      %v246 = vunpack.c.l.bf16 %v214
      %v247 = vunpack.c.l.bf16 %v215
      %v248 = vunpack.c.l.bf16 %v216
      %v249 = vunpack.c.l.bf16 %v217
      %v250 = vunpack.c.l.bf16 %v218
      %v251 = vunpack.c.l.bf16 %v219
      %v252 = vunpack.c.l.bf16 %v220
      %v253 = vunpack.c.l.bf16 %v221
      %v254 = vunpack.c.l.bf16 %v222
      %v255 = vunpack.c.l.bf16 %v223
      %v256 = vunpack.c.l.bf16 %v224
      %v257 = vunpack.c.l.bf16 %v225
      %v258 = vunpack.c.l.bf16 %v226
      %v259 = vunpack.c.l.bf16 %v227
      %v260 = vunpack.c.l.bf16 %v228
      %v261 = vunpack.c.l.bf16 %v229
      %v262 = vunpack.c.l.bf16 %v230
      %v263 = vunpack.c.l.bf16 %v231
      %v264 = vunpack.c.l.bf16 %v232
      %v265 = vunpack.c.l.bf16 %v233
      %v266 = vunpack.c.l.bf16 %v234
      %v267 = vunpack.c.l.bf16 %v235
      %v268 = vunpack.c.l.bf16 %v236
      %v269 = vunpack.c.l.bf16 %v237
      %v270 = vunpack.c.l.bf16 %v238
      %v271 = vunpack.c.l.bf16 %v239
      %v272 = vunpack.c.l.bf16 %v240
      %v273 = vunpack.c.l.bf16 %v241
      %v274 = vld [vmem:[%s1] sm:$0x1]
      %v276 = vperm.slane %v274, 0
      %v278 = vmul.f32 %v242, %v276
      %v279 = vmul.f32 %v243, %v276
      %v280 = vmul.f32 %v244, %v276
      %v281 = vmul.f32 %v245, %v276
      %v282 = vmul.f32 %v246, %v276
      %v283 = vmul.f32 %v247, %v276
      %v284 = vmul.f32 %v248, %v276
      %v285 = vmul.f32 %v249, %v276
      %v286 = vmul.f32 %v250, %v276
      %v287 = vmul.f32 %v251, %v276
      %v288 = vmul.f32 %v252, %v276
      %v289 = vmul.f32 %v253, %v276
      %v290 = vmul.f32 %v254, %v276
      %v291 = vmul.f32 %v255, %v276
      %v292 = vmul.f32 %v256, %v276
      %v293 = vmul.f32 %v257, %v276
      %v294 = vmul.f32 %v258, %v276
      %v295 = vmul.f32 %v259, %v276
      %v296 = vmul.f32 %v260, %v276
      %v297 = vmul.f32 %v261, %v276
      %v298 = vmul.f32 %v262, %v276
      %v299 = vmul.f32 %v263, %v276
      %v300 = vmul.f32 %v264, %v276
      %v301 = vmul.f32 %v265, %v276
      %v302 = vmul.f32 %v266, %v276
      %v303 = vmul.f32 %v267, %v276
      %v304 = vmul.f32 %v268, %v276
      %v305 = vmul.f32 %v269, %v276
      %v306 = vmul.f32 %v270, %v276
      %v307 = vmul.f32 %v271, %v276
      %v308 = vmul.f32 %v272, %v276
      %v309 = vmul.f32 %v273, %v276
      %v310 = vld [vmem:[%s2] sm:$0x1]
      %v312 = vperm.slane %v310, 0
      %v314 = vadd.f32 %v278, %v312
      %v315 = vadd.f32 %v279, %v312
      %v316 = vadd.f32 %v280, %v312
      %v317 = vadd.f32 %v281, %v312
      %v318 = vadd.f32 %v282, %v312
      %v319 = vadd.f32 %v283, %v312
      %v320 = vadd.f32 %v284, %v312
      %v321 = vadd.f32 %v285, %v312
      %v322 = vadd.f32 %v286, %v312
      %v323 = vadd.f32 %v287, %v312
      %v324 = vadd.f32 %v288, %v312
      %v325 = vadd.f32 %v289, %v312
      %v326 = vadd.f32 %v290, %v312
      %v327 = vadd.f32 %v291, %v312
      %v328 = vadd.f32 %v292, %v312
      %v329 = vadd.f32 %v293, %v312
      %v330 = vadd.f32 %v294, %v312
      %v331 = vadd.f32 %v295, %v312
      %v332 = vadd.f32 %v296, %v312
      %v333 = vadd.f32 %v297, %v312
      %v334 = vadd.f32 %v298, %v312
      %v335 = vadd.f32 %v299, %v312
      %v336 = vadd.f32 %v300, %v312
      %v337 = vadd.f32 %v301, %v312
      %v338 = vadd.f32 %v302, %v312
      %v339 = vadd.f32 %v303, %v312
      %v340 = vadd.f32 %v304, %v312
      %v341 = vadd.f32 %v305, %v312
      %v342 = vadd.f32 %v306, %v312
      %v343 = vadd.f32 %v307, %v312
      %v344 = vadd.f32 %v308, %v312
      %v345 = vadd.f32 %v309, %v312
      %v346 = vmax.f32 %v314, 0.0
      %v347 = vmax.f32 %v315, 0.0
      %v348 = vmax.f32 %v316, 0.0
      %v349 = vmax.f32 %v317, 0.0
      %v350 = vmax.f32 %v318, 0.0
      %v351 = vmax.f32 %v319, 0.0
      %v352 = vmax.f32 %v320, 0.0
      %v353 = vmax.f32 %v321, 0.0
      %v354 = vmax.f32 %v322, 0.0
      %v355 = vmax.f32 %v323, 0.0
      %v356 = vmax.f32 %v324, 0.0
      %v357 = vmax.f32 %v325, 0.0
      %v358 = vmax.f32 %v326, 0.0
      %v359 = vmax.f32 %v327, 0.0
      %v360 = vmax.f32 %v328, 0.0
      %v361 = vmax.f32 %v329, 0.0
      %v362 = vmax.f32 %v330, 0.0
      %v363 = vmax.f32 %v331, 0.0
      %v364 = vmax.f32 %v332, 0.0
      %v365 = vmax.f32 %v333, 0.0
      %v366 = vmax.f32 %v334, 0.0
      %v367 = vmax.f32 %v335, 0.0
      %v368 = vmax.f32 %v336, 0.0
      %v369 = vmax.f32 %v337, 0.0
      %v370 = vmax.f32 %v338, 0.0
      %v371 = vmax.f32 %v339, 0.0
      %v372 = vmax.f32 %v340, 0.0
      %v373 = vmax.f32 %v341, 0.0
      %v374 = vmax.f32 %v342, 0.0
      %v375 = vmax.f32 %v343, 0.0
      %v376 = vmax.f32 %v344, 0.0
      %v377 = vmax.f32 %v345, 0.0
      %378 = vst [vmem:[%s208] sm:$0xff] %v346
      %379 = vst [vmem:[%s208 + $0x8] sm:$0xff] %v347
      %380 = vst [vmem:[%s208 + $0x10] sm:$0xff] %v348
      %381 = vst [vmem:[%s208 + $0x18] sm:$0xff] %v349
      %382 = vst [vmem:[%s208 + $0x20] sm:$0xff] %v350
      %383 = vst [vmem:[%s208 + $0x28] sm:$0xff] %v351
      %384 = vst [vmem:[%s208 + $0x30] sm:$0xff] %v352
      %385 = vst [vmem:[%s208 + $0x38] sm:$0xff] %v353
      %386 = vst [vmem:[%s208 + $0x40] sm:$0xff] %v354
      %387 = vst [vmem:[%s208 + $0x48] sm:$0xff] %v355
      %388 = vst [vmem:[%s208 + $0x50] sm:$0xff] %v356
      %389 = vst [vmem:[%s208 + $0x58] sm:$0xff] %v357
      %390 = vst [vmem:[%s208 + $0x60] sm:$0xff] %v358
      %391 = vst [vmem:[%s208 + $0x68] sm:$0xff] %v359
      %392 = vst [vmem:[%s208 + $0x70] sm:$0xff] %v360
      %393 = vst [vmem:[%s208 + $0x78] sm:$0xff] %v361
      %394 = vst [vmem:[%s208 + $0x80] sm:$0xff] %v362
      %395 = vst [vmem:[%s208 + $0x88] sm:$0xff] %v363
      %396 = vst [vmem:[%s208 + $0x90] sm:$0xff] %v364
      %397 = vst [vmem:[%s208 + $0x98] sm:$0xff] %v365
      %398 = vst [vmem:[%s208 + $0xa0] sm:$0xff] %v366
      %399 = vst [vmem:[%s208 + $0xa8] sm:$0xff] %v367
      %400 = vst [vmem:[%s208 + $0xb0] sm:$0xff] %v368
      %401 = vst [vmem:[%s208 + $0xb8] sm:$0xff] %v369
      %402 = vst [vmem:[%s208 + $0xc0] sm:$0xff] %v370
      %403 = vst [vmem:[%s208 + $0xc8] sm:$0xff] %v371
      %404 = vst [vmem:[%s208 + $0xd0] sm:$0xff] %v372
      %405 = vst [vmem:[%s208 + $0xd8] sm:$0xff] %v373
      %406 = vst [vmem:[%s208 + $0xe0] sm:$0xff] %v374
      %407 = vst [vmem:[%s208 + $0xe8] sm:$0xff] %v375
      %408 = vst [vmem:[%s208 + $0xf0] sm:$0xff] %v376
      %409 = vst [vmem:[%s208 + $0xf8] sm:$0xff] %v377
      %s410 = smul.u32 32, %s19
      %p411 = scmp.lt.s32.totalorder %s18, 1
      %s412 = scalar_select %p411, %s18, 1
      %p413 = scmp.lt.s32.totalorder %s410, 31
      %s414 = scalar_select %p413, %s410, 31
      %s415 = smul.addr %s412, 32
      %s416 = sadd.s32 %s414, %s415
      %s417 = smul.addr %s416, 8
      %s418 = scalar_lea.vmem %s3, %s417
      // Predicated region
      $region33: #{basic_conv2d.3} parent=31 // pred_check
        %p419 = pneg %p116
      $region34: #{basic_conv2d.3} parent=31 // pred_check_branch
        %421 = sbr.rel (%p419) target = $region36
      $region35: #{basic_conv2d.3} parent=31 // pred_region
        %s422 = smul.u32 32, %s19
      $region36: #{basic_conv2d.3} parent=31 // pred_fallthru
        _
    $region32: #{basic_conv2d.3} parent=5 // pred_fallthru
      _
    %p423 = scmp.le.s32.totalorder 2, %s9
    // Predicated region
    $region37: #{basic_conv2d.3} parent=5 // pred_check
      %p424 = pneg %p423
    $region38: #{basic_conv2d.3} parent=5 // pred_check_branch
      %426 = sbr.rel (%p424) target = $region40
    $region39: #{basic_conv2d.3} parent=5 // pred_region
      %s427 = ssub.s32 %s9, 2
      // Predicated region
      $region41: #{basic_conv2d.3} parent=39 // pred_check
        %p428 = pneg %p122
      $region42: #{basic_conv2d.3} parent=39 // pred_check_branch
        %430 = sbr.rel (%p428) target = $region44
      $region43: #{basic_conv2d.3} parent=39 // pred_region
        %s431 = smul.u32 32, %s21
        %p432 = scmp.lt.s32.totalorder %s20, 1
        %s433 = scalar_select %p432, %s20, 1
        %p434 = scmp.lt.s32.totalorder %s431, 31
        %s435 = scalar_select %p434, %s431, 31
        %s436 = smul.addr %s433, 32
        %s437 = sadd.s32 %s435, %s436
        %s438 = smul.addr %s437, 8
        %s439 = scalar_lea.vmem %s3, %s438
      $region44: #{basic_conv2d.3} parent=39 // pred_fallthru
        _
    $region40: #{basic_conv2d.3} parent=5 // pred_fallthru
      _
  $region6: #{basic_conv2d.3} parent=0 // loop_footer
    %s13 = sadd.s32 1, %s9
  $region7: #{basic_conv2d.3} parent=0 // loop_footer_branch
    %8 = sbr.rel target = $region3
  $region8: #{basic_conv2d.3} parent=0 // loop_exit
    _

// kernel: basic_conv2d.2
$region0: #{basic_conv2d.2}
  #allocation0 [shape = 'u32[]', space=smem, size = 0x4, offset = 0x4, fixed_abs, tag = 'smem constant byte address 0x4 - core index']
  #allocation1 [shape = 'u32[72,128]{1,0:T(1,128)}', space=vmem, size = 0x9000, scoped, tag = 'internal scratch']
  %s0 = inlined_call_operand.vmem [shape: bf16[2,18,18,8], index: 0, kind: input, shape index: {}]
  %s1 = inlined_call_operand.vmem [shape: bf16[9,8,128], index: 1, kind: input, shape index: {}]
  %s2 = inlined_call_operand.vmem [shape: bf16[2,256,128], index: 2, kind: output, shape index: {0}]
  %s3 = inlined_call_operand.vmem [shape: f32[2,2,128], index: 3, kind: output, shape index: {1}]
  %4 = xla_tuple %s2, %s3
  %s5 = sld [smem:[#allocation0]]
  $region49: #{basic_conv2d.2} parent=0
    _
  %s7 = ssub.s32 1, %s5
  %s8 = scalar_select 0, %s7, %s5
  loop: start=0, step=1, limit=4
  $region2: #{basic_conv2d.2} parent=0 // loop_pre_header
    _
  $region3: #{basic_conv2d.2} parent=0 // loop_header
    %s10 = sphi 0, %s14
    %p11 = scmp.ge.s32.totalorder %s10, 4
    %s20 = sphi 0, %s22
    %s23 = sphi 0, %s20
    %s24 = sphi 0, %s23
    %s40 = sphi 0, %s24
    %s44 = sphi 0, %s44
    %s46 = sphi 0, %s44
    %s47 = sphi 0, %s46
    %s61 = sphi 0, %s47
    %s67 = sphi 0, %s69
    %s70 = sphi 0, %s67
    %s71 = sphi 0, %s70
    %s87 = sphi 0, %s71
    %s93 = sphi 0, %s95
    %s96 = sphi 0, %s93
    %s97 = sphi 0, %s96
    %s113 = sphi 0, %s97
  $region4: #{basic_conv2d.2} parent=0 // loop_header_branch
    %13 = sbr.rel (%p11) target = $region8
  $region5: #{basic_conv2d.2} parent=0 // loop_body
    %s15 = ssub.s32 %s10, 1
    %s16 = ssub.s32 %s10, 2
    %s17 = sadd.s32 %s10, 1
    %s18 = ssub.s32 %s10, %s17
    %p19 = scmp.eq.s32.totalorder %s18, 0
    %s21 = sadd.s32 %s20, 1
    %s22 = scalar_select %p19, %s20, %s21
    %p25 = pneg %p19
    %p26 = scmp.eq.s32.totalorder %s10, 1
    %p27 = por %p25, %p26
    %p28 = scmp.ne.s32.totalorder %s20, %s23
    %p29 = scmp.eq.s32.totalorder %s10, 0
    %p30 = por %p28, %p29
    %p31 = scmp.ne.s32.totalorder %s20, %s23
    %p32 = scmp.eq.s32.totalorder %s15, 1
    %p33 = por %p31, %p32
    %p34 = scmp.ne.s32.totalorder %s23, %s24
    %p35 = scmp.eq.s32.totalorder %s15, 0
    %p36 = por %p34, %p35
    %p37 = scmp.ne.s32.totalorder %s23, %s24
    %p38 = scmp.eq.s32.totalorder %s16, 1
    %p39 = por %p37, %p38
    %p41 = scmp.ne.s32.totalorder %s24, %s40
    %p42 = scmp.eq.s32.totalorder %s16, 0
    %p43 = por %p41, %p42
    %s45 = sadd.s32 %s44, 1
    %p48 = scmp.eq.s32.totalorder %s10, 1
    %p49 = scmp.ne.s32.totalorder %s44, %s46
    %p50 = scmp.eq.s32.totalorder %s10, 0
    %p51 = por %p49, %p50
    %p52 = scmp.ne.s32.totalorder %s44, %s46
    %p53 = scmp.eq.s32.totalorder %s15, 1
    %p54 = por %p52, %p53
    %p55 = scmp.ne.s32.totalorder %s46, %s47
    %p56 = scmp.eq.s32.totalorder %s15, 0
    %p57 = por %p55, %p56
    %p58 = scmp.ne.s32.totalorder %s46, %s47
    %p59 = scmp.eq.s32.totalorder %s16, 1
    %p60 = por %p58, %p59
    %p62 = scmp.ne.s32.totalorder %s47, %s61
    %p63 = scmp.eq.s32.totalorder %s16, 0
    %p64 = por %p62, %p63
    %s65 = ssub.s32 %s10, %s17
    %p66 = scmp.eq.s32.totalorder %s65, 0
    %s68 = sadd.s32 %s67, 1
    %s69 = scalar_select %p66, %s67, %s68
    %p72 = pneg %p66
    %p73 = scmp.eq.s32.totalorder %s10, 1
    %p74 = por %p72, %p73
    %p75 = scmp.ne.s32.totalorder %s67, %s70
    %p76 = scmp.eq.s32.totalorder %s10, 0
    %p77 = por %p75, %p76
    %p78 = scmp.ne.s32.totalorder %s67, %s70
    %p79 = scmp.eq.s32.totalorder %s15, 1
    %p80 = por %p78, %p79
    %p81 = scmp.ne.s32.totalorder %s70, %s71
    %p82 = scmp.eq.s32.totalorder %s15, 0
    %p83 = por %p81, %p82
    %p84 = scmp.ne.s32.totalorder %s70, %s71
    %p85 = scmp.eq.s32.totalorder %s16, 1
    %p86 = por %p84, %p85
    %p88 = scmp.ne.s32.totalorder %s71, %s87
    %p89 = scmp.eq.s32.totalorder %s16, 0
    %p90 = por %p88, %p89
    %s91 = ssub.s32 %s10, %s17
    %p92 = scmp.eq.s32.totalorder %s91, 0
    %s94 = sadd.s32 %s93, 1
    %s95 = scalar_select %p92, %s93, %s94
    %p98 = pneg %p92
    %p99 = scmp.eq.s32.totalorder %s10, 1
    %p100 = por %p98, %p99
    %p101 = scmp.ne.s32.totalorder %s93, %s96
    %p102 = scmp.eq.s32.totalorder %s10, 0
    %p103 = por %p101, %p102
    %p104 = scmp.ne.s32.totalorder %s93, %s96
    %p105 = scmp.eq.s32.totalorder %s15, 1
    %p106 = por %p104, %p105
    %p107 = scmp.ne.s32.totalorder %s96, %s97
    %p108 = scmp.eq.s32.totalorder %s15, 0
    %p109 = por %p107, %p108
    %p110 = scmp.ne.s32.totalorder %s96, %s97
    %p111 = scmp.eq.s32.totalorder %s16, 1
    %p112 = por %p110, %p111
    %p114 = scmp.ne.s32.totalorder %s97, %s113
    %p115 = scmp.eq.s32.totalorder %s16, 0
    %p116 = por %p114, %p115
    %p117 = scmp.le.s32.totalorder 1, %s10
    %p118 = scmp.lt.s32.totalorder %s10, 3
    %p119 = pnand %p117, %p118
    %p120 = pneg %p119
    // Predicated region
    $region9: #{basic_conv2d.2} parent=5 // pred_check
      _
    $region10: #{basic_conv2d.2} parent=5 // pred_check_branch
      %122 = sbr.rel (%p119) target = $region12
    $region11: #{basic_conv2d.2} parent=5 // pred_region
      %s123 = ssub.s32 %s10, 1
      // Predicated region
      $region13: #{basic_conv2d.2} parent=11 // pred_check
        %p124 = pneg %p57
      $region14: #{basic_conv2d.2} parent=11 // pred_check_branch
        %126 = sbr.rel (%p124) target = $region16
      $region15: #{basic_conv2d.2} parent=11 // pred_region
        _
      $region16: #{basic_conv2d.2} parent=11 // pred_fallthru
        _
    $region12: #{basic_conv2d.2} parent=5 // pred_fallthru
      _
    %p127 = scmp.lt.s32.totalorder %s10, 2
    // Predicated region
    $region17: #{basic_conv2d.2} parent=5 // pred_check
      %p128 = pneg %p127
    $region18: #{basic_conv2d.2} parent=5 // pred_check_branch
      %130 = sbr.rel (%p128) target = $region20
    $region19: #{basic_conv2d.2} parent=5 // pred_region
      // Predicated region
      $region21: #{basic_conv2d.2} parent=19 // pred_check
        %p131 = pneg %p30
      $region22: #{basic_conv2d.2} parent=19 // pred_check_branch
        %133 = sbr.rel (%p131) target = $region24
      $region23: #{basic_conv2d.2} parent=19 // pred_region
        %p134 = scmp.lt.s32.totalorder %s10, 1
        %s135 = scalar_select %p134, %s10, 1
        %s136 = smul.addr %s135, 54
        %s137 = smul.addr %s136, 4
        %s138 = scalar_lea.vmem %s0, %s137
      $region24: #{basic_conv2d.2} parent=19 // pred_fallthru
        _
    $region20: #{basic_conv2d.2} parent=5 // pred_fallthru
      _
    %p139 = scmp.le.s32.totalorder 1, %s10
    %p140 = scmp.lt.s32.totalorder %s10, 3
    %p141 = pnand %p139, %p140
    %p142 = pneg %p141
    // Predicated region
    $region25: #{basic_conv2d.2} parent=5 // pred_check
      _
    $region26: #{basic_conv2d.2} parent=5 // pred_check_branch
      %144 = sbr.rel (%p141) target = $region28
    $region27: #{basic_conv2d.2} parent=5 // pred_region
      %s145 = ssub.s32 %s10, 1
      %p146 = scmp.lt.s32.totalorder %s15, 1
      %s147 = scalar_select %p146, %s15, 1
      %s148 = smul.addr %s147, 54
      %s149 = smul.addr %s148, 4
      %s150 = scalar_lea.vmem %s0, %s149
      %p151 = pneg %p36
      %p152 = pneg %p33
      %p153 = pneg %p57
      %p154 = pneg %p54
      %p155 = pneg %p83
      %p156 = pneg %p80
      %p157 = scmp.lt.s32.totalorder %s15, 1
      %s158 = scalar_select %p157, %s15, 1
      %s159 = smul.addr %s158, 32
      %s160 = smul.addr %s159, 4
      %s161 = scalar_lea.vmem %s2, %s160
      %p162 = pneg %p109
      %p163 = pneg %p106
      %p164 = scmp.lt.s32.totalorder %s15, 1
      %s165 = scalar_select %p164, %s15, 1
      %s166 = smul.addr %s165, 2
      %s167 = scalar_lea.vmem %s3, %s166
      %p168 = scmp.lt.s32.totalorder %s15, 1
      %s169 = scalar_select %p168, %s15, 1
      %s170 = smul.addr %s169, 54
      %s171 = smul.addr %s170, 4
      %s172 = scalar_lea.vmem %s0, %s171
      %p173 = scmp.lt.s32.totalorder %s15, 1
      %s174 = scalar_select %p173, %s15, 1
      %s175 = smul.addr %s174, 32
      %s176 = smul.addr %s175, 4
      %s177 = scalar_lea.vmem %s2, %s176
      %p178 = scmp.lt.s32.totalorder %s15, 1
      %s179 = scalar_select %p178, %s15, 1
      %s180 = smul.addr %s179, 2
      %s181 = scalar_lea.vmem %s3, %s180
      %v183 = vld [vmem:[%s172] sm:$0xf]
      %v184 = vld [vmem:[%s172 + $0x4] sm:$0xf]
      %v185 = vld [vmem:[%s172 + $0xc] sm:$0xf]
      %v186 = vld [vmem:[%s172 + $0x10] sm:$0xf]
      %v187 = vld [vmem:[%s172 + $0x18] sm:$0xf]
      %v188 = vld [vmem:[%s172 + $0x1c] sm:$0xf]
      %v189 = vld [vmem:[%s172 + $0x24] sm:$0xf]
      %v190 = vld [vmem:[%s172 + $0x28] sm:$0xf]
      %v191 = vld [vmem:[%s172 + $0x30] sm:$0xf]
      %v192 = vld [vmem:[%s172 + $0x34] sm:$0xf]
      %v193 = vld [vmem:[%s172 + $0x3c] sm:$0xf]
      %v194 = vld [vmem:[%s172 + $0x40] sm:$0xf]
      %v195 = vld [vmem:[%s172 + $0x48] sm:$0xf]
      %v196 = vld [vmem:[%s172 + $0x4c] sm:$0xf]
      %v197 = vld [vmem:[%s172 + $0x54] sm:$0xf]
      %v198 = vld [vmem:[%s172 + $0x58] sm:$0xf]
      %v199 = vld [vmem:[%s172 + $0x60] sm:$0xf]
      %v200 = vld [vmem:[%s172 + $0x64] sm:$0xf]
      %v201 = vld [vmem:[%s172 + $0x6c] sm:$0xf]
      %v202 = vld [vmem:[%s172 + $0x70] sm:$0xf]
      %v203 = vld [vmem:[%s172 + $0x78] sm:$0xf]
      %v204 = vld [vmem:[%s172 + $0x7c] sm:$0xf]
      %v205 = vld [vmem:[%s172 + $0x84] sm:$0xf]
      %v206 = vld [vmem:[%s172 + $0x88] sm:$0xf]
      %v207 = vld [vmem:[%s172 + $0x90] sm:$0xf]
      %v208 = vld [vmem:[%s172 + $0x94] sm:$0xf]
      %v209 = vld [vmem:[%s172 + $0x9c] sm:$0xf]
      %v210 = vld [vmem:[%s172 + $0xa0] sm:$0xf]
      %v211 = vld [vmem:[%s172 + $0xa8] sm:$0xf]
      %v212 = vld [vmem:[%s172 + $0xac] sm:$0xf]
      %v213 = vld [vmem:[%s172 + $0xb4] sm:$0xf]
      %v214 = vld [vmem:[%s172 + $0xb8] sm:$0xf]
      %v215 = vld [vmem:[%s1] sm:$0xf]
      %v216 = vld [vmem:[%s172 + $0x8] sm:$0x1]
      %v217 = vld [vmem:[%s172 + $0x14] sm:$0x1]
      %v218 = vld [vmem:[%s172 + $0x20] sm:$0x1]
      %v219 = vld [vmem:[%s172 + $0x2c] sm:$0x1]
      %v220 = vld [vmem:[%s172 + $0x38] sm:$0x1]
      %v221 = vld [vmem:[%s172 + $0x44] sm:$0x1]
      %v222 = vld [vmem:[%s172 + $0x50] sm:$0x1]
      %v223 = vld [vmem:[%s172 + $0x5c] sm:$0x1]
      %v224 = vld [vmem:[%s172 + $0x68] sm:$0x1]
      %v225 = vld [vmem:[%s172 + $0x74] sm:$0x1]
      %v226 = vld [vmem:[%s172 + $0x80] sm:$0x1]
      %v227 = vld [vmem:[%s172 + $0x8c] sm:$0x1]
      %v228 = vld [vmem:[%s172 + $0x98] sm:$0x1]
      %v229 = vld [vmem:[%s172 + $0xa4] sm:$0x1]
      %v230 = vld [vmem:[%s172 + $0xb0] sm:$0x1]
      %v231 = vld [vmem:[%s172 + $0xbc] sm:$0x1]
      %vm232 = vsmask.f32 3328
      %vm233 = vsmask.f32 7440
      %vm234 = vmor %vm232, %vm233
      %v236 = vshrl.u32 %v183, 16
      %v238 = vrot.slane %v236, 4
      %v239 = vshll.u32 %v183, 16
      %v241 = vrot.slane %v239, 5
      %v242 = vor.u32 %v238, %v241
      %v243 = vrot.slane %v242, 4
      %v245 = vshll.u32 %v184, 16
      %v247 = vrot.slane %v245, 5
      %v248 = vsel %vm234, %v243, %v247
      %v249 = vshrl.u32 %v184, 16
      %v251 = vrot.slane %v249, 4
      %v252 = vor.u32 %v251, %v247
      %v253 = vrot.slane %v252, 4
      %v255 = vshll.u32 %v216, 16
      %v257 = vrot.slane %v255, 5
      %v258 = vsel %vm234, %v253, %v257
      %v260 = vshrl.u32 %v185, 16
      %v262 = vrot.slane %v260, 4
      %v263 = vshll.u32 %v185, 16
      %v265 = vrot.slane %v263, 5
      %v266 = vor.u32 %v262, %v265
      %v267 = vrot.slane %v266, 4
      %v269 = vshll.u32 %v186, 16
      %v271 = vrot.slane %v269, 5
      %v272 = vsel %vm234, %v267, %v271
      %v273 = vshrl.u32 %v186, 16
      %v275 = vrot.slane %v273, 4
      %v276 = vor.u32 %v275, %v271
      %v277 = vrot.slane %v276, 4
      %v279 = vshll.u32 %v217, 16
      %v281 = vrot.slane %v279, 5
      %v282 = vsel %vm234, %v277, %v281
      %v284 = vshrl.u32 %v187, 16
      %v286 = vrot.slane %v284, 4
      %v287 = vshll.u32 %v187, 16
      %v289 = vrot.slane %v287, 5
      %v290 = vor.u32 %v286, %v289
      %v291 = vrot.slane %v290, 4
      %v293 = vshll.u32 %v188, 16
      %v295 = vrot.slane %v293, 5
      %v296 = vsel %vm234, %v291, %v295
      %v297 = vshrl.u32 %v188, 16
      %v299 = vrot.slane %v297, 4
      %v300 = vor.u32 %v299, %v295
      %v301 = vrot.slane %v300, 4
      %v303 = vshll.u32 %v218, 16
      %v305 = vrot.slane %v303, 5
      %v306 = vsel %vm234, %v301, %v305
      %v308 = vshrl.u32 %v189, 16
      %v310 = vrot.slane %v308, 4
      %v311 = vshll.u32 %v189, 16
      %v313 = vrot.slane %v311, 5
      %v314 = vor.u32 %v310, %v313
      %v315 = vrot.slane %v314, 4
      %v317 = vshll.u32 %v190, 16
      %v319 = vrot.slane %v317, 5
      %v320 = vsel %vm234, %v315, %v319
      %v321 = vshrl.u32 %v190, 16
      %v323 = vrot.slane %v321, 4
      %v324 = vor.u32 %v323, %v319
      %v325 = vrot.slane %v324, 4
      %v327 = vshll.u32 %v219, 16
      %v329 = vrot.slane %v327, 5
      %v330 = vsel %vm234, %v325, %v329
      %v332 = vshrl.u32 %v191, 16
      %v334 = vrot.slane %v332, 4
      %v335 = vshll.u32 %v191, 16
      %v337 = vrot.slane %v335, 5
      %v338 = vor.u32 %v334, %v337
      %v339 = vrot.slane %v338, 4
      %v341 = vshll.u32 %v192, 16
      %v343 = vrot.slane %v341, 5
      %v344 = vsel %vm234, %v339, %v343
      %v345 = vshrl.u32 %v192, 16
      %v347 = vrot.slane %v345, 4
      %v348 = vor.u32 %v347, %v343
      %v349 = vrot.slane %v348, 4
      %v351 = vshll.u32 %v220, 16
      %v353 = vrot.slane %v351, 5
      %v354 = vsel %vm234, %v349, %v353
      %v356 = vshrl.u32 %v193, 16
      %v358 = vrot.slane %v356, 4
      %v359 = vshll.u32 %v193, 16
      %v361 = vrot.slane %v359, 5
      %v362 = vor.u32 %v358, %v361
      %v363 = vrot.slane %v362, 4
      %v365 = vshll.u32 %v194, 16
      %v367 = vrot.slane %v365, 5
      %v368 = vsel %vm234, %v363, %v367
      %v369 = vshrl.u32 %v194, 16
      %v371 = vrot.slane %v369, 4
      %v372 = vor.u32 %v371, %v367
      %v373 = vrot.slane %v372, 4
      %v375 = vshll.u32 %v221, 16
      %v377 = vrot.slane %v375, 5
      %v378 = vsel %vm234, %v373, %v377
      %v380 = vshrl.u32 %v195, 16
      %v382 = vrot.slane %v380, 4
      %v383 = vshll.u32 %v195, 16
      %v385 = vrot.slane %v383, 5
      %v386 = vor.u32 %v382, %v385
      %v387 = vrot.slane %v386, 4
      %v389 = vshll.u32 %v196, 16
      %v391 = vrot.slane %v389, 5
      %v392 = vsel %vm234, %v387, %v391
      %v393 = vshrl.u32 %v196, 16
      %v395 = vrot.slane %v393, 4
      %v396 = vor.u32 %v395, %v391
      %v397 = vrot.slane %v396, 4
      %v399 = vshll.u32 %v222, 16
      %v401 = vrot.slane %v399, 5
      %v402 = vsel %vm234, %v397, %v401
      %v404 = vshrl.u32 %v197, 16
      %v406 = vrot.slane %v404, 4
      %v407 = vshll.u32 %v197, 16
      %v409 = vrot.slane %v407, 5
      %v410 = vor.u32 %v406, %v409
      %v411 = vrot.slane %v410, 4
      %v413 = vshll.u32 %v198, 16
      %v415 = vrot.slane %v413, 5
      %v416 = vsel %vm234, %v411, %v415
      %v417 = vshrl.u32 %v198, 16
      %v419 = vrot.slane %v417, 4
      %v420 = vor.u32 %v419, %v415
      %v421 = vrot.slane %v420, 4
      %v423 = vshll.u32 %v223, 16
      %v425 = vrot.slane %v423, 5
      %v426 = vsel %vm234, %v421, %v425
      %v428 = vshrl.u32 %v199, 16
      %v430 = vrot.slane %v428, 4
      %v431 = vshll.u32 %v199, 16
      %v433 = vrot.slane %v431, 5
      %v434 = vor.u32 %v430, %v433
      %v435 = vrot.slane %v434, 4
      %v437 = vshll.u32 %v200, 16
      %v439 = vrot.slane %v437, 5
      %v440 = vsel %vm234, %v435, %v439
      %v441 = vshrl.u32 %v200, 16
      %v443 = vrot.slane %v441, 4
      %v444 = vor.u32 %v443, %v439
      %v445 = vrot.slane %v444, 4
      %v447 = vshll.u32 %v224, 16
      %v449 = vrot.slane %v447, 5
      %v450 = vsel %vm234, %v445, %v449
      %v452 = vshrl.u32 %v201, 16
      %v454 = vrot.slane %v452, 4
      %v455 = vshll.u32 %v201, 16
      %v457 = vrot.slane %v455, 5
      %v458 = vor.u32 %v454, %v457
      %v459 = vrot.slane %v458, 4
      %v461 = vshll.u32 %v202, 16
      %v463 = vrot.slane %v461, 5
      %v464 = vsel %vm234, %v459, %v463
      %v465 = vshrl.u32 %v202, 16
      %v467 = vrot.slane %v465, 4
      %v468 = vor.u32 %v467, %v463
      %v469 = vrot.slane %v468, 4
      %v471 = vshll.u32 %v225, 16
      %v473 = vrot.slane %v471, 5
      %v474 = vsel %vm234, %v469, %v473
      %v476 = vshrl.u32 %v203, 16
      %v478 = vrot.slane %v476, 4
      %v479 = vshll.u32 %v203, 16
      %v481 = vrot.slane %v479, 5
      %v482 = vor.u32 %v478, %v481
      %v483 = vrot.slane %v482, 4
      %v485 = vshll.u32 %v204, 16
      %v487 = vrot.slane %v485, 5
      %v488 = vsel %vm234, %v483, %v487
      %v489 = vshrl.u32 %v204, 16
      %v491 = vrot.slane %v489, 4
      %v492 = vor.u32 %v491, %v487
      %v493 = vrot.slane %v492, 4
      %v495 = vshll.u32 %v226, 16
      %v497 = vrot.slane %v495, 5
      %v498 = vsel %vm234, %v493, %v497
      %v500 = vshrl.u32 %v205, 16
      %v502 = vrot.slane %v500, 4
      %v503 = vshll.u32 %v205, 16
      %v505 = vrot.slane %v503, 5
      %v506 = vor.u32 %v502, %v505
      %v507 = vrot.slane %v506, 4
      %v509 = vshll.u32 %v206, 16
      %v511 = vrot.slane %v509, 5
      %v512 = vsel %vm234, %v507, %v511
      %v513 = vshrl.u32 %v206, 16
      %v515 = vrot.slane %v513, 4
      %v516 = vor.u32 %v515, %v511
      %v517 = vrot.slane %v516, 4
      %v519 = vshll.u32 %v227, 16
      %v521 = vrot.slane %v519, 5
      %v522 = vsel %vm234, %v517, %v521
      %v524 = vshrl.u32 %v207, 16
      %v526 = vrot.slane %v524, 4
      %v527 = vshll.u32 %v207, 16
      %v529 = vrot.slane %v527, 5
      %v530 = vor.u32 %v526, %v529
      %v531 = vrot.slane %v530, 4
      %v533 = vshll.u32 %v208, 16
      %v535 = vrot.slane %v533, 5
      %v536 = vsel %vm234, %v531, %v535
      %v537 = vshrl.u32 %v208, 16
      %v539 = vrot.slane %v537, 4
      %v540 = vor.u32 %v539, %v535
      %v541 = vrot.slane %v540, 4
      %v543 = vshll.u32 %v228, 16
      %v545 = vrot.slane %v543, 5
      %v546 = vsel %vm234, %v541, %v545
      %v548 = vshrl.u32 %v209, 16
      %v550 = vrot.slane %v548, 4
      %v551 = vshll.u32 %v209, 16
      %v553 = vrot.slane %v551, 5
      %v554 = vor.u32 %v550, %v553
      %v555 = vrot.slane %v554, 4
      %v557 = vshll.u32 %v210, 16
      %v559 = vrot.slane %v557, 5
      %v560 = vsel %vm234, %v555, %v559
      %v561 = vshrl.u32 %v210, 16
      %v563 = vrot.slane %v561, 4
      %v564 = vor.u32 %v563, %v559
      %v565 = vrot.slane %v564, 4
      %v567 = vshll.u32 %v229, 16
      %v569 = vrot.slane %v567, 5
      %v570 = vsel %vm234, %v565, %v569
      %v572 = vshrl.u32 %v211, 16
      %v574 = vrot.slane %v572, 4
      %v575 = vshll.u32 %v211, 16
      %v577 = vrot.slane %v575, 5
      %v578 = vor.u32 %v574, %v577
      %v579 = vrot.slane %v578, 4
      %v581 = vshll.u32 %v212, 16
      %v583 = vrot.slane %v581, 5
      %v584 = vsel %vm234, %v579, %v583
      %v585 = vshrl.u32 %v212, 16
      %v587 = vrot.slane %v585, 4
      %v588 = vor.u32 %v587, %v583
      %v589 = vrot.slane %v588, 4
      %v591 = vshll.u32 %v230, 16
      %v593 = vrot.slane %v591, 5
      %v594 = vsel %vm234, %v589, %v593
      %v596 = vshrl.u32 %v213, 16
      %v598 = vrot.slane %v596, 4
      %v599 = vshll.u32 %v213, 16
      %v601 = vrot.slane %v599, 5
      %v602 = vor.u32 %v598, %v601
      %v603 = vrot.slane %v602, 4
      %v605 = vshll.u32 %v214, 16
      %v607 = vrot.slane %v605, 5
      %v608 = vsel %vm234, %v603, %v607
      %v609 = vshrl.u32 %v214, 16
      %v611 = vrot.slane %v609, 4
      %v612 = vor.u32 %v611, %v607
      %v613 = vrot.slane %v612, 4
      %v615 = vshll.u32 %v231, 16
      %v617 = vrot.slane %v615, 5
      %v618 = vsel %vm234, %v613, %v617
      %s619 = scalar_lea.vmem %s1, 4
      %v620 = vld [vmem:[%s619] sm:$0xf]
      %v621 = vunpack.c.l.b16 %v248
      %v622 = vunpack.c.l.b16 %v258
      %v623 = vunpack.c.l.b16 %v272
      %v624 = vunpack.c.l.b16 %v282
      %v625 = vunpack.c.l.b16 %v296
      %v626 = vunpack.c.l.b16 %v306
      %v627 = vunpack.c.l.b16 %v320
      %v628 = vunpack.c.l.b16 %v330
      %v629 = vunpack.c.l.b16 %v344
      %v630 = vunpack.c.l.b16 %v354
      %v631 = vunpack.c.l.b16 %v368
      %v632 = vunpack.c.l.b16 %v378
      %v633 = vunpack.c.l.b16 %v392
      %v634 = vunpack.c.l.b16 %v402
      %v635 = vunpack.c.l.b16 %v416
      %v636 = vunpack.c.l.b16 %v426
      %v637 = vunpack.c.l.b16 %v440
      %v638 = vunpack.c.l.b16 %v450
      %v639 = vunpack.c.l.b16 %v464
      %v640 = vunpack.c.l.b16 %v474
      %v641 = vunpack.c.l.b16 %v488
      %v642 = vunpack.c.l.b16 %v498
      %v643 = vunpack.c.l.b16 %v512
      %v644 = vunpack.c.l.b16 %v522
      %v645 = vunpack.c.l.b16 %v536
      %v646 = vunpack.c.l.b16 %v546
      %v647 = vunpack.c.l.b16 %v560
      %v648 = vunpack.c.l.b16 %v570
      %v649 = vunpack.c.l.b16 %v584
      %v650 = vunpack.c.l.b16 %v594
      %v651 = vunpack.c.l.b16 %v608
      %v652 = vunpack.c.l.b16 %v618
      %v653 = vpack.c.b16 %v622, %v621
      %v654 = vpack.c.b16 %v624, %v623
      %v655 = vpack.c.b16 %v626, %v625
      %v656 = vpack.c.b16 %v628, %v627
      %v657 = vpack.c.b16 %v630, %v629
      %v658 = vpack.c.b16 %v632, %v631
      %v659 = vpack.c.b16 %v634, %v633
      %v660 = vpack.c.b16 %v636, %v635
      %v661 = vpack.c.b16 %v638, %v637
      %v662 = vpack.c.b16 %v640, %v639
      %v663 = vpack.c.b16 %v642, %v641
      %v664 = vpack.c.b16 %v644, %v643
      %v665 = vpack.c.b16 %v646, %v645
      %v666 = vpack.c.b16 %v648, %v647
      %v667 = vpack.c.b16 %v650, %v649
      %v668 = vpack.c.b16 %v652, %v651
      %vm669 = vcmask 64512
      %v671 = vsel %vm669, %v653, 0
      %v674 = vsel %vm669, %v654, 0
      %v677 = vsel %vm669, %v655, 0
      %v680 = vsel %vm669, %v656, 0
      %v683 = vsel %vm669, %v657, 0
      %v686 = vsel %vm669, %v658, 0
      %v689 = vsel %vm669, %v659, 0
      %v692 = vsel %vm669, %v660, 0
      %v695 = vsel %vm669, %v661, 0
      %v698 = vsel %vm669, %v662, 0
      %v701 = vsel %vm669, %v663, 0
      %v704 = vsel %vm669, %v664, 0
      %v707 = vsel %vm669, %v665, 0
      %v710 = vsel %vm669, %v666, 0
      %v713 = vsel %vm669, %v667, 0
      %v716 = vsel %vm669, %v668, 0
      %vm718 = vcmask 1043456
      %v720 = vsel %vm718, %v620, 0
      %722 = vmatpush.bf16.msra.mxu0 0
      %723 = vmatpush.bf16.msra.mxu0 0
      %724 = vmatpush.bf16.msra.mxu0 0
      %725 = vmatpush.bf16.msra.mxu0 0
      %726 = vmatpush.bf16.msra.mxu0 0
      %727 = vmatpush.bf16.msra.mxu0 0
      %728 = vmatpush.bf16.msra.mxu0 0
      %729 = vmatpush.bf16.msra.mxu0 %v720
      %730 = vmatmul.bf16.gmra.mxu0 %v671
      %v731 = vpop.f32.mrf.mxu0
      %v732 = vadd.f32 0.0, %v731
      %v733 = vpop.f32.mrf.mxu0
      %v734 = vadd.f32 0.0, %v733
      %735 = vmatmul.bf16.gmra.mxu0 %v674
      %v736 = vpop.f32.mrf.mxu0
      %v737 = vadd.f32 0.0, %v736
      %v738 = vpop.f32.mrf.mxu0
      %v739 = vadd.f32 0.0, %v738
      %740 = vmatmul.bf16.gmra.mxu0 %v677
      %v741 = vpop.f32.mrf.mxu0
      %v742 = vadd.f32 0.0, %v741
      %v743 = vpop.f32.mrf.mxu0
      %v744 = vadd.f32 0.0, %v743
      %745 = vmatmul.bf16.gmra.mxu0 %v680
      %v746 = vpop.f32.mrf.mxu0
      %v747 = vadd.f32 0.0, %v746
      %v748 = vpop.f32.mrf.mxu0
      %v749 = vadd.f32 0.0, %v748
      %750 = vmatmul.bf16.gmra.mxu0 %v683
      %v751 = vpop.f32.mrf.mxu0
      %v752 = vadd.f32 0.0, %v751
      %v753 = vpop.f32.mrf.mxu0
      %v754 = vadd.f32 0.0, %v753
      %755 = vmatmul.bf16.gmra.mxu0 %v686
      %v756 = vpop.f32.mrf.mxu0
      %v757 = vadd.f32 0.0, %v756
      %v758 = vpop.f32.mrf.mxu0
      %v759 = vadd.f32 0.0, %v758
      %760 = vmatmul.bf16.gmra.mxu0 %v689
      %v761 = vpop.f32.mrf.mxu0
      %v762 = vadd.f32 0.0, %v761
      %v763 = vpop.f32.mrf.mxu0
      %v764 = vadd.f32 0.0, %v763
      %765 = vmatmul.bf16.gmra.mxu0 %v692
      %v766 = vpop.f32.mrf.mxu0
      %v767 = vadd.f32 0.0, %v766
      %v768 = vpop.f32.mrf.mxu0
      %v769 = vadd.f32 0.0, %v768
      %770 = vmatmul.bf16.gmra.mxu0 %v695
      %v771 = vpop.f32.mrf.mxu0
      %v772 = vadd.f32 0.0, %v771
      %v773 = vpop.f32.mrf.mxu0
      %v774 = vadd.f32 0.0, %v773
      %775 = vmatmul.bf16.gmra.mxu0 %v698
      %v776 = vpop.f32.mrf.mxu0
      %v777 = vadd.f32 0.0, %v776
      %v778 = vpop.f32.mrf.mxu0
      %v779 = vadd.f32 0.0, %v778
      %780 = vmatmul.bf16.gmra.mxu0 %v701
      %v781 = vpop.f32.mrf.mxu0
      %v782 = vadd.f32 0.0, %v781
      %v783 = vpop.f32.mrf.mxu0
      %v784 = vadd.f32 0.0, %v783
      %785 = vmatmul.bf16.gmra.mxu0 %v704
      %v786 = vpop.f32.mrf.mxu0
      %v787 = vadd.f32 0.0, %v786
      %v788 = vpop.f32.mrf.mxu0
      %v789 = vadd.f32 0.0, %v788
      %790 = vmatmul.bf16.gmra.mxu0 %v707
      %v791 = vpop.f32.mrf.mxu0
      %v792 = vadd.f32 0.0, %v791
      %v793 = vpop.f32.mrf.mxu0
      %v794 = vadd.f32 0.0, %v793
      %795 = vmatmul.bf16.gmra.mxu0 %v710
      %v796 = vpop.f32.mrf.mxu0
      %v797 = vadd.f32 0.0, %v796
      %v798 = vpop.f32.mrf.mxu0
      %v799 = vadd.f32 0.0, %v798
      %800 = vmatmul.bf16.gmra.mxu0 %v713
      %v801 = vpop.f32.mrf.mxu0
      %v802 = vadd.f32 0.0, %v801
      %v803 = vpop.f32.mrf.mxu0
      %v804 = vadd.f32 0.0, %v803
      %805 = vmatmul.bf16.gmra.mxu0 %v716
      %v806 = vpop.f32.mrf.mxu0
      %v807 = vadd.f32 0.0, %v806
      %v808 = vpop.f32.mrf.mxu0
      %v809 = vadd.f32 0.0, %v808
      %810 = vdwg.mxu0
      %v843 = vunpack.c.l.b16 %v183
      %v844 = vunpack.c.l.b16 %v184
      %v845 = vunpack.c.l.b16 %v185
      %v846 = vunpack.c.l.b16 %v186
      %v847 = vunpack.c.l.b16 %v187
      %v848 = vunpack.c.l.b16 %v188
      %v849 = vunpack.c.l.b16 %v189
      %v850 = vunpack.c.l.b16 %v190
      %v851 = vunpack.c.l.b16 %v191
      %v852 = vunpack.c.l.b16 %v192
      %v853 = vunpack.c.l.b16 %v193
      %v854 = vunpack.c.l.b16 %v194
      %v855 = vunpack.c.l.b16 %v195
      %v856 = vunpack.c.l.b16 %v196
      %v857 = vunpack.c.l.b16 %v197
      %v858 = vunpack.c.l.b16 %v198
      %v859 = vunpack.c.l.b16 %v199
      %v860 = vunpack.c.l.b16 %v200
      %v861 = vunpack.c.l.b16 %v201
      %v862 = vunpack.c.l.b16 %v202
      %v863 = vunpack.c.l.b16 %v203
      %v864 = vunpack.c.l.b16 %v204
      %v865 = vunpack.c.l.b16 %v205
      %v866 = vunpack.c.l.b16 %v206
      %v867 = vunpack.c.l.b16 %v207
      %v868 = vunpack.c.l.b16 %v208
      %v869 = vunpack.c.l.b16 %v209
      %v870 = vunpack.c.l.b16 %v210
      %v871 = vunpack.c.l.b16 %v211
      %v872 = vunpack.c.l.b16 %v212
      %v873 = vunpack.c.l.b16 %v213
      %v874 = vunpack.c.l.b16 %v214
      %v875 = vpack.c.b16 %v844, %v843
      %v876 = vpack.c.b16 %v846, %v845
      %v877 = vpack.c.b16 %v848, %v847
      %v878 = vpack.c.b16 %v850, %v849
      %v879 = vpack.c.b16 %v852, %v851
      %v880 = vpack.c.b16 %v854, %v853
      %v881 = vpack.c.b16 %v856, %v855
      %v882 = vpack.c.b16 %v858, %v857
      %v883 = vpack.c.b16 %v860, %v859
      %v884 = vpack.c.b16 %v862, %v861
      %v885 = vpack.c.b16 %v864, %v863
      %v886 = vpack.c.b16 %v866, %v865
      %v887 = vpack.c.b16 %v868, %v867
      %v888 = vpack.c.b16 %v870, %v869
      %v889 = vpack.c.b16 %v872, %v871
      %v890 = vpack.c.b16 %v874, %v873
      %v892 = vsel %vm669, %v875, 0
      %v895 = vsel %vm669, %v876, 0
      %v898 = vsel %vm669, %v877, 0
      %v901 = vsel %vm669, %v878, 0
      %v904 = vsel %vm669, %v879, 0
      %v907 = vsel %vm669, %v880, 0
      %v910 = vsel %vm669, %v881, 0
      %v913 = vsel %vm669, %v882, 0
      %v916 = vsel %vm669, %v883, 0
      %v919 = vsel %vm669, %v884, 0
      %v922 = vsel %vm669, %v885, 0
      %v925 = vsel %vm669, %v886, 0
      %v928 = vsel %vm669, %v887, 0
      %v931 = vsel %vm669, %v888, 0
      %v934 = vsel %vm669, %v889, 0
      %v937 = vsel %vm669, %v890, 0
      %v940 = vsel %vm718, %v215, 0
      %942 = vmatpush.bf16.msra.mxu0 0
      %943 = vmatpush.bf16.msra.mxu0 0
      %944 = vmatpush.bf16.msra.mxu0 0
      %945 = vmatpush.bf16.msra.mxu0 0
      %946 = vmatpush.bf16.msra.mxu0 0
      %947 = vmatpush.bf16.msra.mxu0 0
      %948 = vmatpush.bf16.msra.mxu0 0
      %949 = vmatpush.bf16.msra.mxu0 %v940
      %950 = vmatmul.bf16.gmra.mxu0 %v892
      %v951 = vpop.f32.mrf.mxu0
      %v952 = vadd.f32 %v732, %v951
      %v953 = vpop.f32.mrf.mxu0
      %v954 = vadd.f32 %v734, %v953
      %955 = vmatmul.bf16.gmra.mxu0 %v895
      %v956 = vpop.f32.mrf.mxu0
      %v957 = vadd.f32 %v737, %v956
      %v958 = vpop.f32.mrf.mxu0
      %v959 = vadd.f32 %v739, %v958
      %960 = vmatmul.bf16.gmra.mxu0 %v898
      %v961 = vpop.f32.mrf.mxu0
      %v962 = vadd.f32 %v742, %v961
      %v963 = vpop.f32.mrf.mxu0
      %v964 = vadd.f32 %v744, %v963
      %965 = vmatmul.bf16.gmra.mxu0 %v901
      %v966 = vpop.f32.mrf.mxu0
      %v967 = vadd.f32 %v747, %v966
      %v968 = vpop.f32.mrf.mxu0
      %v969 = vadd.f32 %v749, %v968
      %970 = vmatmul.bf16.gmra.mxu0 %v904
      %v971 = vpop.f32.mrf.mxu0
      %v972 = vadd.f32 %v752, %v971
      %v973 = vpop.f32.mrf.mxu0
      %v974 = vadd.f32 %v754, %v973
      %975 = vmatmul.bf16.gmra.mxu0 %v907
      %v976 = vpop.f32.mrf.mxu0
      %v977 = vadd.f32 %v757, %v976
      %v978 = vpop.f32.mrf.mxu0
      %v979 = vadd.f32 %v759, %v978
      %980 = vmatmul.bf16.gmra.mxu0 %v910
      %v981 = vpop.f32.mrf.mxu0
      %v982 = vadd.f32 %v762, %v981
      %v983 = vpop.f32.mrf.mxu0
      %v984 = vadd.f32 %v764, %v983
      %985 = vmatmul.bf16.gmra.mxu0 %v913
      %v986 = vpop.f32.mrf.mxu0
      %v987 = vadd.f32 %v767, %v986
      %v988 = vpop.f32.mrf.mxu0
      %v989 = vadd.f32 %v769, %v988
      %990 = vmatmul.bf16.gmra.mxu0 %v916
      %v991 = vpop.f32.mrf.mxu0
      %v992 = vadd.f32 %v772, %v991
      %v993 = vpop.f32.mrf.mxu0
      %v994 = vadd.f32 %v774, %v993
      %995 = vmatmul.bf16.gmra.mxu0 %v919
      %v996 = vpop.f32.mrf.mxu0
      %v997 = vadd.f32 %v777, %v996
      %v998 = vpop.f32.mrf.mxu0
      %v999 = vadd.f32 %v779, %v998
      %1000 = vmatmul.bf16.gmra.mxu0 %v922
      %v1001 = vpop.f32.mrf.mxu0
      %v1002 = vadd.f32 %v782, %v1001
      %v1003 = vpop.f32.mrf.mxu0
      %v1004 = vadd.f32 %v784, %v1003
      %1005 = vmatmul.bf16.gmra.mxu0 %v925
      %v1006 = vpop.f32.mrf.mxu0
      %v1007 = vadd.f32 %v787, %v1006
      %v1008 = vpop.f32.mrf.mxu0
      %v1009 = vadd.f32 %v789, %v1008
      %1010 = vmatmul.bf16.gmra.mxu0 %v928
      %v1011 = vpop.f32.mrf.mxu0
      %v1012 = vadd.f32 %v792, %v1011
      %v1013 = vpop.f32.mrf.mxu0
      %v1014 = vadd.f32 %v794, %v1013
      %1015 = vmatmul.bf16.gmra.mxu0 %v931
      %v1016 = vpop.f32.mrf.mxu0
      %v1017 = vadd.f32 %v797, %v1016
      %v1018 = vpop.f32.mrf.mxu0
      %v1019 = vadd.f32 %v799, %v1018
      %1020 = vmatmul.bf16.gmra.mxu0 %v934
      %v1021 = vpop.f32.mrf.mxu0
      %v1022 = vadd.f32 %v802, %v1021
      %v1023 = vpop.f32.mrf.mxu0
      %v1024 = vadd.f32 %v804, %v1023
      %1025 = vmatmul.bf16.gmra.mxu0 %v937
      %v1026 = vpop.f32.mrf.mxu0
      %v1027 = vadd.f32 %v807, %v1026
      %v1028 = vpop.f32.mrf.mxu0
      %v1029 = vadd.f32 %v809, %v1028
      %1030 = vdwg.mxu0
      %v1031 = vld [vmem:[%s172] sm:$0xe]
      %v1032 = vld [vmem:[%s172 + $0xc] sm:$0xe]
      %v1033 = vld [vmem:[%s172 + $0x18] sm:$0xe]
      %v1034 = vld [vmem:[%s172 + $0x24] sm:$0xe]
      %v1035 = vld [vmem:[%s172 + $0x30] sm:$0xe]
      %v1036 = vld [vmem:[%s172 + $0x3c] sm:$0xe]
      %v1037 = vld [vmem:[%s172 + $0x48] sm:$0xe]
      %v1038 = vld [vmem:[%s172 + $0x54] sm:$0xe]
      %v1039 = vld [vmem:[%s172 + $0x60] sm:$0xe]
      %v1040 = vld [vmem:[%s172 + $0x6c] sm:$0xe]
      %v1041 = vld [vmem:[%s172 + $0x78] sm:$0xe]
      %v1042 = vld [vmem:[%s172 + $0x84] sm:$0xe]
      %v1043 = vld [vmem:[%s172 + $0x90] sm:$0xe]
      %v1044 = vld [vmem:[%s172 + $0x9c] sm:$0xe]
      %v1045 = vld [vmem:[%s172 + $0xa8] sm:$0xe]
      %v1046 = vld [vmem:[%s172 + $0xb4] sm:$0xe]
      %vm1079 = vcmask 1042432
      %vm1080 = vcmask 1046532
      %vm1081 = vmor %vm1079, %vm1080
      %v1082 = vrot.slane %v1031, 5
      %v1083 = vrot.slane %v1082, 4
      %v1084 = vrot.slane %v184, 5
      %v1085 = vsel %vm1081, %v1083, %v1084
      %v1086 = vrot.slane %v1084, 4
      %v1087 = vrot.slane %v216, 5
      %v1088 = vsel %vm1081, %v1086, %v1087
      %v1089 = vrot.slane %v1032, 5
      %v1090 = vrot.slane %v1089, 4
      %v1091 = vrot.slane %v186, 5
      %v1092 = vsel %vm1081, %v1090, %v1091
      %v1093 = vrot.slane %v1091, 4
      %v1094 = vrot.slane %v217, 5
      %v1095 = vsel %vm1081, %v1093, %v1094
      %v1096 = vrot.slane %v1033, 5
      %v1097 = vrot.slane %v1096, 4
      %v1098 = vrot.slane %v188, 5
      %v1099 = vsel %vm1081, %v1097, %v1098
      %v1100 = vrot.slane %v1098, 4
      %v1101 = vrot.slane %v218, 5
      %v1102 = vsel %vm1081, %v1100, %v1101
      %v1103 = vrot.slane %v1034, 5
      %v1104 = vrot.slane %v1103, 4
      %v1105 = vrot.slane %v190, 5
      %v1106 = vsel %vm1081, %v1104, %v1105
      %v1107 = vrot.slane %v1105, 4
      %v1108 = vrot.slane %v219, 5
      %v1109 = vsel %vm1081, %v1107, %v1108
      %v1110 = vrot.slane %v1035, 5
      %v1111 = vrot.slane %v1110, 4
      %v1112 = vrot.slane %v192, 5
      %v1113 = vsel %vm1081, %v1111, %v1112
      %v1114 = vrot.slane %v1112, 4
      %v1115 = vrot.slane %v220, 5
      %v1116 = vsel %vm1081, %v1114, %v1115
      %v1117 = vrot.slane %v1036, 5
      %v1118 = vrot.slane %v1117, 4
      %v1119 = vrot.slane %v194, 5
      %v1120 = vsel %vm1081, %v1118, %v1119
      %v1121 = vrot.slane %v1119, 4
      %v1122 = vrot.slane %v221, 5
      %v1123 = vsel %vm1081, %v1121, %v1122
      %v1124 = vrot.slane %v1037, 5
      %v1125 = vrot.slane %v1124, 4
      %v1126 = vrot.slane %v196, 5
      %v1127 = vsel %vm1081, %v1125, %v1126
      %v1128 = vrot.slane %v1126, 4
      %v1129 = vrot.slane %v222, 5
      %v1130 = vsel %vm1081, %v1128, %v1129
      %v1131 = vrot.slane %v1038, 5
      %v1132 = vrot.slane %v1131, 4
      %v1133 = vrot.slane %v198, 5
      %v1134 = vsel %vm1081, %v1132, %v1133
      %v1135 = vrot.slane %v1133, 4
      %v1136 = vrot.slane %v223, 5
      %v1137 = vsel %vm1081, %v1135, %v1136
      %v1138 = vrot.slane %v1039, 5
      %v1139 = vrot.slane %v1138, 4
      %v1140 = vrot.slane %v200, 5
      %v1141 = vsel %vm1081, %v1139, %v1140
      %v1142 = vrot.slane %v1140, 4
      %v1143 = vrot.slane %v224, 5
      %v1144 = vsel %vm1081, %v1142, %v1143
      %v1145 = vrot.slane %v1040, 5
      %v1146 = vrot.slane %v1145, 4
      %v1147 = vrot.slane %v202, 5
      %v1148 = vsel %vm1081, %v1146, %v1147
      %v1149 = vrot.slane %v1147, 4
      %v1150 = vrot.slane %v225, 5
      %v1151 = vsel %vm1081, %v1149, %v1150
      %v1152 = vrot.slane %v1041, 5
      %v1153 = vrot.slane %v1152, 4
      %v1154 = vrot.slane %v204, 5
      %v1155 = vsel %vm1081, %v1153, %v1154
      %v1156 = vrot.slane %v1154, 4
      %v1157 = vrot.slane %v226, 5
      %v1158 = vsel %vm1081, %v1156, %v1157
      %v1159 = vrot.slane %v1042, 5
      %v1160 = vrot.slane %v1159, 4
      %v1161 = vrot.slane %v206, 5
      %v1162 = vsel %vm1081, %v1160, %v1161
      %v1163 = vrot.slane %v1161, 4
      %v1164 = vrot.slane %v227, 5
      %v1165 = vsel %vm1081, %v1163, %v1164
      %v1166 = vrot.slane %v1043, 5
      %v1167 = vrot.slane %v1166, 4
      %v1168 = vrot.slane %v208, 5
      %v1169 = vsel %vm1081, %v1167, %v1168
      %v1170 = vrot.slane %v1168, 4
      %v1171 = vrot.slane %v228, 5
      %v1172 = vsel %vm1081, %v1170, %v1171
      %v1173 = vrot.slane %v1044, 5
      %v1174 = vrot.slane %v1173, 4
      %v1175 = vrot.slane %v210, 5
      %v1176 = vsel %vm1081, %v1174, %v1175
      %v1177 = vrot.slane %v1175, 4
      %v1178 = vrot.slane %v229, 5
      %v1179 = vsel %vm1081, %v1177, %v1178
      %v1180 = vrot.slane %v1045, 5
      %v1181 = vrot.slane %v1180, 4
      %v1182 = vrot.slane %v212, 5
      %v1183 = vsel %vm1081, %v1181, %v1182
      %v1184 = vrot.slane %v1182, 4
      %v1185 = vrot.slane %v230, 5
      %v1186 = vsel %vm1081, %v1184, %v1185
      %v1187 = vrot.slane %v1046, 5
      %v1188 = vrot.slane %v1187, 4
      %v1189 = vrot.slane %v214, 5
      %v1190 = vsel %vm1081, %v1188, %v1189
      %v1191 = vrot.slane %v1189, 4
      %v1192 = vrot.slane %v231, 5
      %v1193 = vsel %vm1081, %v1191, %v1192
      %s1194 = scalar_lea.vmem %s1, 8
      %v1195 = vld [vmem:[%s1194] sm:$0xf]
      %v1196 = vunpack.c.l.b16 %v1085
      %v1197 = vunpack.c.l.b16 %v1088
      %v1198 = vunpack.c.l.b16 %v1092
      %v1199 = vunpack.c.l.b16 %v1095
      %v1200 = vunpack.c.l.b16 %v1099
      %v1201 = vunpack.c.l.b16 %v1102
      %v1202 = vunpack.c.l.b16 %v1106
      %v1203 = vunpack.c.l.b16 %v1109
      %v1204 = vunpack.c.l.b16 %v1113
      %v1205 = vunpack.c.l.b16 %v1116
      %v1206 = vunpack.c.l.b16 %v1120
      %v1207 = vunpack.c.l.b16 %v1123
      %v1208 = vunpack.c.l.b16 %v1127
      %v1209 = vunpack.c.l.b16 %v1130
      %v1210 = vunpack.c.l.b16 %v1134
      %v1211 = vunpack.c.l.b16 %v1137
      %v1212 = vunpack.c.l.b16 %v1141
      %v1213 = vunpack.c.l.b16 %v1144
      %v1214 = vunpack.c.l.b16 %v1148
      %v1215 = vunpack.c.l.b16 %v1151
      %v1216 = vunpack.c.l.b16 %v1155
      %v1217 = vunpack.c.l.b16 %v1158
      %v1218 = vunpack.c.l.b16 %v1162
      %v1219 = vunpack.c.l.b16 %v1165
      %v1220 = vunpack.c.l.b16 %v1169
      %v1221 = vunpack.c.l.b16 %v1172
      %v1222 = vunpack.c.l.b16 %v1176
      %v1223 = vunpack.c.l.b16 %v1179
      %v1224 = vunpack.c.l.b16 %v1183
      %v1225 = vunpack.c.l.b16 %v1186
      %v1226 = vunpack.c.l.b16 %v1190
      %v1227 = vunpack.c.l.b16 %v1193
      %v1228 = vpack.c.b16 %v1197, %v1196
      %v1229 = vpack.c.b16 %v1199, %v1198
      %v1230 = vpack.c.b16 %v1201, %v1200
      %v1231 = vpack.c.b16 %v1203, %v1202
      %v1232 = vpack.c.b16 %v1205, %v1204
      %v1233 = vpack.c.b16 %v1207, %v1206
      %v1234 = vpack.c.b16 %v1209, %v1208
      %v1235 = vpack.c.b16 %v1211, %v1210
      %v1236 = vpack.c.b16 %v1213, %v1212
      %v1237 = vpack.c.b16 %v1215, %v1214
      %v1238 = vpack.c.b16 %v1217, %v1216
      %v1239 = vpack.c.b16 %v1219, %v1218
      %v1240 = vpack.c.b16 %v1221, %v1220
      %v1241 = vpack.c.b16 %v1223, %v1222
      %v1242 = vpack.c.b16 %v1225, %v1224
      %v1243 = vpack.c.b16 %v1227, %v1226
      %v1245 = vsel %vm669, %v1228, 0
      %v1248 = vsel %vm669, %v1229, 0
      %v1251 = vsel %vm669, %v1230, 0
      %v1254 = vsel %vm669, %v1231, 0
      %v1257 = vsel %vm669, %v1232, 0
      %v1260 = vsel %vm669, %v1233, 0
      %v1263 = vsel %vm669, %v1234, 0
      %v1266 = vsel %vm669, %v1235, 0
      %v1269 = vsel %vm669, %v1236, 0
      %v1272 = vsel %vm669, %v1237, 0
      %v1275 = vsel %vm669, %v1238, 0
      %v1278 = vsel %vm669, %v1239, 0
      %v1281 = vsel %vm669, %v1240, 0
      %v1284 = vsel %vm669, %v1241, 0
      %v1287 = vsel %vm669, %v1242, 0
      %v1290 = vsel %vm669, %v1243, 0
      %v1293 = vsel %vm718, %v1195, 0
      %1295 = vmatpush.bf16.msra.mxu0 0
      %1296 = vmatpush.bf16.msra.mxu0 0
      %1297 = vmatpush.bf16.msra.mxu0 0
      %1298 = vmatpush.bf16.msra.mxu0 0
      %1299 = vmatpush.bf16.msra.mxu0 0
      %1300 = vmatpush.bf16.msra.mxu0 0
      %1301 = vmatpush.bf16.msra.mxu0 0
      %1302 = vmatpush.bf16.msra.mxu0 %v1293
      %1303 = vmatmul.bf16.gmra.mxu0 %v1245
      %v1304 = vpop.f32.mrf.mxu0
      %v1305 = vadd.f32 0.0, %v1304
      %v1306 = vpop.f32.mrf.mxu0
      %v1307 = vadd.f32 0.0, %v1306
      %1308 = vmatmul.bf16.gmra.mxu0 %v1248
      %v1309 = vpop.f32.mrf.mxu0
      %v1310 = vadd.f32 0.0, %v1309
      %v1311 = vpop.f32.mrf.mxu0
      %v1312 = vadd.f32 0.0, %v1311
      %1313 = vmatmul.bf16.gmra.mxu0 %v1251
      %v1314 = vpop.f32.mrf.mxu0
      %v1315 = vadd.f32 0.0, %v1314
      %v1316 = vpop.f32.mrf.mxu0
      %v1317 = vadd.f32 0.0, %v1316
      %1318 = vmatmul.bf16.gmra.mxu0 %v1254
      %v1319 = vpop.f32.mrf.mxu0
      %v1320 = vadd.f32 0.0, %v1319
      %v1321 = vpop.f32.mrf.mxu0
      %v1322 = vadd.f32 0.0, %v1321
      %1323 = vmatmul.bf16.gmra.mxu0 %v1257
      %v1324 = vpop.f32.mrf.mxu0
      %v1325 = vadd.f32 0.0, %v1324
      %v1326 = vpop.f32.mrf.mxu0
      %v1327 = vadd.f32 0.0, %v1326
      %1328 = vmatmul.bf16.gmra.mxu0 %v1260
      %v1329 = vpop.f32.mrf.mxu0
      %v1330 = vadd.f32 0.0, %v1329
      %v1331 = vpop.f32.mrf.mxu0
      %v1332 = vadd.f32 0.0, %v1331
      %1333 = vmatmul.bf16.gmra.mxu0 %v1263
      %v1334 = vpop.f32.mrf.mxu0
      %v1335 = vadd.f32 0.0, %v1334
      %v1336 = vpop.f32.mrf.mxu0
      %v1337 = vadd.f32 0.0, %v1336
      %1338 = vmatmul.bf16.gmra.mxu0 %v1266
      %v1339 = vpop.f32.mrf.mxu0
      %v1340 = vadd.f32 0.0, %v1339
      %v1341 = vpop.f32.mrf.mxu0
      %v1342 = vadd.f32 0.0, %v1341
      %1343 = vmatmul.bf16.gmra.mxu0 %v1269
      %v1344 = vpop.f32.mrf.mxu0
      %v1345 = vadd.f32 0.0, %v1344
      %v1346 = vpop.f32.mrf.mxu0
      %v1347 = vadd.f32 0.0, %v1346
      %1348 = vmatmul.bf16.gmra.mxu0 %v1272
      %v1349 = vpop.f32.mrf.mxu0
      %v1350 = vadd.f32 0.0, %v1349
      %v1351 = vpop.f32.mrf.mxu0
      %v1352 = vadd.f32 0.0, %v1351
      %1353 = vmatmul.bf16.gmra.mxu0 %v1275
      %v1354 = vpop.f32.mrf.mxu0
      %v1355 = vadd.f32 0.0, %v1354
      %v1356 = vpop.f32.mrf.mxu0
      %v1357 = vadd.f32 0.0, %v1356
      %1358 = vmatmul.bf16.gmra.mxu0 %v1278
      %v1359 = vpop.f32.mrf.mxu0
      %v1360 = vadd.f32 0.0, %v1359
      %v1361 = vpop.f32.mrf.mxu0
      %v1362 = vadd.f32 0.0, %v1361
      %1363 = vmatmul.bf16.gmra.mxu0 %v1281
      %v1364 = vpop.f32.mrf.mxu0
      %v1365 = vadd.f32 0.0, %v1364
      %v1366 = vpop.f32.mrf.mxu0
      %v1367 = vadd.f32 0.0, %v1366
      %1368 = vmatmul.bf16.gmra.mxu0 %v1284
      %v1369 = vpop.f32.mrf.mxu0
      %v1370 = vadd.f32 0.0, %v1369
      %v1371 = vpop.f32.mrf.mxu0
      %v1372 = vadd.f32 0.0, %v1371
      %1373 = vmatmul.bf16.gmra.mxu0 %v1287
      %v1374 = vpop.f32.mrf.mxu0
      %v1375 = vadd.f32 0.0, %v1374
      %v1376 = vpop.f32.mrf.mxu0
      %v1377 = vadd.f32 0.0, %v1376
      %1378 = vmatmul.bf16.gmra.mxu0 %v1290
      %v1379 = vpop.f32.mrf.mxu0
      %v1380 = vadd.f32 0.0, %v1379
      %v1381 = vpop.f32.mrf.mxu0
      %v1382 = vadd.f32 0.0, %v1381
      %1383 = vdwg.mxu0
      %v1384 = vadd.f32 %v952, %v1305
      %v1385 = vadd.f32 %v954, %v1307
      %v1386 = vadd.f32 %v957, %v1310
      %v1387 = vadd.f32 %v959, %v1312
      %v1388 = vadd.f32 %v962, %v1315
      %v1389 = vadd.f32 %v964, %v1317
      %v1390 = vadd.f32 %v967, %v1320
      %v1391 = vadd.f32 %v969, %v1322
      %v1392 = vadd.f32 %v972, %v1325
      %v1393 = vadd.f32 %v974, %v1327
      %v1394 = vadd.f32 %v977, %v1330
      %v1395 = vadd.f32 %v979, %v1332
      %v1396 = vadd.f32 %v982, %v1335
      %v1397 = vadd.f32 %v984, %v1337
      %v1398 = vadd.f32 %v987, %v1340
      %v1399 = vadd.f32 %v989, %v1342
      %v1400 = vadd.f32 %v992, %v1345
      %v1401 = vadd.f32 %v994, %v1347
      %v1402 = vadd.f32 %v997, %v1350
      %v1403 = vadd.f32 %v999, %v1352
      %v1404 = vadd.f32 %v1002, %v1355
      %v1405 = vadd.f32 %v1004, %v1357
      %v1406 = vadd.f32 %v1007, %v1360
      %v1407 = vadd.f32 %v1009, %v1362
      %v1408 = vadd.f32 %v1012, %v1365
      %v1409 = vadd.f32 %v1014, %v1367
      %v1410 = vadd.f32 %v1017, %v1370
      %v1411 = vadd.f32 %v1019, %v1372
      %v1412 = vadd.f32 %v1022, %v1375
      %v1413 = vadd.f32 %v1024, %v1377
      %v1414 = vadd.f32 %v1027, %v1380
      %v1415 = vadd.f32 %v1029, %v1382
      %s1416 = scalar_lea.vmem %s172, 12
      %v1417 = vld [vmem:[%s1416] sm:$0xf]
      %v1418 = vld [vmem:[%s1416 + $0x4] sm:$0xf]
      %v1419 = vld [vmem:[%s1416 + $0xc] sm:$0xf]
      %v1420 = vld [vmem:[%s1416 + $0x10] sm:$0xf]
      %v1421 = vld [vmem:[%s1416 + $0x18] sm:$0xf]
      %v1422 = vld [vmem:[%s1416 + $0x1c] sm:$0xf]
      %v1423 = vld [vmem:[%s1416 + $0x24] sm:$0xf]
      %v1424 = vld [vmem:[%s1416 + $0x28] sm:$0xf]
      %v1425 = vld [vmem:[%s1416 + $0x30] sm:$0xf]
      %v1426 = vld [vmem:[%s1416 + $0x34] sm:$0xf]
      %v1427 = vld [vmem:[%s1416 + $0x3c] sm:$0xf]
      %v1428 = vld [vmem:[%s1416 + $0x40] sm:$0xf]
      %v1429 = vld [vmem:[%s1416 + $0x48] sm:$0xf]
      %v1430 = vld [vmem:[%s1416 + $0x4c] sm:$0xf]
      %v1431 = vld [vmem:[%s1416 + $0x54] sm:$0xf]
      %v1432 = vld [vmem:[%s1416 + $0x58] sm:$0xf]
      %v1433 = vld [vmem:[%s1416 + $0x60] sm:$0xf]
      %v1434 = vld [vmem:[%s1416 + $0x64] sm:$0xf]
      %v1435 = vld [vmem:[%s1416 + $0x6c] sm:$0xf]
      %v1436 = vld [vmem:[%s1416 + $0x70] sm:$0xf]
      %v1437 = vld [vmem:[%s1416 + $0x78] sm:$0xf]
      %v1438 = vld [vmem:[%s1416 + $0x7c] sm:$0xf]
      %v1439 = vld [vmem:[%s1416 + $0x84] sm:$0xf]
      %v1440 = vld [vmem:[%s1416 + $0x88] sm:$0xf]
      %v1441 = vld [vmem:[%s1416 + $0x90] sm:$0xf]
      %v1442 = vld [vmem:[%s1416 + $0x94] sm:$0xf]
      %v1443 = vld [vmem:[%s1416 + $0x9c] sm:$0xf]
      %v1444 = vld [vmem:[%s1416 + $0xa0] sm:$0xf]
      %v1445 = vld [vmem:[%s1416 + $0xa8] sm:$0xf]
      %v1446 = vld [vmem:[%s1416 + $0xac] sm:$0xf]
      %v1447 = vld [vmem:[%s1416 + $0xb4] sm:$0xf]
      %v1448 = vld [vmem:[%s1416 + $0xb8] sm:$0xf]
      %s1449 = scalar_lea.vmem %s1, 12
      %v1450 = vld [vmem:[%s1449] sm:$0xf]
      %v1483 = vunpack.c.l.b16 %v1417
      %v1484 = vunpack.c.l.b16 %v1418
      %v1485 = vunpack.c.l.b16 %v1419
      %v1486 = vunpack.c.l.b16 %v1420
      %v1487 = vunpack.c.l.b16 %v1421
      %v1488 = vunpack.c.l.b16 %v1422
      %v1489 = vunpack.c.l.b16 %v1423
      %v1490 = vunpack.c.l.b16 %v1424
      %v1491 = vunpack.c.l.b16 %v1425
      %v1492 = vunpack.c.l.b16 %v1426
      %v1493 = vunpack.c.l.b16 %v1427
      %v1494 = vunpack.c.l.b16 %v1428
      %v1495 = vunpack.c.l.b16 %v1429
      %v1496 = vunpack.c.l.b16 %v1430
      %v1497 = vunpack.c.l.b16 %v1431
      %v1498 = vunpack.c.l.b16 %v1432
      %v1499 = vunpack.c.l.b16 %v1433
      %v1500 = vunpack.c.l.b16 %v1434
      %v1501 = vunpack.c.l.b16 %v1435
      %v1502 = vunpack.c.l.b16 %v1436
      %v1503 = vunpack.c.l.b16 %v1437
      %v1504 = vunpack.c.l.b16 %v1438
      %v1505 = vunpack.c.l.b16 %v1439
      %v1506 = vunpack.c.l.b16 %v1440
      %v1507 = vunpack.c.l.b16 %v1441
      %v1508 = vunpack.c.l.b16 %v1442
      %v1509 = vunpack.c.l.b16 %v1443
      %v1510 = vunpack.c.l.b16 %v1444
      %v1511 = vunpack.c.l.b16 %v1445
      %v1512 = vunpack.c.l.b16 %v1446
      %v1513 = vunpack.c.l.b16 %v1447
      %v1514 = vunpack.c.l.b16 %v1448
      %v1515 = vpack.c.b16 %v1484, %v1483
      %v1516 = vpack.c.b16 %v1486, %v1485
      %v1517 = vpack.c.b16 %v1488, %v1487
      %v1518 = vpack.c.b16 %v1490, %v1489
      %v1519 = vpack.c.b16 %v1492, %v1491
      %v1520 = vpack.c.b16 %v1494, %v1493
      %v1521 = vpack.c.b16 %v1496, %v1495
      %v1522 = vpack.c.b16 %v1498, %v1497
      %v1523 = vpack.c.b16 %v1500, %v1499
      %v1524 = vpack.c.b16 %v1502, %v1501
      %v1525 = vpack.c.b16 %v1504, %v1503
      %v1526 = vpack.c.b16 %v1506, %v1505
      %v1527 = vpack.c.b16 %v1508, %v1507
      %v1528 = vpack.c.b16 %v1510, %v1509
      %v1529 = vpack.c.b16 %v1512, %v1511
      %v1530 = vpack.c.b16 %v1514, %v1513
      %v1532 = vsel %vm669, %v1515, 0
      %v1535 = vsel %vm669, %v1516, 0
      %v1538 = vsel %vm669, %v1517, 0
      %v1541 = vsel %vm669, %v1518, 0
      %v1544 = vsel %vm669, %v1519, 0
      %v1547 = vsel %vm669, %v1520, 0
      %v1550 = vsel %vm669, %v1521, 0
      %v1553 = vsel %vm669, %v1522, 0
      %v1556 = vsel %vm669, %v1523, 0
      %v1559 = vsel %vm669, %v1524, 0
      %v1562 = vsel %vm669, %v1525, 0
      %v1565 = vsel %vm669, %v1526, 0
      %v1568 = vsel %vm669, %v1527, 0
      %v1571 = vsel %vm669, %v1528, 0
      %v1574 = vsel %vm669, %v1529, 0
      %v1577 = vsel %vm669, %v1530, 0
      %v1580 = vsel %vm718, %v1450, 0
      %1582 = vmatpush.bf16.msra.mxu0 0
      %1583 = vmatpush.bf16.msra.mxu0 0
      %1584 = vmatpush.bf16.msra.mxu0 0
      %1585 = vmatpush.bf16.msra.mxu0 0
      %1586 = vmatpush.bf16.msra.mxu0 0
      %1587 = vmatpush.bf16.msra.mxu0 0
      %1588 = vmatpush.bf16.msra.mxu0 0
      %1589 = vmatpush.bf16.msra.mxu0 %v1580
      %1590 = vmatmul.bf16.gmra.mxu0 %v1532
      %v1591 = vpop.f32.mrf.mxu0
      %v1592 = vadd.f32 0.0, %v1591
      %v1593 = vpop.f32.mrf.mxu0
      %v1594 = vadd.f32 0.0, %v1593
      %1595 = vmatmul.bf16.gmra.mxu0 %v1535
      %v1596 = vpop.f32.mrf.mxu0
      %v1597 = vadd.f32 0.0, %v1596
      %v1598 = vpop.f32.mrf.mxu0
      %v1599 = vadd.f32 0.0, %v1598
      %1600 = vmatmul.bf16.gmra.mxu0 %v1538
      %v1601 = vpop.f32.mrf.mxu0
      %v1602 = vadd.f32 0.0, %v1601
      %v1603 = vpop.f32.mrf.mxu0
      %v1604 = vadd.f32 0.0, %v1603
      %1605 = vmatmul.bf16.gmra.mxu0 %v1541
      %v1606 = vpop.f32.mrf.mxu0
      %v1607 = vadd.f32 0.0, %v1606
      %v1608 = vpop.f32.mrf.mxu0
      %v1609 = vadd.f32 0.0, %v1608
      %1610 = vmatmul.bf16.gmra.mxu0 %v1544
      %v1611 = vpop.f32.mrf.mxu0
      %v1612 = vadd.f32 0.0, %v1611
      %v1613 = vpop.f32.mrf.mxu0
      %v1614 = vadd.f32 0.0, %v1613
      %1615 = vmatmul.bf16.gmra.mxu0 %v1547
      %v1616 = vpop.f32.mrf.mxu0
      %v1617 = vadd.f32 0.0, %v1616
      %v1618 = vpop.f32.mrf.mxu0
      %v1619 = vadd.f32 0.0, %v1618
      %1620 = vmatmul.bf16.gmra.mxu0 %v1550
      %v1621 = vpop.f32.mrf.mxu0
      %v1622 = vadd.f32 0.0, %v1621
      %v1623 = vpop.f32.mrf.mxu0
      %v1624 = vadd.f32 0.0, %v1623
      %1625 = vmatmul.bf16.gmra.mxu0 %v1553
      %v1626 = vpop.f32.mrf.mxu0
      %v1627 = vadd.f32 0.0, %v1626
      %v1628 = vpop.f32.mrf.mxu0
      %v1629 = vadd.f32 0.0, %v1628
      %1630 = vmatmul.bf16.gmra.mxu0 %v1556
      %v1631 = vpop.f32.mrf.mxu0
      %v1632 = vadd.f32 0.0, %v1631
      %v1633 = vpop.f32.mrf.mxu0
      %v1634 = vadd.f32 0.0, %v1633
      %1635 = vmatmul.bf16.gmra.mxu0 %v1559
      %v1636 = vpop.f32.mrf.mxu0
      %v1637 = vadd.f32 0.0, %v1636
      %v1638 = vpop.f32.mrf.mxu0
      %v1639 = vadd.f32 0.0, %v1638
      %1640 = vmatmul.bf16.gmra.mxu0 %v1562
      %v1641 = vpop.f32.mrf.mxu0
      %v1642 = vadd.f32 0.0, %v1641
      %v1643 = vpop.f32.mrf.mxu0
      %v1644 = vadd.f32 0.0, %v1643
      %1645 = vmatmul.bf16.gmra.mxu0 %v1565
      %v1646 = vpop.f32.mrf.mxu0
      %v1647 = vadd.f32 0.0, %v1646
      %v1648 = vpop.f32.mrf.mxu0
      %v1649 = vadd.f32 0.0, %v1648
      %1650 = vmatmul.bf16.gmra.mxu0 %v1568
      %v1651 = vpop.f32.mrf.mxu0
      %v1652 = vadd.f32 0.0, %v1651
      %v1653 = vpop.f32.mrf.mxu0
      %v1654 = vadd.f32 0.0, %v1653
      %1655 = vmatmul.bf16.gmra.mxu0 %v1571
      %v1656 = vpop.f32.mrf.mxu0
      %v1657 = vadd.f32 0.0, %v1656
      %v1658 = vpop.f32.mrf.mxu0
      %v1659 = vadd.f32 0.0, %v1658
      %1660 = vmatmul.bf16.gmra.mxu0 %v1574
      %v1661 = vpop.f32.mrf.mxu0
      %v1662 = vadd.f32 0.0, %v1661
      %v1663 = vpop.f32.mrf.mxu0
      %v1664 = vadd.f32 0.0, %v1663
      %1665 = vmatmul.bf16.gmra.mxu0 %v1577
      %v1666 = vpop.f32.mrf.mxu0
      %v1667 = vadd.f32 0.0, %v1666
      %v1668 = vpop.f32.mrf.mxu0
      %v1669 = vadd.f32 0.0, %v1668
      %1670 = vdwg.mxu0
      %v1671 = vadd.f32 %v1384, %v1592
      %v1672 = vadd.f32 %v1385, %v1594
      %v1673 = vadd.f32 %v1386, %v1597
      %v1674 = vadd.f32 %v1387, %v1599
      %v1675 = vadd.f32 %v1388, %v1602
      %v1676 = vadd.f32 %v1389, %v1604
      %v1677 = vadd.f32 %v1390, %v1607
      %v1678 = vadd.f32 %v1391, %v1609
      %v1679 = vadd.f32 %v1392, %v1612
      %v1680 = vadd.f32 %v1393, %v1614
      %v1681 = vadd.f32 %v1394, %v1617
      %v1682 = vadd.f32 %v1395, %v1619
      %v1683 = vadd.f32 %v1396, %v1622
      %v1684 = vadd.f32 %v1397, %v1624
      %v1685 = vadd.f32 %v1398, %v1627
      %v1686 = vadd.f32 %v1399, %v1629
      %v1687 = vadd.f32 %v1400, %v1632
      %v1688 = vadd.f32 %v1401, %v1634
      %v1689 = vadd.f32 %v1402, %v1637
      %v1690 = vadd.f32 %v1403, %v1639
      %v1691 = vadd.f32 %v1404, %v1642
      %v1692 = vadd.f32 %v1405, %v1644
      %v1693 = vadd.f32 %v1406, %v1647
      %v1694 = vadd.f32 %v1407, %v1649
      %v1695 = vadd.f32 %v1408, %v1652
      %v1696 = vadd.f32 %v1409, %v1654
      %v1697 = vadd.f32 %v1410, %v1657
      %v1698 = vadd.f32 %v1411, %v1659
      %v1699 = vadd.f32 %v1412, %v1662
      %v1700 = vadd.f32 %v1413, %v1664
      %v1701 = vadd.f32 %v1414, %v1667
      %v1702 = vadd.f32 %v1415, %v1669
      %v1703 = vld [vmem:[%s1416] sm:$0xf]
      %v1704 = vld [vmem:[%s1416 + $0x4] sm:$0xf]
      %v1705 = vld [vmem:[%s1416 + $0x8] sm:$0x1]
      %v1706 = vld [vmem:[%s1416 + $0xc] sm:$0xf]
      %v1707 = vld [vmem:[%s1416 + $0x10] sm:$0xf]
      %v1708 = vld [vmem:[%s1416 + $0x14] sm:$0x1]
      %v1709 = vld [vmem:[%s1416 + $0x18] sm:$0xf]
      %v1710 = vld [vmem:[%s1416 + $0x1c] sm:$0xf]
      %v1711 = vld [vmem:[%s1416 + $0x20] sm:$0x1]
      %v1712 = vld [vmem:[%s1416 + $0x24] sm:$0xf]
      %v1713 = vld [vmem:[%s1416 + $0x28] sm:$0xf]
      %v1714 = vld [vmem:[%s1416 + $0x2c] sm:$0x1]
      %v1715 = vld [vmem:[%s1416 + $0x30] sm:$0xf]
      %v1716 = vld [vmem:[%s1416 + $0x34] sm:$0xf]
      %v1717 = vld [vmem:[%s1416 + $0x38] sm:$0x1]
      %v1718 = vld [vmem:[%s1416 + $0x3c] sm:$0xf]
      %v1719 = vld [vmem:[%s1416 + $0x40] sm:$0xf]
      %v1720 = vld [vmem:[%s1416 + $0x44] sm:$0x1]
      %v1721 = vld [vmem:[%s1416 + $0x48] sm:$0xf]
      %v1722 = vld [vmem:[%s1416 + $0x4c] sm:$0xf]
      %v1723 = vld [vmem:[%s1416 + $0x50] sm:$0x1]
      %v1724 = vld [vmem:[%s1416 + $0x54] sm:$0xf]
      %v1725 = vld [vmem:[%s1416 + $0x58] sm:$0xf]
      %v1726 = vld [vmem:[%s1416 + $0x5c] sm:$0x1]
      %v1727 = vld [vmem:[%s1416 + $0x60] sm:$0xf]
      %v1728 = vld [vmem:[%s1416 + $0x64] sm:$0xf]
      %v1729 = vld [vmem:[%s1416 + $0x68] sm:$0x1]
      %v1730 = vld [vmem:[%s1416 + $0x6c] sm:$0xf]
      %v1731 = vld [vmem:[%s1416 + $0x70] sm:$0xf]
      %v1732 = vld [vmem:[%s1416 + $0x74] sm:$0x1]
      %v1733 = vld [vmem:[%s1416 + $0x78] sm:$0xf]
      %v1734 = vld [vmem:[%s1416 + $0x7c] sm:$0xf]
      %v1735 = vld [vmem:[%s1416 + $0x80] sm:$0x1]
      %v1736 = vld [vmem:[%s1416 + $0x84] sm:$0xf]
      %v1737 = vld [vmem:[%s1416 + $0x88] sm:$0xf]
      %v1738 = vld [vmem:[%s1416 + $0x8c] sm:$0x1]
      %v1739 = vld [vmem:[%s1416 + $0x90] sm:$0xf]
      %v1740 = vld [vmem:[%s1416 + $0x94] sm:$0xf]
      %v1741 = vld [vmem:[%s1416 + $0x98] sm:$0x1]
      %v1742 = vld [vmem:[%s1416 + $0x9c] sm:$0xf]
      %v1743 = vld [vmem:[%s1416 + $0xa0] sm:$0xf]
      %v1744 = vld [vmem:[%s1416 + $0xa4] sm:$0x1]
      %v1745 = vld [vmem:[%s1416 + $0xa8] sm:$0xf]
      %v1746 = vld [vmem:[%s1416 + $0xac] sm:$0xf]
      %v1747 = vld [vmem:[%s1416 + $0xb0] sm:$0x1]
      %v1748 = vld [vmem:[%s1416 + $0xb4] sm:$0xf]
      %v1749 = vld [vmem:[%s1416 + $0xb8] sm:$0xf]
      %v1750 = vld [vmem:[%s1416 + $0xbc] sm:$0x1]
      %v1752 = vshrl.u32 %v1703, 16
      %v1754 = vrot.slane %v1752, 4
      %v1755 = vshll.u32 %v1703, 16
      %v1757 = vrot.slane %v1755, 5
      %v1758 = vor.u32 %v1754, %v1757
      %v1759 = vrot.slane %v1758, 4
      %v1761 = vshll.u32 %v1704, 16
      %v1763 = vrot.slane %v1761, 5
      %v1764 = vsel %vm234, %v1759, %v1763
      %v1765 = vshrl.u32 %v1704, 16
      %v1767 = vrot.slane %v1765, 4
      %v1768 = vor.u32 %v1767, %v1763
      %v1769 = vrot.slane %v1768, 4
      %v1771 = vshll.u32 %v1705, 16
      %v1773 = vrot.slane %v1771, 5
      %v1774 = vsel %vm234, %v1769, %v1773
      %v1776 = vshrl.u32 %v1706, 16
      %v1778 = vrot.slane %v1776, 4
      %v1779 = vshll.u32 %v1706, 16
      %v1781 = vrot.slane %v1779, 5
      %v1782 = vor.u32 %v1778, %v1781
      %v1783 = vrot.slane %v1782, 4
      %v1785 = vshll.u32 %v1707, 16
      %v1787 = vrot.slane %v1785, 5
      %v1788 = vsel %vm234, %v1783, %v1787
      %v1789 = vshrl.u32 %v1707, 16
      %v1791 = vrot.slane %v1789, 4
      %v1792 = vor.u32 %v1791, %v1787
      %v1793 = vrot.slane %v1792, 4
      %v1795 = vshll.u32 %v1708, 16
      %v1797 = vrot.slane %v1795, 5
      %v1798 = vsel %vm234, %v1793, %v1797
      %v1800 = vshrl.u32 %v1709, 16
      %v1802 = vrot.slane %v1800, 4
      %v1803 = vshll.u32 %v1709, 16
      %v1805 = vrot.slane %v1803, 5
      %v1806 = vor.u32 %v1802, %v1805
      %v1807 = vrot.slane %v1806, 4
      %v1809 = vshll.u32 %v1710, 16
      %v1811 = vrot.slane %v1809, 5
      %v1812 = vsel %vm234, %v1807, %v1811
      %v1813 = vshrl.u32 %v1710, 16
      %v1815 = vrot.slane %v1813, 4
      %v1816 = vor.u32 %v1815, %v1811
      %v1817 = vrot.slane %v1816, 4
      %v1819 = vshll.u32 %v1711, 16
      %v1821 = vrot.slane %v1819, 5
      %v1822 = vsel %vm234, %v1817, %v1821
      %v1824 = vshrl.u32 %v1712, 16
      %v1826 = vrot.slane %v1824, 4
      %v1827 = vshll.u32 %v1712, 16
      %v1829 = vrot.slane %v1827, 5
      %v1830 = vor.u32 %v1826, %v1829
      %v1831 = vrot.slane %v1830, 4
      %v1833 = vshll.u32 %v1713, 16
      %v1835 = vrot.slane %v1833, 5
      %v1836 = vsel %vm234, %v1831, %v1835
      %v1837 = vshrl.u32 %v1713, 16
      %v1839 = vrot.slane %v1837, 4
      %v1840 = vor.u32 %v1839, %v1835
      %v1841 = vrot.slane %v1840, 4
      %v1843 = vshll.u32 %v1714, 16
      %v1845 = vrot.slane %v1843, 5
      %v1846 = vsel %vm234, %v1841, %v1845
      %v1848 = vshrl.u32 %v1715, 16
      %v1850 = vrot.slane %v1848, 4
      %v1851 = vshll.u32 %v1715, 16
      %v1853 = vrot.slane %v1851, 5
      %v1854 = vor.u32 %v1850, %v1853
      %v1855 = vrot.slane %v1854, 4
      %v1857 = vshll.u32 %v1716, 16
      %v1859 = vrot.slane %v1857, 5
      %v1860 = vsel %vm234, %v1855, %v1859
      %v1861 = vshrl.u32 %v1716, 16
      %v1863 = vrot.slane %v1861, 4
      %v1864 = vor.u32 %v1863, %v1859
      %v1865 = vrot.slane %v1864, 4
      %v1867 = vshll.u32 %v1717, 16
      %v1869 = vrot.slane %v1867, 5
      %v1870 = vsel %vm234, %v1865, %v1869
      %v1872 = vshrl.u32 %v1718, 16
      %v1874 = vrot.slane %v1872, 4
      %v1875 = vshll.u32 %v1718, 16
      %v1877 = vrot.slane %v1875, 5
      %v1878 = vor.u32 %v1874, %v1877
      %v1879 = vrot.slane %v1878, 4
      %v1881 = vshll.u32 %v1719, 16
      %v1883 = vrot.slane %v1881, 5
      %v1884 = vsel %vm234, %v1879, %v1883
      %v1885 = vshrl.u32 %v1719, 16
      %v1887 = vrot.slane %v1885, 4
      %v1888 = vor.u32 %v1887, %v1883
      %v1889 = vrot.slane %v1888, 4
      %v1891 = vshll.u32 %v1720, 16
      %v1893 = vrot.slane %v1891, 5
      %v1894 = vsel %vm234, %v1889, %v1893
      %v1896 = vshrl.u32 %v1721, 16
      %v1898 = vrot.slane %v1896, 4
      %v1899 = vshll.u32 %v1721, 16
      %v1901 = vrot.slane %v1899, 5
      %v1902 = vor.u32 %v1898, %v1901
      %v1903 = vrot.slane %v1902, 4
      %v1905 = vshll.u32 %v1722, 16
      %v1907 = vrot.slane %v1905, 5
      %v1908 = vsel %vm234, %v1903, %v1907
      %v1909 = vshrl.u32 %v1722, 16
      %v1911 = vrot.slane %v1909, 4
      %v1912 = vor.u32 %v1911, %v1907
      %v1913 = vrot.slane %v1912, 4
      %v1915 = vshll.u32 %v1723, 16
      %v1917 = vrot.slane %v1915, 5
      %v1918 = vsel %vm234, %v1913, %v1917
      %v1920 = vshrl.u32 %v1724, 16
      %v1922 = vrot.slane %v1920, 4
      %v1923 = vshll.u32 %v1724, 16
      %v1925 = vrot.slane %v1923, 5
      %v1926 = vor.u32 %v1922, %v1925
      %v1927 = vrot.slane %v1926, 4
      %v1929 = vshll.u32 %v1725, 16
      %v1931 = vrot.slane %v1929, 5
      %v1932 = vsel %vm234, %v1927, %v1931
      %v1933 = vshrl.u32 %v1725, 16
      %v1935 = vrot.slane %v1933, 4
      %v1936 = vor.u32 %v1935, %v1931
      %v1937 = vrot.slane %v1936, 4
      %v1939 = vshll.u32 %v1726, 16
      %v1941 = vrot.slane %v1939, 5
      %v1942 = vsel %vm234, %v1937, %v1941
      %v1944 = vshrl.u32 %v1727, 16
      %v1946 = vrot.slane %v1944, 4
      %v1947 = vshll.u32 %v1727, 16
      %v1949 = vrot.slane %v1947, 5
      %v1950 = vor.u32 %v1946, %v1949
      %v1951 = vrot.slane %v1950, 4
      %v1953 = vshll.u32 %v1728, 16
      %v1955 = vrot.slane %v1953, 5
      %v1956 = vsel %vm234, %v1951, %v1955
      %v1957 = vshrl.u32 %v1728, 16
      %v1959 = vrot.slane %v1957, 4
      %v1960 = vor.u32 %v1959, %v1955
      %v1961 = vrot.slane %v1960, 4
      %v1963 = vshll.u32 %v1729, 16
      %v1965 = vrot.slane %v1963, 5
      %v1966 = vsel %vm234, %v1961, %v1965
      %v1968 = vshrl.u32 %v1730, 16
      %v1970 = vrot.slane %v1968, 4
      %v1971 = vshll.u32 %v1730, 16
      %v1973 = vrot.slane %v1971, 5
      %v1974 = vor.u32 %v1970, %v1973
      %v1975 = vrot.slane %v1974, 4
      %v1977 = vshll.u32 %v1731, 16
      %v1979 = vrot.slane %v1977, 5
      %v1980 = vsel %vm234, %v1975, %v1979
      %v1981 = vshrl.u32 %v1731, 16
      %v1983 = vrot.slane %v1981, 4
      %v1984 = vor.u32 %v1983, %v1979
      %v1985 = vrot.slane %v1984, 4
      %v1987 = vshll.u32 %v1732, 16
      %v1989 = vrot.slane %v1987, 5
      %v1990 = vsel %vm234, %v1985, %v1989
      %v1992 = vshrl.u32 %v1733, 16
      %v1994 = vrot.slane %v1992, 4
      %v1995 = vshll.u32 %v1733, 16
      %v1997 = vrot.slane %v1995, 5
      %v1998 = vor.u32 %v1994, %v1997
      %v1999 = vrot.slane %v1998, 4
      %v2001 = vshll.u32 %v1734, 16
      %v2003 = vrot.slane %v2001, 5
      %v2004 = vsel %vm234, %v1999, %v2003
      %v2005 = vshrl.u32 %v1734, 16
      %v2007 = vrot.slane %v2005, 4
      %v2008 = vor.u32 %v2007, %v2003
      %v2009 = vrot.slane %v2008, 4
      %v2011 = vshll.u32 %v1735, 16
      %v2013 = vrot.slane %v2011, 5
      %v2014 = vsel %vm234, %v2009, %v2013
      %v2016 = vshrl.u32 %v1736, 16
      %v2018 = vrot.slane %v2016, 4
      %v2019 = vshll.u32 %v1736, 16
      %v2021 = vrot.slane %v2019, 5
      %v2022 = vor.u32 %v2018, %v2021
      %v2023 = vrot.slane %v2022, 4
      %v2025 = vshll.u32 %v1737, 16
      %v2027 = vrot.slane %v2025, 5
      %v2028 = vsel %vm234, %v2023, %v2027
      %v2029 = vshrl.u32 %v1737, 16
      %v2031 = vrot.slane %v2029, 4
      %v2032 = vor.u32 %v2031, %v2027
      %v2033 = vrot.slane %v2032, 4
      %v2035 = vshll.u32 %v1738, 16
      %v2037 = vrot.slane %v2035, 5
      %v2038 = vsel %vm234, %v2033, %v2037
      %v2040 = vshrl.u32 %v1739, 16
      %v2042 = vrot.slane %v2040, 4
      %v2043 = vshll.u32 %v1739, 16
      %v2045 = vrot.slane %v2043, 5
      %v2046 = vor.u32 %v2042, %v2045
      %v2047 = vrot.slane %v2046, 4
      %v2049 = vshll.u32 %v1740, 16
      %v2051 = vrot.slane %v2049, 5
      %v2052 = vsel %vm234, %v2047, %v2051
      %v2053 = vshrl.u32 %v1740, 16
      %v2055 = vrot.slane %v2053, 4
      %v2056 = vor.u32 %v2055, %v2051
      %v2057 = vrot.slane %v2056, 4
      %v2059 = vshll.u32 %v1741, 16
      %v2061 = vrot.slane %v2059, 5
      %v2062 = vsel %vm234, %v2057, %v2061
      %v2064 = vshrl.u32 %v1742, 16
      %v2066 = vrot.slane %v2064, 4
      %v2067 = vshll.u32 %v1742, 16
      %v2069 = vrot.slane %v2067, 5
      %v2070 = vor.u32 %v2066, %v2069
      %v2071 = vrot.slane %v2070, 4
      %v2073 = vshll.u32 %v1743, 16
      %v2075 = vrot.slane %v2073, 5
      %v2076 = vsel %vm234, %v2071, %v2075
      %v2077 = vshrl.u32 %v1743, 16
      %v2079 = vrot.slane %v2077, 4
      %v2080 = vor.u32 %v2079, %v2075
      %v2081 = vrot.slane %v2080, 4
      %v2083 = vshll.u32 %v1744, 16
      %v2085 = vrot.slane %v2083, 5
      %v2086 = vsel %vm234, %v2081, %v2085
      %v2088 = vshrl.u32 %v1745, 16
      %v2090 = vrot.slane %v2088, 4
      %v2091 = vshll.u32 %v1745, 16
      %v2093 = vrot.slane %v2091, 5
      %v2094 = vor.u32 %v2090, %v2093
      %v2095 = vrot.slane %v2094, 4
      %v2097 = vshll.u32 %v1746, 16
      %v2099 = vrot.slane %v2097, 5
      %v2100 = vsel %vm234, %v2095, %v2099
      %v2101 = vshrl.u32 %v1746, 16
      %v2103 = vrot.slane %v2101, 4
      %v2104 = vor.u32 %v2103, %v2099
      %v2105 = vrot.slane %v2104, 4
      %v2107 = vshll.u32 %v1747, 16
      %v2109 = vrot.slane %v2107, 5
      %v2110 = vsel %vm234, %v2105, %v2109
      %v2112 = vshrl.u32 %v1748, 16
      %v2114 = vrot.slane %v2112, 4
      %v2115 = vshll.u32 %v1748, 16
      %v2117 = vrot.slane %v2115, 5
      %v2118 = vor.u32 %v2114, %v2117
      %v2119 = vrot.slane %v2118, 4
      %v2121 = vshll.u32 %v1749, 16
      %v2123 = vrot.slane %v2121, 5
      %v2124 = vsel %vm234, %v2119, %v2123
      %v2125 = vshrl.u32 %v1749, 16
      %v2127 = vrot.slane %v2125, 4
      %v2128 = vor.u32 %v2127, %v2123
      %v2129 = vrot.slane %v2128, 4
      %v2131 = vshll.u32 %v1750, 16
      %v2133 = vrot.slane %v2131, 5
      %v2134 = vsel %vm234, %v2129, %v2133
      %s2135 = scalar_lea.vmem %s1, 16
      %v2136 = vld [vmem:[%s2135] sm:$0xf]
      %v2137 = vunpack.c.l.b16 %v1764
      %v2138 = vunpack.c.l.b16 %v1774
      %v2139 = vunpack.c.l.b16 %v1788
      %v2140 = vunpack.c.l.b16 %v1798
      %v2141 = vunpack.c.l.b16 %v1812
      %v2142 = vunpack.c.l.b16 %v1822
      %v2143 = vunpack.c.l.b16 %v1836
      %v2144 = vunpack.c.l.b16 %v1846
      %v2145 = vunpack.c.l.b16 %v1860
      %v2146 = vunpack.c.l.b16 %v1870
      %v2147 = vunpack.c.l.b16 %v1884
      %v2148 = vunpack.c.l.b16 %v1894
      %v2149 = vunpack.c.l.b16 %v1908
      %v2150 = vunpack.c.l.b16 %v1918
      %v2151 = vunpack.c.l.b16 %v1932
      %v2152 = vunpack.c.l.b16 %v1942
      %v2153 = vunpack.c.l.b16 %v1956
      %v2154 = vunpack.c.l.b16 %v1966
      %v2155 = vunpack.c.l.b16 %v1980
      %v2156 = vunpack.c.l.b16 %v1990
      %v2157 = vunpack.c.l.b16 %v2004
      %v2158 = vunpack.c.l.b16 %v2014
      %v2159 = vunpack.c.l.b16 %v2028
      %v2160 = vunpack.c.l.b16 %v2038
      %v2161 = vunpack.c.l.b16 %v2052
      %v2162 = vunpack.c.l.b16 %v2062
      %v2163 = vunpack.c.l.b16 %v2076
      %v2164 = vunpack.c.l.b16 %v2086
      %v2165 = vunpack.c.l.b16 %v2100
      %v2166 = vunpack.c.l.b16 %v2110
      %v2167 = vunpack.c.l.b16 %v2124
      %v2168 = vunpack.c.l.b16 %v2134
      %v2169 = vpack.c.b16 %v2138, %v2137
      %v2170 = vpack.c.b16 %v2140, %v2139
      %v2171 = vpack.c.b16 %v2142, %v2141
      %v2172 = vpack.c.b16 %v2144, %v2143
      %v2173 = vpack.c.b16 %v2146, %v2145
      %v2174 = vpack.c.b16 %v2148, %v2147
      %v2175 = vpack.c.b16 %v2150, %v2149
      %v2176 = vpack.c.b16 %v2152, %v2151
      %v2177 = vpack.c.b16 %v2154, %v2153
      %v2178 = vpack.c.b16 %v2156, %v2155
      %v2179 = vpack.c.b16 %v2158, %v2157
      %v2180 = vpack.c.b16 %v2160, %v2159
      %v2181 = vpack.c.b16 %v2162, %v2161
      %v2182 = vpack.c.b16 %v2164, %v2163
      %v2183 = vpack.c.b16 %v2166, %v2165
      %v2184 = vpack.c.b16 %v2168, %v2167
      %v2186 = vsel %vm669, %v2169, 0
      %v2189 = vsel %vm669, %v2170, 0
      %v2192 = vsel %vm669, %v2171, 0
      %v2195 = vsel %vm669, %v2172, 0
      %v2198 = vsel %vm669, %v2173, 0
      %v2201 = vsel %vm669, %v2174, 0
      %v2204 = vsel %vm669, %v2175, 0
      %v2207 = vsel %vm669, %v2176, 0
      %v2210 = vsel %vm669, %v2177, 0
      %v2213 = vsel %vm669, %v2178, 0
      %v2216 = vsel %vm669, %v2179, 0
      %v2219 = vsel %vm669, %v2180, 0
      %v2222 = vsel %vm669, %v2181, 0
      %v2225 = vsel %vm669, %v2182, 0
      %v2228 = vsel %vm669, %v2183, 0
      %v2231 = vsel %vm669, %v2184, 0
      %v2234 = vsel %vm718, %v2136, 0
      %2236 = vmatpush.bf16.msra.mxu0 0
      %2237 = vmatpush.bf16.msra.mxu0 0
      %2238 = vmatpush.bf16.msra.mxu0 0
      %2239 = vmatpush.bf16.msra.mxu0 0
      %2240 = vmatpush.bf16.msra.mxu0 0
      %2241 = vmatpush.bf16.msra.mxu0 0
      %2242 = vmatpush.bf16.msra.mxu0 0
      %2243 = vmatpush.bf16.msra.mxu0 %v2234
      %2244 = vmatmul.bf16.gmra.mxu0 %v2186
      %v2245 = vpop.f32.mrf.mxu0
      %v2246 = vadd.f32 0.0, %v2245
      %v2247 = vpop.f32.mrf.mxu0
      %v2248 = vadd.f32 0.0, %v2247
      %2249 = vmatmul.bf16.gmra.mxu0 %v2189
      %v2250 = vpop.f32.mrf.mxu0
      %v2251 = vadd.f32 0.0, %v2250
      %v2252 = vpop.f32.mrf.mxu0
      %v2253 = vadd.f32 0.0, %v2252
      %2254 = vmatmul.bf16.gmra.mxu0 %v2192
      %v2255 = vpop.f32.mrf.mxu0
      %v2256 = vadd.f32 0.0, %v2255
      %v2257 = vpop.f32.mrf.mxu0
      %v2258 = vadd.f32 0.0, %v2257
      %2259 = vmatmul.bf16.gmra.mxu0 %v2195
      %v2260 = vpop.f32.mrf.mxu0
      %v2261 = vadd.f32 0.0, %v2260
      %v2262 = vpop.f32.mrf.mxu0
      %v2263 = vadd.f32 0.0, %v2262
      %2264 = vmatmul.bf16.gmra.mxu0 %v2198
      %v2265 = vpop.f32.mrf.mxu0
      %v2266 = vadd.f32 0.0, %v2265
      %v2267 = vpop.f32.mrf.mxu0
      %v2268 = vadd.f32 0.0, %v2267
      %2269 = vmatmul.bf16.gmra.mxu0 %v2201
      %v2270 = vpop.f32.mrf.mxu0
      %v2271 = vadd.f32 0.0, %v2270
      %v2272 = vpop.f32.mrf.mxu0
      %v2273 = vadd.f32 0.0, %v2272
      %2274 = vmatmul.bf16.gmra.mxu0 %v2204
      %v2275 = vpop.f32.mrf.mxu0
      %v2276 = vadd.f32 0.0, %v2275
      %v2277 = vpop.f32.mrf.mxu0
      %v2278 = vadd.f32 0.0, %v2277
      %2279 = vmatmul.bf16.gmra.mxu0 %v2207
      %v2280 = vpop.f32.mrf.mxu0
      %v2281 = vadd.f32 0.0, %v2280
      %v2282 = vpop.f32.mrf.mxu0
      %v2283 = vadd.f32 0.0, %v2282
      %2284 = vmatmul.bf16.gmra.mxu0 %v2210
      %v2285 = vpop.f32.mrf.mxu0
      %v2286 = vadd.f32 0.0, %v2285
      %v2287 = vpop.f32.mrf.mxu0
      %v2288 = vadd.f32 0.0, %v2287
      %2289 = vmatmul.bf16.gmra.mxu0 %v2213
      %v2290 = vpop.f32.mrf.mxu0
      %v2291 = vadd.f32 0.0, %v2290
      %v2292 = vpop.f32.mrf.mxu0
      %v2293 = vadd.f32 0.0, %v2292
      %2294 = vmatmul.bf16.gmra.mxu0 %v2216
      %v2295 = vpop.f32.mrf.mxu0
      %v2296 = vadd.f32 0.0, %v2295
      %v2297 = vpop.f32.mrf.mxu0
      %v2298 = vadd.f32 0.0, %v2297
      %2299 = vmatmul.bf16.gmra.mxu0 %v2219
      %v2300 = vpop.f32.mrf.mxu0
      %v2301 = vadd.f32 0.0, %v2300
      %v2302 = vpop.f32.mrf.mxu0
      %v2303 = vadd.f32 0.0, %v2302
      %2304 = vmatmul.bf16.gmra.mxu0 %v2222
      %v2305 = vpop.f32.mrf.mxu0
      %v2306 = vadd.f32 0.0, %v2305
      %v2307 = vpop.f32.mrf.mxu0
      %v2308 = vadd.f32 0.0, %v2307
      %2309 = vmatmul.bf16.gmra.mxu0 %v2225
      %v2310 = vpop.f32.mrf.mxu0
      %v2311 = vadd.f32 0.0, %v2310
      %v2312 = vpop.f32.mrf.mxu0
      %v2313 = vadd.f32 0.0, %v2312
      %2314 = vmatmul.bf16.gmra.mxu0 %v2228
      %v2315 = vpop.f32.mrf.mxu0
      %v2316 = vadd.f32 0.0, %v2315
      %v2317 = vpop.f32.mrf.mxu0
      %v2318 = vadd.f32 0.0, %v2317
      %2319 = vmatmul.bf16.gmra.mxu0 %v2231
      %v2320 = vpop.f32.mrf.mxu0
      %v2321 = vadd.f32 0.0, %v2320
      %v2322 = vpop.f32.mrf.mxu0
      %v2323 = vadd.f32 0.0, %v2322
      %2324 = vdwg.mxu0
      %v2325 = vadd.f32 %v1671, %v2246
      %v2326 = vadd.f32 %v1672, %v2248
      %v2327 = vadd.f32 %v1673, %v2251
      %v2328 = vadd.f32 %v1674, %v2253
      %v2329 = vadd.f32 %v1675, %v2256
      %v2330 = vadd.f32 %v1676, %v2258
      %v2331 = vadd.f32 %v1677, %v2261
      %v2332 = vadd.f32 %v1678, %v2263
      %v2333 = vadd.f32 %v1679, %v2266
      %v2334 = vadd.f32 %v1680, %v2268
      %v2335 = vadd.f32 %v1681, %v2271
      %v2336 = vadd.f32 %v1682, %v2273
      %v2337 = vadd.f32 %v1683, %v2276
      %v2338 = vadd.f32 %v1684, %v2278
      %v2339 = vadd.f32 %v1685, %v2281
      %v2340 = vadd.f32 %v1686, %v2283
      %v2341 = vadd.f32 %v1687, %v2286
      %v2342 = vadd.f32 %v1688, %v2288
      %v2343 = vadd.f32 %v1689, %v2291
      %v2344 = vadd.f32 %v1690, %v2293
      %v2345 = vadd.f32 %v1691, %v2296
      %v2346 = vadd.f32 %v1692, %v2298
      %v2347 = vadd.f32 %v1693, %v2301
      %v2348 = vadd.f32 %v1694, %v2303
      %v2349 = vadd.f32 %v1695, %v2306
      %v2350 = vadd.f32 %v1696, %v2308
      %v2351 = vadd.f32 %v1697, %v2311
      %v2352 = vadd.f32 %v1698, %v2313
      %v2353 = vadd.f32 %v1699, %v2316
      %v2354 = vadd.f32 %v1700, %v2318
      %v2355 = vadd.f32 %v1701, %v2321
      %v2356 = vadd.f32 %v1702, %v2323
      %v2357 = vld [vmem:[%s1416] sm:$0xe]
      %v2358 = vld [vmem:[%s1416 + $0xc] sm:$0xe]
      %v2359 = vld [vmem:[%s1416 + $0x18] sm:$0xe]
      %v2360 = vld [vmem:[%s1416 + $0x24] sm:$0xe]
      %v2361 = vld [vmem:[%s1416 + $0x30] sm:$0xe]
      %v2362 = vld [vmem:[%s1416 + $0x3c] sm:$0xe]
      %v2363 = vld [vmem:[%s1416 + $0x48] sm:$0xe]
      %v2364 = vld [vmem:[%s1416 + $0x54] sm:$0xe]
      %v2365 = vld [vmem:[%s1416 + $0x60] sm:$0xe]
      %v2366 = vld [vmem:[%s1416 + $0x6c] sm:$0xe]
      %v2367 = vld [vmem:[%s1416 + $0x78] sm:$0xe]
      %v2368 = vld [vmem:[%s1416 + $0x84] sm:$0xe]
      %v2369 = vld [vmem:[%s1416 + $0x90] sm:$0xe]
      %v2370 = vld [vmem:[%s1416 + $0x9c] sm:$0xe]
      %v2371 = vld [vmem:[%s1416 + $0xa8] sm:$0xe]
      %v2372 = vld [vmem:[%s1416 + $0xb4] sm:$0xe]
      %v2421 = vrot.slane %v2357, 5
      %v2422 = vrot.slane %v2421, 4
      %v2423 = vrot.slane %v1704, 5
      %v2424 = vsel %vm1081, %v2422, %v2423
      %v2425 = vrot.slane %v2423, 4
      %v2426 = vrot.slane %v1705, 5
      %v2427 = vsel %vm1081, %v2425, %v2426
      %v2428 = vrot.slane %v2358, 5
      %v2429 = vrot.slane %v2428, 4
      %v2430 = vrot.slane %v1707, 5
      %v2431 = vsel %vm1081, %v2429, %v2430
      %v2432 = vrot.slane %v2430, 4
      %v2433 = vrot.slane %v1708, 5
      %v2434 = vsel %vm1081, %v2432, %v2433
      %v2435 = vrot.slane %v2359, 5
      %v2436 = vrot.slane %v2435, 4
      %v2437 = vrot.slane %v1710, 5
      %v2438 = vsel %vm1081, %v2436, %v2437
      %v2439 = vrot.slane %v2437, 4
      %v2440 = vrot.slane %v1711, 5
      %v2441 = vsel %vm1081, %v2439, %v2440
      %v2442 = vrot.slane %v2360, 5
      %v2443 = vrot.slane %v2442, 4
      %v2444 = vrot.slane %v1713, 5
      %v2445 = vsel %vm1081, %v2443, %v2444
      %v2446 = vrot.slane %v2444, 4
      %v2447 = vrot.slane %v1714, 5
      %v2448 = vsel %vm1081, %v2446, %v2447
      %v2449 = vrot.slane %v2361, 5
      %v2450 = vrot.slane %v2449, 4
      %v2451 = vrot.slane %v1716, 5
      %v2452 = vsel %vm1081, %v2450, %v2451
      %v2453 = vrot.slane %v2451, 4
      %v2454 = vrot.slane %v1717, 5
      %v2455 = vsel %vm1081, %v2453, %v2454
      %v2456 = vrot.slane %v2362, 5
      %v2457 = vrot.slane %v2456, 4
      %v2458 = vrot.slane %v1719, 5
      %v2459 = vsel %vm1081, %v2457, %v2458
      %v2460 = vrot.slane %v2458, 4
      %v2461 = vrot.slane %v1720, 5
      %v2462 = vsel %vm1081, %v2460, %v2461
      %v2463 = vrot.slane %v2363, 5
      %v2464 = vrot.slane %v2463, 4
      %v2465 = vrot.slane %v1722, 5
      %v2466 = vsel %vm1081, %v2464, %v2465
      %v2467 = vrot.slane %v2465, 4
      %v2468 = vrot.slane %v1723, 5
      %v2469 = vsel %vm1081, %v2467, %v2468
      %v2470 = vrot.slane %v2364, 5
      %v2471 = vrot.slane %v2470, 4
      %v2472 = vrot.slane %v1725, 5
      %v2473 = vsel %vm1081, %v2471, %v2472
      %v2474 = vrot.slane %v2472, 4
      %v2475 = vrot.slane %v1726, 5
      %v2476 = vsel %vm1081, %v2474, %v2475
      %v2477 = vrot.slane %v2365, 5
      %v2478 = vrot.slane %v2477, 4
      %v2479 = vrot.slane %v1728, 5
      %v2480 = vsel %vm1081, %v2478, %v2479
      %v2481 = vrot.slane %v2479, 4
      %v2482 = vrot.slane %v1729, 5
      %v2483 = vsel %vm1081, %v2481, %v2482
      %v2484 = vrot.slane %v2366, 5
      %v2485 = vrot.slane %v2484, 4
      %v2486 = vrot.slane %v1731, 5
      %v2487 = vsel %vm1081, %v2485, %v2486
      %v2488 = vrot.slane %v2486, 4
      %v2489 = vrot.slane %v1732, 5
      %v2490 = vsel %vm1081, %v2488, %v2489
      %v2491 = vrot.slane %v2367, 5
      %v2492 = vrot.slane %v2491, 4
      %v2493 = vrot.slane %v1734, 5
      %v2494 = vsel %vm1081, %v2492, %v2493
      %v2495 = vrot.slane %v2493, 4
      %v2496 = vrot.slane %v1735, 5
      %v2497 = vsel %vm1081, %v2495, %v2496
      %v2498 = vrot.slane %v2368, 5
      %v2499 = vrot.slane %v2498, 4
      %v2500 = vrot.slane %v1737, 5
      %v2501 = vsel %vm1081, %v2499, %v2500
      %v2502 = vrot.slane %v2500, 4
      %v2503 = vrot.slane %v1738, 5
      %v2504 = vsel %vm1081, %v2502, %v2503
      %v2505 = vrot.slane %v2369, 5
      %v2506 = vrot.slane %v2505, 4
      %v2507 = vrot.slane %v1740, 5
      %v2508 = vsel %vm1081, %v2506, %v2507
      %v2509 = vrot.slane %v2507, 4
      %v2510 = vrot.slane %v1741, 5
      %v2511 = vsel %vm1081, %v2509, %v2510
      %v2512 = vrot.slane %v2370, 5
      %v2513 = vrot.slane %v2512, 4
      %v2514 = vrot.slane %v1743, 5
      %v2515 = vsel %vm1081, %v2513, %v2514
      %v2516 = vrot.slane %v2514, 4
      %v2517 = vrot.slane %v1744, 5
      %v2518 = vsel %vm1081, %v2516, %v2517
      %v2519 = vrot.slane %v2371, 5
      %v2520 = vrot.slane %v2519, 4
      %v2521 = vrot.slane %v1746, 5
      %v2522 = vsel %vm1081, %v2520, %v2521
      %v2523 = vrot.slane %v2521, 4
      %v2524 = vrot.slane %v1747, 5
      %v2525 = vsel %vm1081, %v2523, %v2524
      %v2526 = vrot.slane %v2372, 5
      %v2527 = vrot.slane %v2526, 4
      %v2528 = vrot.slane %v1749, 5
      %v2529 = vsel %vm1081, %v2527, %v2528
      %v2530 = vrot.slane %v2528, 4
      %v2531 = vrot.slane %v1750, 5
      %v2532 = vsel %vm1081, %v2530, %v2531
      %s2533 = scalar_lea.vmem %s1, 20
      %v2534 = vld [vmem:[%s2533] sm:$0xf]
      %v2535 = vunpack.c.l.b16 %v2424
      %v2536 = vunpack.c.l.b16 %v2427
      %v2537 = vunpack.c.l.b16 %v2431
      %v2538 = vunpack.c.l.b16 %v2434
      %v2539 = vunpack.c.l.b16 %v2438
      %v2540 = vunpack.c.l.b16 %v2441
      %v2541 = vunpack.c.l.b16 %v2445
      %v2542 = vunpack.c.l.b16 %v2448
      %v2543 = vunpack.c.l.b16 %v2452
      %v2544 = vunpack.c.l.b16 %v2455
      %v2545 = vunpack.c.l.b16 %v2459
      %v2546 = vunpack.c.l.b16 %v2462
      %v2547 = vunpack.c.l.b16 %v2466
      %v2548 = vunpack.c.l.b16 %v2469
      %v2549 = vunpack.c.l.b16 %v2473
      %v2550 = vunpack.c.l.b16 %v2476
      %v2551 = vunpack.c.l.b16 %v2480
      %v2552 = vunpack.c.l.b16 %v2483
      %v2553 = vunpack.c.l.b16 %v2487
      %v2554 = vunpack.c.l.b16 %v2490
      %v2555 = vunpack.c.l.b16 %v2494
      %v2556 = vunpack.c.l.b16 %v2497
      %v2557 = vunpack.c.l.b16 %v2501
      %v2558 = vunpack.c.l.b16 %v2504
      %v2559 = vunpack.c.l.b16 %v2508
      %v2560 = vunpack.c.l.b16 %v2511
      %v2561 = vunpack.c.l.b16 %v2515
      %v2562 = vunpack.c.l.b16 %v2518
      %v2563 = vunpack.c.l.b16 %v2522
      %v2564 = vunpack.c.l.b16 %v2525
      %v2565 = vunpack.c.l.b16 %v2529
      %v2566 = vunpack.c.l.b16 %v2532
      %v2567 = vpack.c.b16 %v2536, %v2535
      %v2568 = vpack.c.b16 %v2538, %v2537
      %v2569 = vpack.c.b16 %v2540, %v2539
      %v2570 = vpack.c.b16 %v2542, %v2541
      %v2571 = vpack.c.b16 %v2544, %v2543
      %v2572 = vpack.c.b16 %v2546, %v2545
      %v2573 = vpack.c.b16 %v2548, %v2547
      %v2574 = vpack.c.b16 %v2550, %v2549
      %v2575 = vpack.c.b16 %v2552, %v2551
      %v2576 = vpack.c.b16 %v2554, %v2553
      %v2577 = vpack.c.b16 %v2556, %v2555
      %v2578 = vpack.c.b16 %v2558, %v2557
      %v2579 = vpack.c.b16 %v2560, %v2559
      %v2580 = vpack.c.b16 %v2562, %v2561
      %v2581 = vpack.c.b16 %v2564, %v2563
      %v2582 = vpack.c.b16 %v2566, %v2565
      %v2584 = vsel %vm669, %v2567, 0
      %v2587 = vsel %vm669, %v2568, 0
      %v2590 = vsel %vm669, %v2569, 0
      %v2593 = vsel %vm669, %v2570, 0
      %v2596 = vsel %vm669, %v2571, 0
      %v2599 = vsel %vm669, %v2572, 0
      %v2602 = vsel %vm669, %v2573, 0
      %v2605 = vsel %vm669, %v2574, 0
      %v2608 = vsel %vm669, %v2575, 0
      %v2611 = vsel %vm669, %v2576, 0
      %v2614 = vsel %vm669, %v2577, 0
      %v2617 = vsel %vm669, %v2578, 0
      %v2620 = vsel %vm669, %v2579, 0
      %v2623 = vsel %vm669, %v2580, 0
      %v2626 = vsel %vm669, %v2581, 0
      %v2629 = vsel %vm669, %v2582, 0
      %v2632 = vsel %vm718, %v2534, 0
      %2634 = vmatpush.bf16.msra.mxu0 0
      %2635 = vmatpush.bf16.msra.mxu0 0
      %2636 = vmatpush.bf16.msra.mxu0 0
      %2637 = vmatpush.bf16.msra.mxu0 0
      %2638 = vmatpush.bf16.msra.mxu0 0
      %2639 = vmatpush.bf16.msra.mxu0 0
      %2640 = vmatpush.bf16.msra.mxu0 0
      %2641 = vmatpush.bf16.msra.mxu0 %v2632
      %2642 = vmatmul.bf16.gmra.mxu0 %v2584
      %v2643 = vpop.f32.mrf.mxu0
      %v2644 = vadd.f32 0.0, %v2643
      %v2645 = vpop.f32.mrf.mxu0
      %v2646 = vadd.f32 0.0, %v2645
      %2647 = vmatmul.bf16.gmra.mxu0 %v2587
      %v2648 = vpop.f32.mrf.mxu0
      %v2649 = vadd.f32 0.0, %v2648
      %v2650 = vpop.f32.mrf.mxu0
      %v2651 = vadd.f32 0.0, %v2650
      %2652 = vmatmul.bf16.gmra.mxu0 %v2590
      %v2653 = vpop.f32.mrf.mxu0
      %v2654 = vadd.f32 0.0, %v2653
      %v2655 = vpop.f32.mrf.mxu0
      %v2656 = vadd.f32 0.0, %v2655
      %2657 = vmatmul.bf16.gmra.mxu0 %v2593
      %v2658 = vpop.f32.mrf.mxu0
      %v2659 = vadd.f32 0.0, %v2658
      %v2660 = vpop.f32.mrf.mxu0
      %v2661 = vadd.f32 0.0, %v2660
      %2662 = vmatmul.bf16.gmra.mxu0 %v2596
      %v2663 = vpop.f32.mrf.mxu0
      %v2664 = vadd.f32 0.0, %v2663
      %v2665 = vpop.f32.mrf.mxu0
      %v2666 = vadd.f32 0.0, %v2665
      %2667 = vmatmul.bf16.gmra.mxu0 %v2599
      %v2668 = vpop.f32.mrf.mxu0
      %v2669 = vadd.f32 0.0, %v2668
      %v2670 = vpop.f32.mrf.mxu0
      %v2671 = vadd.f32 0.0, %v2670
      %2672 = vmatmul.bf16.gmra.mxu0 %v2602
      %v2673 = vpop.f32.mrf.mxu0
      %v2674 = vadd.f32 0.0, %v2673
      %v2675 = vpop.f32.mrf.mxu0
      %v2676 = vadd.f32 0.0, %v2675
      %2677 = vmatmul.bf16.gmra.mxu0 %v2605
      %v2678 = vpop.f32.mrf.mxu0
      %v2679 = vadd.f32 0.0, %v2678
      %v2680 = vpop.f32.mrf.mxu0
      %v2681 = vadd.f32 0.0, %v2680
      %2682 = vmatmul.bf16.gmra.mxu0 %v2608
      %v2683 = vpop.f32.mrf.mxu0
      %v2684 = vadd.f32 0.0, %v2683
      %v2685 = vpop.f32.mrf.mxu0
      %v2686 = vadd.f32 0.0, %v2685
      %2687 = vmatmul.bf16.gmra.mxu0 %v2611
      %v2688 = vpop.f32.mrf.mxu0
      %v2689 = vadd.f32 0.0, %v2688
      %v2690 = vpop.f32.mrf.mxu0
      %v2691 = vadd.f32 0.0, %v2690
      %2692 = vmatmul.bf16.gmra.mxu0 %v2614
      %v2693 = vpop.f32.mrf.mxu0
      %v2694 = vadd.f32 0.0, %v2693
      %v2695 = vpop.f32.mrf.mxu0
      %v2696 = vadd.f32 0.0, %v2695
      %2697 = vmatmul.bf16.gmra.mxu0 %v2617
      %v2698 = vpop.f32.mrf.mxu0
      %v2699 = vadd.f32 0.0, %v2698
      %v2700 = vpop.f32.mrf.mxu0
      %v2701 = vadd.f32 0.0, %v2700
      %2702 = vmatmul.bf16.gmra.mxu0 %v2620
      %v2703 = vpop.f32.mrf.mxu0
      %v2704 = vadd.f32 0.0, %v2703
      %v2705 = vpop.f32.mrf.mxu0
      %v2706 = vadd.f32 0.0, %v2705
      %2707 = vmatmul.bf16.gmra.mxu0 %v2623
      %v2708 = vpop.f32.mrf.mxu0
      %v2709 = vadd.f32 0.0, %v2708
      %v2710 = vpop.f32.mrf.mxu0
      %v2711 = vadd.f32 0.0, %v2710
      %2712 = vmatmul.bf16.gmra.mxu0 %v2626
      %v2713 = vpop.f32.mrf.mxu0
      %v2714 = vadd.f32 0.0, %v2713
      %v2715 = vpop.f32.mrf.mxu0
      %v2716 = vadd.f32 0.0, %v2715
      %2717 = vmatmul.bf16.gmra.mxu0 %v2629
      %v2718 = vpop.f32.mrf.mxu0
      %v2719 = vadd.f32 0.0, %v2718
      %v2720 = vpop.f32.mrf.mxu0
      %v2721 = vadd.f32 0.0, %v2720
      %2722 = vdwg.mxu0
      %v2723 = vadd.f32 %v2325, %v2644
      %v2724 = vadd.f32 %v2326, %v2646
      %v2725 = vadd.f32 %v2327, %v2649
      %v2726 = vadd.f32 %v2328, %v2651
      %v2727 = vadd.f32 %v2329, %v2654
      %v2728 = vadd.f32 %v2330, %v2656
      %v2729 = vadd.f32 %v2331, %v2659
      %v2730 = vadd.f32 %v2332, %v2661
      %v2731 = vadd.f32 %v2333, %v2664
      %v2732 = vadd.f32 %v2334, %v2666
      %v2733 = vadd.f32 %v2335, %v2669
      %v2734 = vadd.f32 %v2336, %v2671
      %v2735 = vadd.f32 %v2337, %v2674
      %v2736 = vadd.f32 %v2338, %v2676
      %v2737 = vadd.f32 %v2339, %v2679
      %v2738 = vadd.f32 %v2340, %v2681
      %v2739 = vadd.f32 %v2341, %v2684
      %v2740 = vadd.f32 %v2342, %v2686
      %v2741 = vadd.f32 %v2343, %v2689
      %v2742 = vadd.f32 %v2344, %v2691
      %v2743 = vadd.f32 %v2345, %v2694
      %v2744 = vadd.f32 %v2346, %v2696
      %v2745 = vadd.f32 %v2347, %v2699
      %v2746 = vadd.f32 %v2348, %v2701
      %v2747 = vadd.f32 %v2349, %v2704
      %v2748 = vadd.f32 %v2350, %v2706
      %v2749 = vadd.f32 %v2351, %v2709
      %v2750 = vadd.f32 %v2352, %v2711
      %v2751 = vadd.f32 %v2353, %v2714
      %v2752 = vadd.f32 %v2354, %v2716
      %v2753 = vadd.f32 %v2355, %v2719
      %v2754 = vadd.f32 %v2356, %v2721
      %s2755 = scalar_lea.vmem %s172, 24
      %v2756 = vld [vmem:[%s2755] sm:$0xf]
      %v2757 = vld [vmem:[%s2755 + $0x4] sm:$0xf]
      %v2758 = vld [vmem:[%s2755 + $0xc] sm:$0xf]
      %v2759 = vld [vmem:[%s2755 + $0x10] sm:$0xf]
      %v2760 = vld [vmem:[%s2755 + $0x18] sm:$0xf]
      %v2761 = vld [vmem:[%s2755 + $0x1c] sm:$0xf]
      %v2762 = vld [vmem:[%s2755 + $0x24] sm:$0xf]
      %v2763 = vld [vmem:[%s2755 + $0x28] sm:$0xf]
      %v2764 = vld [vmem:[%s2755 + $0x30] sm:$0xf]
      %v2765 = vld [vmem:[%s2755 + $0x34] sm:$0xf]
      %v2766 = vld [vmem:[%s2755 + $0x3c] sm:$0xf]
      %v2767 = vld [vmem:[%s2755 + $0x40] sm:$0xf]
      %v2768 = vld [vmem:[%s2755 + $0x48] sm:$0xf]
      %v2769 = vld [vmem:[%s2755 + $0x4c] sm:$0xf]
      %v2770 = vld [vmem:[%s2755 + $0x54] sm:$0xf]
      %v2771 = vld [vmem:[%s2755 + $0x58] sm:$0xf]
      %v2772 = vld [vmem:[%s2755 + $0x60] sm:$0xf]
      %v2773 = vld [vmem:[%s2755 + $0x64] sm:$0xf]
      %v2774 = vld [vmem:[%s2755 + $0x6c] sm:$0xf]
      %v2775 = vld [vmem:[%s2755 + $0x70] sm:$0xf]
      %v2776 = vld [vmem:[%s2755 + $0x78] sm:$0xf]
      %v2777 = vld [vmem:[%s2755 + $0x7c] sm:$0xf]
      %v2778 = vld [vmem:[%s2755 + $0x84] sm:$0xf]
      %v2779 = vld [vmem:[%s2755 + $0x88] sm:$0xf]
      %v2780 = vld [vmem:[%s2755 + $0x90] sm:$0xf]
      %v2781 = vld [vmem:[%s2755 + $0x94] sm:$0xf]
      %v2782 = vld [vmem:[%s2755 + $0x9c] sm:$0xf]
      %v2783 = vld [vmem:[%s2755 + $0xa0] sm:$0xf]
      %v2784 = vld [vmem:[%s2755 + $0xa8] sm:$0xf]
      %v2785 = vld [vmem:[%s2755 + $0xac] sm:$0xf]
      %v2786 = vld [vmem:[%s2755 + $0xb4] sm:$0xf]
      %v2787 = vld [vmem:[%s2755 + $0xb8] sm:$0xf]
      %s2788 = scalar_lea.vmem %s1, 24
      %v2789 = vld [vmem:[%s2788] sm:$0xf]
      %v2822 = vunpack.c.l.b16 %v2756
      %v2823 = vunpack.c.l.b16 %v2757
      %v2824 = vunpack.c.l.b16 %v2758
      %v2825 = vunpack.c.l.b16 %v2759
      %v2826 = vunpack.c.l.b16 %v2760
      %v2827 = vunpack.c.l.b16 %v2761
      %v2828 = vunpack.c.l.b16 %v2762
      %v2829 = vunpack.c.l.b16 %v2763
      %v2830 = vunpack.c.l.b16 %v2764
      %v2831 = vunpack.c.l.b16 %v2765
      %v2832 = vunpack.c.l.b16 %v2766
      %v2833 = vunpack.c.l.b16 %v2767
      %v2834 = vunpack.c.l.b16 %v2768
      %v2835 = vunpack.c.l.b16 %v2769
      %v2836 = vunpack.c.l.b16 %v2770
      %v2837 = vunpack.c.l.b16 %v2771
      %v2838 = vunpack.c.l.b16 %v2772
      %v2839 = vunpack.c.l.b16 %v2773
      %v2840 = vunpack.c.l.b16 %v2774
      %v2841 = vunpack.c.l.b16 %v2775
      %v2842 = vunpack.c.l.b16 %v2776
      %v2843 = vunpack.c.l.b16 %v2777
      %v2844 = vunpack.c.l.b16 %v2778
      %v2845 = vunpack.c.l.b16 %v2779
      %v2846 = vunpack.c.l.b16 %v2780
      %v2847 = vunpack.c.l.b16 %v2781
      %v2848 = vunpack.c.l.b16 %v2782
      %v2849 = vunpack.c.l.b16 %v2783
      %v2850 = vunpack.c.l.b16 %v2784
      %v2851 = vunpack.c.l.b16 %v2785
      %v2852 = vunpack.c.l.b16 %v2786
      %v2853 = vunpack.c.l.b16 %v2787
      %v2854 = vpack.c.b16 %v2823, %v2822
      %v2855 = vpack.c.b16 %v2825, %v2824
      %v2856 = vpack.c.b16 %v2827, %v2826
      %v2857 = vpack.c.b16 %v2829, %v2828
      %v2858 = vpack.c.b16 %v2831, %v2830
      %v2859 = vpack.c.b16 %v2833, %v2832
      %v2860 = vpack.c.b16 %v2835, %v2834
      %v2861 = vpack.c.b16 %v2837, %v2836
      %v2862 = vpack.c.b16 %v2839, %v2838
      %v2863 = vpack.c.b16 %v2841, %v2840
      %v2864 = vpack.c.b16 %v2843, %v2842
      %v2865 = vpack.c.b16 %v2845, %v2844
      %v2866 = vpack.c.b16 %v2847, %v2846
      %v2867 = vpack.c.b16 %v2849, %v2848
      %v2868 = vpack.c.b16 %v2851, %v2850
      %v2869 = vpack.c.b16 %v2853, %v2852
      %v2871 = vsel %vm669, %v2854, 0
      %v2874 = vsel %vm669, %v2855, 0
      %v2877 = vsel %vm669, %v2856, 0
      %v2880 = vsel %vm669, %v2857, 0
      %v2883 = vsel %vm669, %v2858, 0
      %v2886 = vsel %vm669, %v2859, 0
      %v2889 = vsel %vm669, %v2860, 0
      %v2892 = vsel %vm669, %v2861, 0
      %v2895 = vsel %vm669, %v2862, 0
      %v2898 = vsel %vm669, %v2863, 0
      %v2901 = vsel %vm669, %v2864, 0
      %v2904 = vsel %vm669, %v2865, 0
      %v2907 = vsel %vm669, %v2866, 0
      %v2910 = vsel %vm669, %v2867, 0
      %v2913 = vsel %vm669, %v2868, 0
      %v2916 = vsel %vm669, %v2869, 0
      %v2919 = vsel %vm718, %v2789, 0
      %2921 = vmatpush.bf16.msra.mxu0 0
      %2922 = vmatpush.bf16.msra.mxu0 0
      %2923 = vmatpush.bf16.msra.mxu0 0
      %2924 = vmatpush.bf16.msra.mxu0 0
      %2925 = vmatpush.bf16.msra.mxu0 0
      %2926 = vmatpush.bf16.msra.mxu0 0
      %2927 = vmatpush.bf16.msra.mxu0 0
      %2928 = vmatpush.bf16.msra.mxu0 %v2919
      %2929 = vmatmul.bf16.gmra.mxu0 %v2871
      %v2930 = vpop.f32.mrf.mxu0
      %v2931 = vadd.f32 0.0, %v2930
      %v2932 = vpop.f32.mrf.mxu0
      %v2933 = vadd.f32 0.0, %v2932
      %2934 = vmatmul.bf16.gmra.mxu0 %v2874
      %v2935 = vpop.f32.mrf.mxu0
      %v2936 = vadd.f32 0.0, %v2935
      %v2937 = vpop.f32.mrf.mxu0
      %v2938 = vadd.f32 0.0, %v2937
      %2939 = vmatmul.bf16.gmra.mxu0 %v2877
      %v2940 = vpop.f32.mrf.mxu0
      %v2941 = vadd.f32 0.0, %v2940
      %v2942 = vpop.f32.mrf.mxu0
      %v2943 = vadd.f32 0.0, %v2942
      %2944 = vmatmul.bf16.gmra.mxu0 %v2880
      %v2945 = vpop.f32.mrf.mxu0
      %v2946 = vadd.f32 0.0, %v2945
      %v2947 = vpop.f32.mrf.mxu0
      %v2948 = vadd.f32 0.0, %v2947
      %2949 = vmatmul.bf16.gmra.mxu0 %v2883
      %v2950 = vpop.f32.mrf.mxu0
      %v2951 = vadd.f32 0.0, %v2950
      %v2952 = vpop.f32.mrf.mxu0
      %v2953 = vadd.f32 0.0, %v2952
      %2954 = vmatmul.bf16.gmra.mxu0 %v2886
      %v2955 = vpop.f32.mrf.mxu0
      %v2956 = vadd.f32 0.0, %v2955
      %v2957 = vpop.f32.mrf.mxu0
      %v2958 = vadd.f32 0.0, %v2957
      %2959 = vmatmul.bf16.gmra.mxu0 %v2889
      %v2960 = vpop.f32.mrf.mxu0
      %v2961 = vadd.f32 0.0, %v2960
      %v2962 = vpop.f32.mrf.mxu0
      %v2963 = vadd.f32 0.0, %v2962
      %2964 = vmatmul.bf16.gmra.mxu0 %v2892
      %v2965 = vpop.f32.mrf.mxu0
      %v2966 = vadd.f32 0.0, %v2965
      %v2967 = vpop.f32.mrf.mxu0
      %v2968 = vadd.f32 0.0, %v2967
      %2969 = vmatmul.bf16.gmra.mxu0 %v2895
      %v2970 = vpop.f32.mrf.mxu0
      %v2971 = vadd.f32 0.0, %v2970
      %v2972 = vpop.f32.mrf.mxu0
      %v2973 = vadd.f32 0.0, %v2972
      %2974 = vmatmul.bf16.gmra.mxu0 %v2898
      %v2975 = vpop.f32.mrf.mxu0
      %v2976 = vadd.f32 0.0, %v2975
      %v2977 = vpop.f32.mrf.mxu0
      %v2978 = vadd.f32 0.0, %v2977
      %2979 = vmatmul.bf16.gmra.mxu0 %v2901
      %v2980 = vpop.f32.mrf.mxu0
      %v2981 = vadd.f32 0.0, %v2980
      %v2982 = vpop.f32.mrf.mxu0
      %v2983 = vadd.f32 0.0, %v2982
      %2984 = vmatmul.bf16.gmra.mxu0 %v2904
      %v2985 = vpop.f32.mrf.mxu0
      %v2986 = vadd.f32 0.0, %v2985
      %v2987 = vpop.f32.mrf.mxu0
      %v2988 = vadd.f32 0.0, %v2987
      %2989 = vmatmul.bf16.gmra.mxu0 %v2907
      %v2990 = vpop.f32.mrf.mxu0
      %v2991 = vadd.f32 0.0, %v2990
      %v2992 = vpop.f32.mrf.mxu0
      %v2993 = vadd.f32 0.0, %v2992
      %2994 = vmatmul.bf16.gmra.mxu0 %v2910
      %v2995 = vpop.f32.mrf.mxu0
      %v2996 = vadd.f32 0.0, %v2995
      %v2997 = vpop.f32.mrf.mxu0
      %v2998 = vadd.f32 0.0, %v2997
      %2999 = vmatmul.bf16.gmra.mxu0 %v2913
      %v3000 = vpop.f32.mrf.mxu0
      %v3001 = vadd.f32 0.0, %v3000
      %v3002 = vpop.f32.mrf.mxu0
      %v3003 = vadd.f32 0.0, %v3002
      %3004 = vmatmul.bf16.gmra.mxu0 %v2916
      %v3005 = vpop.f32.mrf.mxu0
      %v3006 = vadd.f32 0.0, %v3005
      %v3007 = vpop.f32.mrf.mxu0
      %v3008 = vadd.f32 0.0, %v3007
      %3009 = vdwg.mxu0
      %v3010 = vadd.f32 %v2723, %v2931
      %v3011 = vadd.f32 %v2724, %v2933
      %v3012 = vadd.f32 %v2725, %v2936
      %v3013 = vadd.f32 %v2726, %v2938
      %v3014 = vadd.f32 %v2727, %v2941
      %v3015 = vadd.f32 %v2728, %v2943
      %v3016 = vadd.f32 %v2729, %v2946
      %v3017 = vadd.f32 %v2730, %v2948
      %v3018 = vadd.f32 %v2731, %v2951
      %v3019 = vadd.f32 %v2732, %v2953
      %v3020 = vadd.f32 %v2733, %v2956
      %v3021 = vadd.f32 %v2734, %v2958
      %v3022 = vadd.f32 %v2735, %v2961
      %v3023 = vadd.f32 %v2736, %v2963
      %v3024 = vadd.f32 %v2737, %v2966
      %v3025 = vadd.f32 %v2738, %v2968
      %v3026 = vadd.f32 %v2739, %v2971
      %v3027 = vadd.f32 %v2740, %v2973
      %v3028 = vadd.f32 %v2741, %v2976
      %v3029 = vadd.f32 %v2742, %v2978
      %v3030 = vadd.f32 %v2743, %v2981
      %v3031 = vadd.f32 %v2744, %v2983
      %v3032 = vadd.f32 %v2745, %v2986
      %v3033 = vadd.f32 %v2746, %v2988
      %v3034 = vadd.f32 %v2747, %v2991
      %v3035 = vadd.f32 %v2748, %v2993
      %v3036 = vadd.f32 %v2749, %v2996
      %v3037 = vadd.f32 %v2750, %v2998
      %v3038 = vadd.f32 %v2751, %v3001
      %v3039 = vadd.f32 %v2752, %v3003
      %v3040 = vadd.f32 %v2753, %v3006
      %v3041 = vadd.f32 %v2754, %v3008
      %v3042 = vld [vmem:[%s2755] sm:$0xf]
      %v3043 = vld [vmem:[%s2755 + $0x4] sm:$0xf]
      %v3044 = vld [vmem:[%s2755 + $0x8] sm:$0x1]
      %v3045 = vld [vmem:[%s2755 + $0xc] sm:$0xf]
      %v3046 = vld [vmem:[%s2755 + $0x10] sm:$0xf]
      %v3047 = vld [vmem:[%s2755 + $0x14] sm:$0x1]
      %v3048 = vld [vmem:[%s2755 + $0x18] sm:$0xf]
      %v3049 = vld [vmem:[%s2755 + $0x1c] sm:$0xf]
      %v3050 = vld [vmem:[%s2755 + $0x20] sm:$0x1]
      %v3051 = vld [vmem:[%s2755 + $0x24] sm:$0xf]
      %v3052 = vld [vmem:[%s2755 + $0x28] sm:$0xf]
      %v3053 = vld [vmem:[%s2755 + $0x2c] sm:$0x1]
      %v3054 = vld [vmem:[%s2755 + $0x30] sm:$0xf]
      %v3055 = vld [vmem:[%s2755 + $0x34] sm:$0xf]
      %v3056 = vld [vmem:[%s2755 + $0x38] sm:$0x1]
      %v3057 = vld [vmem:[%s2755 + $0x3c] sm:$0xf]
      %v3058 = vld [vmem:[%s2755 + $0x40] sm:$0xf]
      %v3059 = vld [vmem:[%s2755 + $0x44] sm:$0x1]
      %v3060 = vld [vmem:[%s2755 + $0x48] sm:$0xf]
      %v3061 = vld [vmem:[%s2755 + $0x4c] sm:$0xf]
      %v3062 = vld [vmem:[%s2755 + $0x50] sm:$0x1]
      %v3063 = vld [vmem:[%s2755 + $0x54] sm:$0xf]
      %v3064 = vld [vmem:[%s2755 + $0x58] sm:$0xf]
      %v3065 = vld [vmem:[%s2755 + $0x5c] sm:$0x1]
      %v3066 = vld [vmem:[%s2755 + $0x60] sm:$0xf]
      %v3067 = vld [vmem:[%s2755 + $0x64] sm:$0xf]
      %v3068 = vld [vmem:[%s2755 + $0x68] sm:$0x1]
      %v3069 = vld [vmem:[%s2755 + $0x6c] sm:$0xf]
      %v3070 = vld [vmem:[%s2755 + $0x70] sm:$0xf]
      %v3071 = vld [vmem:[%s2755 + $0x74] sm:$0x1]
      %v3072 = vld [vmem:[%s2755 + $0x78] sm:$0xf]
      %v3073 = vld [vmem:[%s2755 + $0x7c] sm:$0xf]
      %v3074 = vld [vmem:[%s2755 + $0x80] sm:$0x1]
      %v3075 = vld [vmem:[%s2755 + $0x84] sm:$0xf]
      %v3076 = vld [vmem:[%s2755 + $0x88] sm:$0xf]
      %v3077 = vld [vmem:[%s2755 + $0x8c] sm:$0x1]
      %v3078 = vld [vmem:[%s2755 + $0x90] sm:$0xf]
      %v3079 = vld [vmem:[%s2755 + $0x94] sm:$0xf]
      %v3080 = vld [vmem:[%s2755 + $0x98] sm:$0x1]
      %v3081 = vld [vmem:[%s2755 + $0x9c] sm:$0xf]
      %v3082 = vld [vmem:[%s2755 + $0xa0] sm:$0xf]
      %v3083 = vld [vmem:[%s2755 + $0xa4] sm:$0x1]
      %v3084 = vld [vmem:[%s2755 + $0xa8] sm:$0xf]
      %v3085 = vld [vmem:[%s2755 + $0xac] sm:$0xf]
      %v3086 = vld [vmem:[%s2755 + $0xb0] sm:$0x1]
      %v3087 = vld [vmem:[%s2755 + $0xb4] sm:$0xf]
      %v3088 = vld [vmem:[%s2755 + $0xb8] sm:$0xf]
      %v3089 = vld [vmem:[%s2755 + $0xbc] sm:$0x1]
      %v3091 = vshrl.u32 %v3042, 16
      %v3093 = vrot.slane %v3091, 4
      %v3094 = vshll.u32 %v3042, 16
      %v3096 = vrot.slane %v3094, 5
      %v3097 = vor.u32 %v3093, %v3096
      %v3098 = vrot.slane %v3097, 4
      %v3100 = vshll.u32 %v3043, 16
      %v3102 = vrot.slane %v3100, 5
      %v3103 = vsel %vm234, %v3098, %v3102
      %v3104 = vshrl.u32 %v3043, 16
      %v3106 = vrot.slane %v3104, 4
      %v3107 = vor.u32 %v3106, %v3102
      %v3108 = vrot.slane %v3107, 4
      %v3110 = vshll.u32 %v3044, 16
      %v3112 = vrot.slane %v3110, 5
      %v3113 = vsel %vm234, %v3108, %v3112
      %v3115 = vshrl.u32 %v3045, 16
      %v3117 = vrot.slane %v3115, 4
      %v3118 = vshll.u32 %v3045, 16
      %v3120 = vrot.slane %v3118, 5
      %v3121 = vor.u32 %v3117, %v3120
      %v3122 = vrot.slane %v3121, 4
      %v3124 = vshll.u32 %v3046, 16
      %v3126 = vrot.slane %v3124, 5
      %v3127 = vsel %vm234, %v3122, %v3126
      %v3128 = vshrl.u32 %v3046, 16
      %v3130 = vrot.slane %v3128, 4
      %v3131 = vor.u32 %v3130, %v3126
      %v3132 = vrot.slane %v3131, 4
      %v3134 = vshll.u32 %v3047, 16
      %v3136 = vrot.slane %v3134, 5
      %v3137 = vsel %vm234, %v3132, %v3136
      %v3139 = vshrl.u32 %v3048, 16
      %v3141 = vrot.slane %v3139, 4
      %v3142 = vshll.u32 %v3048, 16
      %v3144 = vrot.slane %v3142, 5
      %v3145 = vor.u32 %v3141, %v3144
      %v3146 = vrot.slane %v3145, 4
      %v3148 = vshll.u32 %v3049, 16
      %v3150 = vrot.slane %v3148, 5
      %v3151 = vsel %vm234, %v3146, %v3150
      %v3152 = vshrl.u32 %v3049, 16
      %v3154 = vrot.slane %v3152, 4
      %v3155 = vor.u32 %v3154, %v3150
      %v3156 = vrot.slane %v3155, 4
      %v3158 = vshll.u32 %v3050, 16
      %v3160 = vrot.slane %v3158, 5
      %v3161 = vsel %vm234, %v3156, %v3160
      %v3163 = vshrl.u32 %v3051, 16
      %v3165 = vrot.slane %v3163, 4
      %v3166 = vshll.u32 %v3051, 16
      %v3168 = vrot.slane %v3166, 5
      %v3169 = vor.u32 %v3165, %v3168
      %v3170 = vrot.slane %v3169, 4
      %v3172 = vshll.u32 %v3052, 16
      %v3174 = vrot.slane %v3172, 5
      %v3175 = vsel %vm234, %v3170, %v3174
      %v3176 = vshrl.u32 %v3052, 16
      %v3178 = vrot.slane %v3176, 4
      %v3179 = vor.u32 %v3178, %v3174
      %v3180 = vrot.slane %v3179, 4
      %v3182 = vshll.u32 %v3053, 16
      %v3184 = vrot.slane %v3182, 5
      %v3185 = vsel %vm234, %v3180, %v3184
      %v3187 = vshrl.u32 %v3054, 16
      %v3189 = vrot.slane %v3187, 4
      %v3190 = vshll.u32 %v3054, 16
      %v3192 = vrot.slane %v3190, 5
      %v3193 = vor.u32 %v3189, %v3192
      %v3194 = vrot.slane %v3193, 4
      %v3196 = vshll.u32 %v3055, 16
      %v3198 = vrot.slane %v3196, 5
      %v3199 = vsel %vm234, %v3194, %v3198
      %v3200 = vshrl.u32 %v3055, 16
      %v3202 = vrot.slane %v3200, 4
      %v3203 = vor.u32 %v3202, %v3198
      %v3204 = vrot.slane %v3203, 4
      %v3206 = vshll.u32 %v3056, 16
      %v3208 = vrot.slane %v3206, 5
      %v3209 = vsel %vm234, %v3204, %v3208
      %v3211 = vshrl.u32 %v3057, 16
      %v3213 = vrot.slane %v3211, 4
      %v3214 = vshll.u32 %v3057, 16
      %v3216 = vrot.slane %v3214, 5
      %v3217 = vor.u32 %v3213, %v3216
      %v3218 = vrot.slane %v3217, 4
      %v3220 = vshll.u32 %v3058, 16
      %v3222 = vrot.slane %v3220, 5
      %v3223 = vsel %vm234, %v3218, %v3222
      %v3224 = vshrl.u32 %v3058, 16
      %v3226 = vrot.slane %v3224, 4
      %v3227 = vor.u32 %v3226, %v3222
      %v3228 = vrot.slane %v3227, 4
      %v3230 = vshll.u32 %v3059, 16
      %v3232 = vrot.slane %v3230, 5
      %v3233 = vsel %vm234, %v3228, %v3232
      %v3235 = vshrl.u32 %v3060, 16
      %v3237 = vrot.slane %v3235, 4
      %v3238 = vshll.u32 %v3060, 16
      %v3240 = vrot.slane %v3238, 5
      %v3241 = vor.u32 %v3237, %v3240
      %v3242 = vrot.slane %v3241, 4
      %v3244 = vshll.u32 %v3061, 16
      %v3246 = vrot.slane %v3244, 5
      %v3247 = vsel %vm234, %v3242, %v3246
      %v3248 = vshrl.u32 %v3061, 16
      %v3250 = vrot.slane %v3248, 4
      %v3251 = vor.u32 %v3250, %v3246
      %v3252 = vrot.slane %v3251, 4
      %v3254 = vshll.u32 %v3062, 16
      %v3256 = vrot.slane %v3254, 5
      %v3257 = vsel %vm234, %v3252, %v3256
      %v3259 = vshrl.u32 %v3063, 16
      %v3261 = vrot.slane %v3259, 4
      %v3262 = vshll.u32 %v3063, 16
      %v3264 = vrot.slane %v3262, 5
      %v3265 = vor.u32 %v3261, %v3264
      %v3266 = vrot.slane %v3265, 4
      %v3268 = vshll.u32 %v3064, 16
      %v3270 = vrot.slane %v3268, 5
      %v3271 = vsel %vm234, %v3266, %v3270
      %v3272 = vshrl.u32 %v3064, 16
      %v3274 = vrot.slane %v3272, 4
      %v3275 = vor.u32 %v3274, %v3270
      %v3276 = vrot.slane %v3275, 4
      %v3278 = vshll.u32 %v3065, 16
      %v3280 = vrot.slane %v3278, 5
      %v3281 = vsel %vm234, %v3276, %v3280
      %v3283 = vshrl.u32 %v3066, 16
      %v3285 = vrot.slane %v3283, 4
      %v3286 = vshll.u32 %v3066, 16
      %v3288 = vrot.slane %v3286, 5
      %v3289 = vor.u32 %v3285, %v3288
      %v3290 = vrot.slane %v3289, 4
      %v3292 = vshll.u32 %v3067, 16
      %v3294 = vrot.slane %v3292, 5
      %v3295 = vsel %vm234, %v3290, %v3294
      %v3296 = vshrl.u32 %v3067, 16
      %v3298 = vrot.slane %v3296, 4
      %v3299 = vor.u32 %v3298, %v3294
      %v3300 = vrot.slane %v3299, 4
      %v3302 = vshll.u32 %v3068, 16
      %v3304 = vrot.slane %v3302, 5
      %v3305 = vsel %vm234, %v3300, %v3304
      %v3307 = vshrl.u32 %v3069, 16
      %v3309 = vrot.slane %v3307, 4
      %v3310 = vshll.u32 %v3069, 16
      %v3312 = vrot.slane %v3310, 5
      %v3313 = vor.u32 %v3309, %v3312
      %v3314 = vrot.slane %v3313, 4
      %v3316 = vshll.u32 %v3070, 16
      %v3318 = vrot.slane %v3316, 5
      %v3319 = vsel %vm234, %v3314, %v3318
      %v3320 = vshrl.u32 %v3070, 16
      %v3322 = vrot.slane %v3320, 4
      %v3323 = vor.u32 %v3322, %v3318
      %v3324 = vrot.slane %v3323, 4
      %v3326 = vshll.u32 %v3071, 16
      %v3328 = vrot.slane %v3326, 5
      %v3329 = vsel %vm234, %v3324, %v3328
      %v3331 = vshrl.u32 %v3072, 16
      %v3333 = vrot.slane %v3331, 4
      %v3334 = vshll.u32 %v3072, 16
      %v3336 = vrot.slane %v3334, 5
      %v3337 = vor.u32 %v3333, %v3336
      %v3338 = vrot.slane %v3337, 4
      %v3340 = vshll.u32 %v3073, 16
      %v3342 = vrot.slane %v3340, 5
      %v3343 = vsel %vm234, %v3338, %v3342
      %v3344 = vshrl.u32 %v3073, 16
      %v3346 = vrot.slane %v3344, 4
      %v3347 = vor.u32 %v3346, %v3342
      %v3348 = vrot.slane %v3347, 4
      %v3350 = vshll.u32 %v3074, 16
      %v3352 = vrot.slane %v3350, 5
      %v3353 = vsel %vm234, %v3348, %v3352
      %v3355 = vshrl.u32 %v3075, 16
      %v3357 = vrot.slane %v3355, 4
      %v3358 = vshll.u32 %v3075, 16
      %v3360 = vrot.slane %v3358, 5
      %v3361 = vor.u32 %v3357, %v3360
      %v3362 = vrot.slane %v3361, 4
      %v3364 = vshll.u32 %v3076, 16
      %v3366 = vrot.slane %v3364, 5
      %v3367 = vsel %vm234, %v3362, %v3366
      %v3368 = vshrl.u32 %v3076, 16
      %v3370 = vrot.slane %v3368, 4
      %v3371 = vor.u32 %v3370, %v3366
      %v3372 = vrot.slane %v3371, 4
      %v3374 = vshll.u32 %v3077, 16
      %v3376 = vrot.slane %v3374, 5
      %v3377 = vsel %vm234, %v3372, %v3376
      %v3379 = vshrl.u32 %v3078, 16
      %v3381 = vrot.slane %v3379, 4
      %v3382 = vshll.u32 %v3078, 16
      %v3384 = vrot.slane %v3382, 5
      %v3385 = vor.u32 %v3381, %v3384
      %v3386 = vrot.slane %v3385, 4
      %v3388 = vshll.u32 %v3079, 16
      %v3390 = vrot.slane %v3388, 5
      %v3391 = vsel %vm234, %v3386, %v3390
      %v3392 = vshrl.u32 %v3079, 16
      %v3394 = vrot.slane %v3392, 4
      %v3395 = vor.u32 %v3394, %v3390
      %v3396 = vrot.slane %v3395, 4
      %v3398 = vshll.u32 %v3080, 16
      %v3400 = vrot.slane %v3398, 5
      %v3401 = vsel %vm234, %v3396, %v3400
      %v3403 = vshrl.u32 %v3081, 16
      %v3405 = vrot.slane %v3403, 4
      %v3406 = vshll.u32 %v3081, 16
      %v3408 = vrot.slane %v3406, 5
      %v3409 = vor.u32 %v3405, %v3408
      %v3410 = vrot.slane %v3409, 4
      %v3412 = vshll.u32 %v3082, 16
      %v3414 = vrot.slane %v3412, 5
      %v3415 = vsel %vm234, %v3410, %v3414
      %v3416 = vshrl.u32 %v3082, 16
      %v3418 = vrot.slane %v3416, 4
      %v3419 = vor.u32 %v3418, %v3414
      %v3420 = vrot.slane %v3419, 4
      %v3422 = vshll.u32 %v3083, 16
      %v3424 = vrot.slane %v3422, 5
      %v3425 = vsel %vm234, %v3420, %v3424
      %v3427 = vshrl.u32 %v3084, 16
      %v3429 = vrot.slane %v3427, 4
      %v3430 = vshll.u32 %v3084, 16
      %v3432 = vrot.slane %v3430, 5
      %v3433 = vor.u32 %v3429, %v3432
      %v3434 = vrot.slane %v3433, 4
      %v3436 = vshll.u32 %v3085, 16
      %v3438 = vrot.slane %v3436, 5
      %v3439 = vsel %vm234, %v3434, %v3438
      %v3440 = vshrl.u32 %v3085, 16
      %v3442 = vrot.slane %v3440, 4
      %v3443 = vor.u32 %v3442, %v3438
      %v3444 = vrot.slane %v3443, 4
      %v3446 = vshll.u32 %v3086, 16
      %v3448 = vrot.slane %v3446, 5
      %v3449 = vsel %vm234, %v3444, %v3448
      %v3451 = vshrl.u32 %v3087, 16
      %v3453 = vrot.slane %v3451, 4
      %v3454 = vshll.u32 %v3087, 16
      %v3456 = vrot.slane %v3454, 5
      %v3457 = vor.u32 %v3453, %v3456
      %v3458 = vrot.slane %v3457, 4
      %v3460 = vshll.u32 %v3088, 16
      %v3462 = vrot.slane %v3460, 5
      %v3463 = vsel %vm234, %v3458, %v3462
      %v3464 = vshrl.u32 %v3088, 16
      %v3466 = vrot.slane %v3464, 4
      %v3467 = vor.u32 %v3466, %v3462
      %v3468 = vrot.slane %v3467, 4
      %v3470 = vshll.u32 %v3089, 16
      %v3472 = vrot.slane %v3470, 5
      %v3473 = vsel %vm234, %v3468, %v3472
      %s3474 = scalar_lea.vmem %s1, 28
      %v3475 = vld [vmem:[%s3474] sm:$0xf]
      %v3476 = vunpack.c.l.b16 %v3103
      %v3477 = vunpack.c.l.b16 %v3113
      %v3478 = vunpack.c.l.b16 %v3127
      %v3479 = vunpack.c.l.b16 %v3137
      %v3480 = vunpack.c.l.b16 %v3151
      %v3481 = vunpack.c.l.b16 %v3161
      %v3482 = vunpack.c.l.b16 %v3175
      %v3483 = vunpack.c.l.b16 %v3185
      %v3484 = vunpack.c.l.b16 %v3199
      %v3485 = vunpack.c.l.b16 %v3209
      %v3486 = vunpack.c.l.b16 %v3223
      %v3487 = vunpack.c.l.b16 %v3233
      %v3488 = vunpack.c.l.b16 %v3247
      %v3489 = vunpack.c.l.b16 %v3257
      %v3490 = vunpack.c.l.b16 %v3271
      %v3491 = vunpack.c.l.b16 %v3281
      %v3492 = vunpack.c.l.b16 %v3295
      %v3493 = vunpack.c.l.b16 %v3305
      %v3494 = vunpack.c.l.b16 %v3319
      %v3495 = vunpack.c.l.b16 %v3329
      %v3496 = vunpack.c.l.b16 %v3343
      %v3497 = vunpack.c.l.b16 %v3353
      %v3498 = vunpack.c.l.b16 %v3367
      %v3499 = vunpack.c.l.b16 %v3377
      %v3500 = vunpack.c.l.b16 %v3391
      %v3501 = vunpack.c.l.b16 %v3401
      %v3502 = vunpack.c.l.b16 %v3415
      %v3503 = vunpack.c.l.b16 %v3425
      %v3504 = vunpack.c.l.b16 %v3439
      %v3505 = vunpack.c.l.b16 %v3449
      %v3506 = vunpack.c.l.b16 %v3463
      %v3507 = vunpack.c.l.b16 %v3473
      %v3508 = vpack.c.b16 %v3477, %v3476
      %v3509 = vpack.c.b16 %v3479, %v3478
      %v3510 = vpack.c.b16 %v3481, %v3480
      %v3511 = vpack.c.b16 %v3483, %v3482
      %v3512 = vpack.c.b16 %v3485, %v3484
      %v3513 = vpack.c.b16 %v3487, %v3486
      %v3514 = vpack.c.b16 %v3489, %v3488
      %v3515 = vpack.c.b16 %v3491, %v3490
      %v3516 = vpack.c.b16 %v3493, %v3492
      %v3517 = vpack.c.b16 %v3495, %v3494
      %v3518 = vpack.c.b16 %v3497, %v3496
      %v3519 = vpack.c.b16 %v3499, %v3498
      %v3520 = vpack.c.b16 %v3501, %v3500
      %v3521 = vpack.c.b16 %v3503, %v3502
      %v3522 = vpack.c.b16 %v3505, %v3504
      %v3523 = vpack.c.b16 %v3507, %v3506
      %v3525 = vsel %vm669, %v3508, 0
      %v3528 = vsel %vm669, %v3509, 0
      %v3531 = vsel %vm669, %v3510, 0
      %v3534 = vsel %vm669, %v3511, 0
      %v3537 = vsel %vm669, %v3512, 0
      %v3540 = vsel %vm669, %v3513, 0
      %v3543 = vsel %vm669, %v3514, 0
      %v3546 = vsel %vm669, %v3515, 0
      %v3549 = vsel %vm669, %v3516, 0
      %v3552 = vsel %vm669, %v3517, 0
      %v3555 = vsel %vm669, %v3518, 0
      %v3558 = vsel %vm669, %v3519, 0
      %v3561 = vsel %vm669, %v3520, 0
      %v3564 = vsel %vm669, %v3521, 0
      %v3567 = vsel %vm669, %v3522, 0
      %v3570 = vsel %vm669, %v3523, 0
      %v3573 = vsel %vm718, %v3475, 0
      %3575 = vmatpush.bf16.msra.mxu0 0
      %3576 = vmatpush.bf16.msra.mxu0 0
      %3577 = vmatpush.bf16.msra.mxu0 0
      %3578 = vmatpush.bf16.msra.mxu0 0
      %3579 = vmatpush.bf16.msra.mxu0 0
      %3580 = vmatpush.bf16.msra.mxu0 0
      %3581 = vmatpush.bf16.msra.mxu0 0
      %3582 = vmatpush.bf16.msra.mxu0 %v3573
      %3583 = vmatmul.bf16.gmra.mxu0 %v3525
      %v3584 = vpop.f32.mrf.mxu0
      %v3585 = vadd.f32 0.0, %v3584
      %v3586 = vpop.f32.mrf.mxu0
      %v3587 = vadd.f32 0.0, %v3586
      %3588 = vmatmul.bf16.gmra.mxu0 %v3528
      %v3589 = vpop.f32.mrf.mxu0
      %v3590 = vadd.f32 0.0, %v3589
      %v3591 = vpop.f32.mrf.mxu0
      %v3592 = vadd.f32 0.0, %v3591
      %3593 = vmatmul.bf16.gmra.mxu0 %v3531
      %v3594 = vpop.f32.mrf.mxu0
      %v3595 = vadd.f32 0.0, %v3594
      %v3596 = vpop.f32.mrf.mxu0
      %v3597 = vadd.f32 0.0, %v3596
      %3598 = vmatmul.bf16.gmra.mxu0 %v3534
      %v3599 = vpop.f32.mrf.mxu0
      %v3600 = vadd.f32 0.0, %v3599
      %v3601 = vpop.f32.mrf.mxu0
      %v3602 = vadd.f32 0.0, %v3601
      %3603 = vmatmul.bf16.gmra.mxu0 %v3537
      %v3604 = vpop.f32.mrf.mxu0
      %v3605 = vadd.f32 0.0, %v3604
      %v3606 = vpop.f32.mrf.mxu0
      %v3607 = vadd.f32 0.0, %v3606
      %3608 = vmatmul.bf16.gmra.mxu0 %v3540
      %v3609 = vpop.f32.mrf.mxu0
      %v3610 = vadd.f32 0.0, %v3609
      %v3611 = vpop.f32.mrf.mxu0
      %v3612 = vadd.f32 0.0, %v3611
      %3613 = vmatmul.bf16.gmra.mxu0 %v3543
      %v3614 = vpop.f32.mrf.mxu0
      %v3615 = vadd.f32 0.0, %v3614
      %v3616 = vpop.f32.mrf.mxu0
      %v3617 = vadd.f32 0.0, %v3616
      %3618 = vmatmul.bf16.gmra.mxu0 %v3546
      %v3619 = vpop.f32.mrf.mxu0
      %v3620 = vadd.f32 0.0, %v3619
      %v3621 = vpop.f32.mrf.mxu0
      %v3622 = vadd.f32 0.0, %v3621
      %3623 = vmatmul.bf16.gmra.mxu0 %v3549
      %v3624 = vpop.f32.mrf.mxu0
      %v3625 = vadd.f32 0.0, %v3624
      %v3626 = vpop.f32.mrf.mxu0
      %v3627 = vadd.f32 0.0, %v3626
      %3628 = vmatmul.bf16.gmra.mxu0 %v3552
      %v3629 = vpop.f32.mrf.mxu0
      %v3630 = vadd.f32 0.0, %v3629
      %v3631 = vpop.f32.mrf.mxu0
      %v3632 = vadd.f32 0.0, %v3631
      %3633 = vmatmul.bf16.gmra.mxu0 %v3555
      %v3634 = vpop.f32.mrf.mxu0
      %v3635 = vadd.f32 0.0, %v3634
      %v3636 = vpop.f32.mrf.mxu0
      %v3637 = vadd.f32 0.0, %v3636
      %3638 = vmatmul.bf16.gmra.mxu0 %v3558
      %v3639 = vpop.f32.mrf.mxu0
      %v3640 = vadd.f32 0.0, %v3639
      %v3641 = vpop.f32.mrf.mxu0
      %v3642 = vadd.f32 0.0, %v3641
      %3643 = vmatmul.bf16.gmra.mxu0 %v3561
      %v3644 = vpop.f32.mrf.mxu0
      %v3645 = vadd.f32 0.0, %v3644
      %v3646 = vpop.f32.mrf.mxu0
      %v3647 = vadd.f32 0.0, %v3646
      %3648 = vmatmul.bf16.gmra.mxu0 %v3564
      %v3649 = vpop.f32.mrf.mxu0
      %v3650 = vadd.f32 0.0, %v3649
      %v3651 = vpop.f32.mrf.mxu0
      %v3652 = vadd.f32 0.0, %v3651
      %3653 = vmatmul.bf16.gmra.mxu0 %v3567
      %v3654 = vpop.f32.mrf.mxu0
      %v3655 = vadd.f32 0.0, %v3654
      %v3656 = vpop.f32.mrf.mxu0
      %v3657 = vadd.f32 0.0, %v3656
      %3658 = vmatmul.bf16.gmra.mxu0 %v3570
      %v3659 = vpop.f32.mrf.mxu0
      %v3660 = vadd.f32 0.0, %v3659
      %v3661 = vpop.f32.mrf.mxu0
      %v3662 = vadd.f32 0.0, %v3661
      %3663 = vdwg.mxu0
      %v3664 = vadd.f32 %v3010, %v3585
      %v3665 = vadd.f32 %v3011, %v3587
      %v3666 = vadd.f32 %v3012, %v3590
      %v3667 = vadd.f32 %v3013, %v3592
      %v3668 = vadd.f32 %v3014, %v3595
      %v3669 = vadd.f32 %v3015, %v3597
      %v3670 = vadd.f32 %v3016, %v3600
      %v3671 = vadd.f32 %v3017, %v3602
      %v3672 = vadd.f32 %v3018, %v3605
      %v3673 = vadd.f32 %v3019, %v3607
      %v3674 = vadd.f32 %v3020, %v3610
      %v3675 = vadd.f32 %v3021, %v3612
      %v3676 = vadd.f32 %v3022, %v3615
      %v3677 = vadd.f32 %v3023, %v3617
      %v3678 = vadd.f32 %v3024, %v3620
      %v3679 = vadd.f32 %v3025, %v3622
      %v3680 = vadd.f32 %v3026, %v3625
      %v3681 = vadd.f32 %v3027, %v3627
      %v3682 = vadd.f32 %v3028, %v3630
      %v3683 = vadd.f32 %v3029, %v3632
      %v3684 = vadd.f32 %v3030, %v3635
      %v3685 = vadd.f32 %v3031, %v3637
      %v3686 = vadd.f32 %v3032, %v3640
      %v3687 = vadd.f32 %v3033, %v3642
      %v3688 = vadd.f32 %v3034, %v3645
      %v3689 = vadd.f32 %v3035, %v3647
      %v3690 = vadd.f32 %v3036, %v3650
      %v3691 = vadd.f32 %v3037, %v3652
      %v3692 = vadd.f32 %v3038, %v3655
      %v3693 = vadd.f32 %v3039, %v3657
      %v3694 = vadd.f32 %v3040, %v3660
      %v3695 = vadd.f32 %v3041, %v3662
      %v3696 = vld [vmem:[%s2755] sm:$0xe]
      %v3697 = vld [vmem:[%s2755 + $0xc] sm:$0xe]
      %v3698 = vld [vmem:[%s2755 + $0x18] sm:$0xe]
      %v3699 = vld [vmem:[%s2755 + $0x24] sm:$0xe]
      %v3700 = vld [vmem:[%s2755 + $0x30] sm:$0xe]
      %v3701 = vld [vmem:[%s2755 + $0x3c] sm:$0xe]
      %v3702 = vld [vmem:[%s2755 + $0x48] sm:$0xe]
      %v3703 = vld [vmem:[%s2755 + $0x54] sm:$0xe]
      %v3704 = vld [vmem:[%s2755 + $0x60] sm:$0xe]
      %v3705 = vld [vmem:[%s2755 + $0x6c] sm:$0xe]
      %v3706 = vld [vmem:[%s2755 + $0x78] sm:$0xe]
      %v3707 = vld [vmem:[%s2755 + $0x84] sm:$0xe]
      %v3708 = vld [vmem:[%s2755 + $0x90] sm:$0xe]
      %v3709 = vld [vmem:[%s2755 + $0x9c] sm:$0xe]
      %v3710 = vld [vmem:[%s2755 + $0xa8] sm:$0xe]
      %v3711 = vld [vmem:[%s2755 + $0xb4] sm:$0xe]
      %v3760 = vrot.slane %v3696, 5
      %v3761 = vrot.slane %v3760, 4
      %v3762 = vrot.slane %v3043, 5
      %v3763 = vsel %vm1081, %v3761, %v3762
      %v3764 = vrot.slane %v3762, 4
      %v3765 = vrot.slane %v3044, 5
      %v3766 = vsel %vm1081, %v3764, %v3765
      %v3767 = vrot.slane %v3697, 5
      %v3768 = vrot.slane %v3767, 4
      %v3769 = vrot.slane %v3046, 5
      %v3770 = vsel %vm1081, %v3768, %v3769
      %v3771 = vrot.slane %v3769, 4
      %v3772 = vrot.slane %v3047, 5
      %v3773 = vsel %vm1081, %v3771, %v3772
      %v3774 = vrot.slane %v3698, 5
      %v3775 = vrot.slane %v3774, 4
      %v3776 = vrot.slane %v3049, 5
      %v3777 = vsel %vm1081, %v3775, %v3776
      %v3778 = vrot.slane %v3776, 4
      %v3779 = vrot.slane %v3050, 5
      %v3780 = vsel %vm1081, %v3778, %v3779
      %v3781 = vrot.slane %v3699, 5
      %v3782 = vrot.slane %v3781, 4
      %v3783 = vrot.slane %v3052, 5
      %v3784 = vsel %vm1081, %v3782, %v3783
      %v3785 = vrot.slane %v3783, 4
      %v3786 = vrot.slane %v3053, 5
      %v3787 = vsel %vm1081, %v3785, %v3786
      %v3788 = vrot.slane %v3700, 5
      %v3789 = vrot.slane %v3788, 4
      %v3790 = vrot.slane %v3055, 5
      %v3791 = vsel %vm1081, %v3789, %v3790
      %v3792 = vrot.slane %v3790, 4
      %v3793 = vrot.slane %v3056, 5
      %v3794 = vsel %vm1081, %v3792, %v3793
      %v3795 = vrot.slane %v3701, 5
      %v3796 = vrot.slane %v3795, 4
      %v3797 = vrot.slane %v3058, 5
      %v3798 = vsel %vm1081, %v3796, %v3797
      %v3799 = vrot.slane %v3797, 4
      %v3800 = vrot.slane %v3059, 5
      %v3801 = vsel %vm1081, %v3799, %v3800
      %v3802 = vrot.slane %v3702, 5
      %v3803 = vrot.slane %v3802, 4
      %v3804 = vrot.slane %v3061, 5
      %v3805 = vsel %vm1081, %v3803, %v3804
      %v3806 = vrot.slane %v3804, 4
      %v3807 = vrot.slane %v3062, 5
      %v3808 = vsel %vm1081, %v3806, %v3807
      %v3809 = vrot.slane %v3703, 5
      %v3810 = vrot.slane %v3809, 4
      %v3811 = vrot.slane %v3064, 5
      %v3812 = vsel %vm1081, %v3810, %v3811
      %v3813 = vrot.slane %v3811, 4
      %v3814 = vrot.slane %v3065, 5
      %v3815 = vsel %vm1081, %v3813, %v3814
      %v3816 = vrot.slane %v3704, 5
      %v3817 = vrot.slane %v3816, 4
      %v3818 = vrot.slane %v3067, 5
      %v3819 = vsel %vm1081, %v3817, %v3818
      %v3820 = vrot.slane %v3818, 4
      %v3821 = vrot.slane %v3068, 5
      %v3822 = vsel %vm1081, %v3820, %v3821
      %v3823 = vrot.slane %v3705, 5
      %v3824 = vrot.slane %v3823, 4
      %v3825 = vrot.slane %v3070, 5
      %v3826 = vsel %vm1081, %v3824, %v3825
      %v3827 = vrot.slane %v3825, 4
      %v3828 = vrot.slane %v3071, 5
      %v3829 = vsel %vm1081, %v3827, %v3828
      %v3830 = vrot.slane %v3706, 5
      %v3831 = vrot.slane %v3830, 4
      %v3832 = vrot.slane %v3073, 5
      %v3833 = vsel %vm1081, %v3831, %v3832
      %v3834 = vrot.slane %v3832, 4
      %v3835 = vrot.slane %v3074, 5
      %v3836 = vsel %vm1081, %v3834, %v3835
      %v3837 = vrot.slane %v3707, 5
      %v3838 = vrot.slane %v3837, 4
      %v3839 = vrot.slane %v3076, 5
      %v3840 = vsel %vm1081, %v3838, %v3839
      %v3841 = vrot.slane %v3839, 4
      %v3842 = vrot.slane %v3077, 5
      %v3843 = vsel %vm1081, %v3841, %v3842
      %v3844 = vrot.slane %v3708, 5
      %v3845 = vrot.slane %v3844, 4
      %v3846 = vrot.slane %v3079, 5
      %v3847 = vsel %vm1081, %v3845, %v3846
      %v3848 = vrot.slane %v3846, 4
      %v3849 = vrot.slane %v3080, 5
      %v3850 = vsel %vm1081, %v3848, %v3849
      %v3851 = vrot.slane %v3709, 5
      %v3852 = vrot.slane %v3851, 4
      %v3853 = vrot.slane %v3082, 5
      %v3854 = vsel %vm1081, %v3852, %v3853
      %v3855 = vrot.slane %v3853, 4
      %v3856 = vrot.slane %v3083, 5
      %v3857 = vsel %vm1081, %v3855, %v3856
      %v3858 = vrot.slane %v3710, 5
      %v3859 = vrot.slane %v3858, 4
      %v3860 = vrot.slane %v3085, 5
      %v3861 = vsel %vm1081, %v3859, %v3860
      %v3862 = vrot.slane %v3860, 4
      %v3863 = vrot.slane %v3086, 5
      %v3864 = vsel %vm1081, %v3862, %v3863
      %v3865 = vrot.slane %v3711, 5
      %v3866 = vrot.slane %v3865, 4
      %v3867 = vrot.slane %v3088, 5
      %v3868 = vsel %vm1081, %v3866, %v3867
      %v3869 = vrot.slane %v3867, 4
      %v3870 = vrot.slane %v3089, 5
      %v3871 = vsel %vm1081, %v3869, %v3870
      %s3872 = scalar_lea.vmem %s1, 32
      %v3873 = vld [vmem:[%s3872] sm:$0xf]
      %v3874 = vunpack.c.l.b16 %v3763
      %v3875 = vunpack.c.l.b16 %v3766
      %v3876 = vunpack.c.l.b16 %v3770
      %v3877 = vunpack.c.l.b16 %v3773
      %v3878 = vunpack.c.l.b16 %v3777
      %v3879 = vunpack.c.l.b16 %v3780
      %v3880 = vunpack.c.l.b16 %v3784
      %v3881 = vunpack.c.l.b16 %v3787
      %v3882 = vunpack.c.l.b16 %v3791
      %v3883 = vunpack.c.l.b16 %v3794
      %v3884 = vunpack.c.l.b16 %v3798
      %v3885 = vunpack.c.l.b16 %v3801
      %v3886 = vunpack.c.l.b16 %v3805
      %v3887 = vunpack.c.l.b16 %v3808
      %v3888 = vunpack.c.l.b16 %v3812
      %v3889 = vunpack.c.l.b16 %v3815
      %v3890 = vunpack.c.l.b16 %v3819
      %v3891 = vunpack.c.l.b16 %v3822
      %v3892 = vunpack.c.l.b16 %v3826
      %v3893 = vunpack.c.l.b16 %v3829
      %v3894 = vunpack.c.l.b16 %v3833
      %v3895 = vunpack.c.l.b16 %v3836
      %v3896 = vunpack.c.l.b16 %v3840
      %v3897 = vunpack.c.l.b16 %v3843
      %v3898 = vunpack.c.l.b16 %v3847
      %v3899 = vunpack.c.l.b16 %v3850
      %v3900 = vunpack.c.l.b16 %v3854
      %v3901 = vunpack.c.l.b16 %v3857
      %v3902 = vunpack.c.l.b16 %v3861
      %v3903 = vunpack.c.l.b16 %v3864
      %v3904 = vunpack.c.l.b16 %v3868
      %v3905 = vunpack.c.l.b16 %v3871
      %v3906 = vpack.c.b16 %v3875, %v3874
      %v3907 = vpack.c.b16 %v3877, %v3876
      %v3908 = vpack.c.b16 %v3879, %v3878
      %v3909 = vpack.c.b16 %v3881, %v3880
      %v3910 = vpack.c.b16 %v3883, %v3882
      %v3911 = vpack.c.b16 %v3885, %v3884
      %v3912 = vpack.c.b16 %v3887, %v3886
      %v3913 = vpack.c.b16 %v3889, %v3888
      %v3914 = vpack.c.b16 %v3891, %v3890
      %v3915 = vpack.c.b16 %v3893, %v3892
      %v3916 = vpack.c.b16 %v3895, %v3894
      %v3917 = vpack.c.b16 %v3897, %v3896
      %v3918 = vpack.c.b16 %v3899, %v3898
      %v3919 = vpack.c.b16 %v3901, %v3900
      %v3920 = vpack.c.b16 %v3903, %v3902
      %v3921 = vpack.c.b16 %v3905, %v3904
      %v3923 = vsel %vm669, %v3906, 0
      %v3926 = vsel %vm669, %v3907, 0
      %v3929 = vsel %vm669, %v3908, 0
      %v3932 = vsel %vm669, %v3909, 0
      %v3935 = vsel %vm669, %v3910, 0
      %v3938 = vsel %vm669, %v3911, 0
      %v3941 = vsel %vm669, %v3912, 0
      %v3944 = vsel %vm669, %v3913, 0
      %v3947 = vsel %vm669, %v3914, 0
      %v3950 = vsel %vm669, %v3915, 0
      %v3953 = vsel %vm669, %v3916, 0
      %v3956 = vsel %vm669, %v3917, 0
      %v3959 = vsel %vm669, %v3918, 0
      %v3962 = vsel %vm669, %v3919, 0
      %v3965 = vsel %vm669, %v3920, 0
      %v3968 = vsel %vm669, %v3921, 0
      %v3971 = vsel %vm718, %v3873, 0
      %3973 = vmatpush.bf16.msra.mxu0 0
      %3974 = vmatpush.bf16.msra.mxu0 0
      %3975 = vmatpush.bf16.msra.mxu0 0
      %3976 = vmatpush.bf16.msra.mxu0 0
      %3977 = vmatpush.bf16.msra.mxu0 0
      %3978 = vmatpush.bf16.msra.mxu0 0
      %3979 = vmatpush.bf16.msra.mxu0 0
      %3980 = vmatpush.bf16.msra.mxu0 %v3971
      %3981 = vmatmul.bf16.gmra.mxu0 %v3923
      %v3982 = vpop.f32.mrf.mxu0
      %v3983 = vadd.f32 0.0, %v3982
      %v3984 = vpop.f32.mrf.mxu0
      %v3985 = vadd.f32 0.0, %v3984
      %3986 = vmatmul.bf16.gmra.mxu0 %v3926
      %v3987 = vpop.f32.mrf.mxu0
      %v3988 = vadd.f32 0.0, %v3987
      %v3989 = vpop.f32.mrf.mxu0
      %v3990 = vadd.f32 0.0, %v3989
      %3991 = vmatmul.bf16.gmra.mxu0 %v3929
      %v3992 = vpop.f32.mrf.mxu0
      %v3993 = vadd.f32 0.0, %v3992
      %v3994 = vpop.f32.mrf.mxu0
      %v3995 = vadd.f32 0.0, %v3994
      %3996 = vmatmul.bf16.gmra.mxu0 %v3932
      %v3997 = vpop.f32.mrf.mxu0
      %v3998 = vadd.f32 0.0, %v3997
      %v3999 = vpop.f32.mrf.mxu0
      %v4000 = vadd.f32 0.0, %v3999
      %4001 = vmatmul.bf16.gmra.mxu0 %v3935
      %v4002 = vpop.f32.mrf.mxu0
      %v4003 = vadd.f32 0.0, %v4002
      %v4004 = vpop.f32.mrf.mxu0
      %v4005 = vadd.f32 0.0, %v4004
      %4006 = vmatmul.bf16.gmra.mxu0 %v3938
      %v4007 = vpop.f32.mrf.mxu0
      %v4008 = vadd.f32 0.0, %v4007
      %v4009 = vpop.f32.mrf.mxu0
      %v4010 = vadd.f32 0.0, %v4009
      %4011 = vmatmul.bf16.gmra.mxu0 %v3941
      %v4012 = vpop.f32.mrf.mxu0
      %v4013 = vadd.f32 0.0, %v4012
      %v4014 = vpop.f32.mrf.mxu0
      %v4015 = vadd.f32 0.0, %v4014
      %4016 = vmatmul.bf16.gmra.mxu0 %v3944
      %v4017 = vpop.f32.mrf.mxu0
      %v4018 = vadd.f32 0.0, %v4017
      %v4019 = vpop.f32.mrf.mxu0
      %v4020 = vadd.f32 0.0, %v4019
      %4021 = vmatmul.bf16.gmra.mxu0 %v3947
      %v4022 = vpop.f32.mrf.mxu0
      %v4023 = vadd.f32 0.0, %v4022
      %v4024 = vpop.f32.mrf.mxu0
      %v4025 = vadd.f32 0.0, %v4024
      %4026 = vmatmul.bf16.gmra.mxu0 %v3950
      %v4027 = vpop.f32.mrf.mxu0
      %v4028 = vadd.f32 0.0, %v4027
      %v4029 = vpop.f32.mrf.mxu0
      %v4030 = vadd.f32 0.0, %v4029
      %4031 = vmatmul.bf16.gmra.mxu0 %v3953
      %v4032 = vpop.f32.mrf.mxu0
      %v4033 = vadd.f32 0.0, %v4032
      %v4034 = vpop.f32.mrf.mxu0
      %v4035 = vadd.f32 0.0, %v4034
      %4036 = vmatmul.bf16.gmra.mxu0 %v3956
      %v4037 = vpop.f32.mrf.mxu0
      %v4038 = vadd.f32 0.0, %v4037
      %v4039 = vpop.f32.mrf.mxu0
      %v4040 = vadd.f32 0.0, %v4039
      %4041 = vmatmul.bf16.gmra.mxu0 %v3959
      %v4042 = vpop.f32.mrf.mxu0
      %v4043 = vadd.f32 0.0, %v4042
      %v4044 = vpop.f32.mrf.mxu0
      %v4045 = vadd.f32 0.0, %v4044
      %4046 = vmatmul.bf16.gmra.mxu0 %v3962
      %v4047 = vpop.f32.mrf.mxu0
      %v4048 = vadd.f32 0.0, %v4047
      %v4049 = vpop.f32.mrf.mxu0
      %v4050 = vadd.f32 0.0, %v4049
      %4051 = vmatmul.bf16.gmra.mxu0 %v3965
      %v4052 = vpop.f32.mrf.mxu0
      %v4053 = vadd.f32 0.0, %v4052
      %v4054 = vpop.f32.mrf.mxu0
      %v4055 = vadd.f32 0.0, %v4054
      %4056 = vmatmul.bf16.gmra.mxu0 %v3968
      %v4057 = vpop.f32.mrf.mxu0
      %v4058 = vadd.f32 0.0, %v4057
      %v4059 = vpop.f32.mrf.mxu0
      %v4060 = vadd.f32 0.0, %v4059
      %4061 = vdwg.mxu0
      %v4062 = vadd.f32 %v3664, %v3983
      %v4063 = vadd.f32 %v3665, %v3985
      %v4064 = vadd.f32 %v3666, %v3988
      %v4065 = vadd.f32 %v3667, %v3990
      %v4066 = vadd.f32 %v3668, %v3993
      %v4067 = vadd.f32 %v3669, %v3995
      %v4068 = vadd.f32 %v3670, %v3998
      %v4069 = vadd.f32 %v3671, %v4000
      %v4070 = vadd.f32 %v3672, %v4003
      %v4071 = vadd.f32 %v3673, %v4005
      %v4072 = vadd.f32 %v3674, %v4008
      %v4073 = vadd.f32 %v3675, %v4010
      %v4074 = vadd.f32 %v3676, %v4013
      %v4075 = vadd.f32 %v3677, %v4015
      %v4076 = vadd.f32 %v3678, %v4018
      %v4077 = vadd.f32 %v3679, %v4020
      %v4078 = vadd.f32 %v3680, %v4023
      %v4079 = vadd.f32 %v3681, %v4025
      %v4080 = vadd.f32 %v3682, %v4028
      %v4081 = vadd.f32 %v3683, %v4030
      %v4082 = vadd.f32 %v3684, %v4033
      %v4083 = vadd.f32 %v3685, %v4035
      %v4084 = vadd.f32 %v3686, %v4038
      %v4085 = vadd.f32 %v3687, %v4040
      %v4086 = vadd.f32 %v3688, %v4043
      %v4087 = vadd.f32 %v3689, %v4045
      %v4088 = vadd.f32 %v3690, %v4048
      %v4089 = vadd.f32 %v3691, %v4050
      %v4090 = vadd.f32 %v3692, %v4053
      %v4091 = vadd.f32 %v3693, %v4055
      %v4092 = vadd.f32 %v3694, %v4058
      %v4093 = vadd.f32 %v3695, %v4060
      %v4094 = vadd.f32 %v4062, %v4063
      %v4095 = vadd.f32 %v4094, %v4064
      %v4096 = vadd.f32 %v4095, %v4065
      %v4097 = vadd.f32 %v4096, %v4066
      %v4098 = vadd.f32 %v4097, %v4067
      %v4099 = vadd.f32 %v4098, %v4068
      %v4100 = vadd.f32 %v4099, %v4069
      %v4101 = vadd.f32 %v4100, %v4070
      %v4102 = vadd.f32 %v4101, %v4071
      %v4103 = vadd.f32 %v4102, %v4072
      %v4104 = vadd.f32 %v4103, %v4073
      %v4105 = vadd.f32 %v4104, %v4074
      %v4106 = vadd.f32 %v4105, %v4075
      %v4107 = vadd.f32 %v4106, %v4076
      %v4108 = vadd.f32 %v4107, %v4077
      %v4109 = vadd.f32 %v4108, %v4078
      %v4110 = vadd.f32 %v4109, %v4079
      %v4111 = vadd.f32 %v4110, %v4080
      %v4112 = vadd.f32 %v4111, %v4081
      %v4113 = vadd.f32 %v4112, %v4082
      %v4114 = vadd.f32 %v4113, %v4083
      %v4115 = vadd.f32 %v4114, %v4084
      %v4116 = vadd.f32 %v4115, %v4085
      %v4117 = vadd.f32 %v4116, %v4086
      %v4118 = vadd.f32 %v4117, %v4087
      %v4119 = vadd.f32 %v4118, %v4088
      %v4120 = vadd.f32 %v4119, %v4089
      %v4121 = vadd.f32 %v4120, %v4090
      %v4122 = vadd.f32 %v4121, %v4091
      %v4123 = vadd.f32 %v4122, %v4092
      %v4124 = vadd.f32 %v4123, %v4093
      %v4125 = vrot.slane %v4124, 4
      %v4126 = vadd.f32 %v4124, %v4125
      %v4127 = vrot.slane %v4126, 2
      %v4128 = vadd.f32 %v4126, %v4127
      %v4129 = vrot.slane %v4128, 1
      %v4130 = vadd.f32 %v4128, %v4129
      %v4131 = vadd.f32 %v4130, 0.0
      %v4132 = vmul.f32 %v4062, %v4062
      %v4133 = vmul.f32 %v4063, %v4063
      %v4134 = vmul.f32 %v4064, %v4064
      %v4135 = vmul.f32 %v4065, %v4065
      %v4136 = vmul.f32 %v4066, %v4066
      %v4137 = vmul.f32 %v4067, %v4067
      %v4138 = vmul.f32 %v4068, %v4068
      %v4139 = vmul.f32 %v4069, %v4069
      %v4140 = vmul.f32 %v4070, %v4070
      %v4141 = vmul.f32 %v4071, %v4071
      %v4142 = vmul.f32 %v4072, %v4072
      %v4143 = vmul.f32 %v4073, %v4073
      %v4144 = vmul.f32 %v4074, %v4074
      %v4145 = vmul.f32 %v4075, %v4075
      %v4146 = vmul.f32 %v4076, %v4076
      %v4147 = vmul.f32 %v4077, %v4077
      %v4148 = vmul.f32 %v4078, %v4078
      %v4149 = vmul.f32 %v4079, %v4079
      %v4150 = vmul.f32 %v4080, %v4080
      %v4151 = vmul.f32 %v4081, %v4081
      %v4152 = vmul.f32 %v4082, %v4082
      %v4153 = vmul.f32 %v4083, %v4083
      %v4154 = vmul.f32 %v4084, %v4084
      %v4155 = vmul.f32 %v4085, %v4085
      %v4156 = vmul.f32 %v4086, %v4086
      %v4157 = vmul.f32 %v4087, %v4087
      %v4158 = vmul.f32 %v4088, %v4088
      %v4159 = vmul.f32 %v4089, %v4089
      %v4160 = vmul.f32 %v4090, %v4090
      %v4161 = vmul.f32 %v4091, %v4091
      %v4162 = vmul.f32 %v4092, %v4092
      %v4163 = vmul.f32 %v4093, %v4093
      %v4164 = vadd.f32 %v4132, %v4133
      %v4165 = vadd.f32 %v4164, %v4134
      %v4166 = vadd.f32 %v4165, %v4135
      %v4167 = vadd.f32 %v4166, %v4136
      %v4168 = vadd.f32 %v4167, %v4137
      %v4169 = vadd.f32 %v4168, %v4138
      %v4170 = vadd.f32 %v4169, %v4139
      %v4171 = vadd.f32 %v4170, %v4140
      %v4172 = vadd.f32 %v4171, %v4141
      %v4173 = vadd.f32 %v4172, %v4142
      %v4174 = vadd.f32 %v4173, %v4143
      %v4175 = vadd.f32 %v4174, %v4144
      %v4176 = vadd.f32 %v4175, %v4145
      %v4177 = vadd.f32 %v4176, %v4146
      %v4178 = vadd.f32 %v4177, %v4147
      %v4179 = vadd.f32 %v4178, %v4148
      %v4180 = vadd.f32 %v4179, %v4149
      %v4181 = vadd.f32 %v4180, %v4150
      %v4182 = vadd.f32 %v4181, %v4151
      %v4183 = vadd.f32 %v4182, %v4152
      %v4184 = vadd.f32 %v4183, %v4153
      %v4185 = vadd.f32 %v4184, %v4154
      %v4186 = vadd.f32 %v4185, %v4155
      %v4187 = vadd.f32 %v4186, %v4156
      %v4188 = vadd.f32 %v4187, %v4157
      %v4189 = vadd.f32 %v4188, %v4158
      %v4190 = vadd.f32 %v4189, %v4159
      %v4191 = vadd.f32 %v4190, %v4160
      %v4192 = vadd.f32 %v4191, %v4161
      %v4193 = vadd.f32 %v4192, %v4162
      %v4194 = vadd.f32 %v4193, %v4163
      %v4195 = vrot.slane %v4194, 4
      %v4196 = vadd.f32 %v4194, %v4195
      %v4197 = vrot.slane %v4196, 2
      %v4198 = vadd.f32 %v4196, %v4197
      %v4199 = vrot.slane %v4198, 1
      %v4200 = vadd.f32 %v4198, %v4199
      %v4201 = vadd.f32 %v4200, 0.0
      %v4202 = vpack.c.bf16 %v4062, %v4062
      %v4203 = vpack.c.bf16 %v4063, %v4063
      %v4204 = vpack.c.bf16 %v4064, %v4064
      %v4205 = vpack.c.bf16 %v4065, %v4065
      %v4206 = vpack.c.bf16 %v4066, %v4066
      %v4207 = vpack.c.bf16 %v4067, %v4067
      %v4208 = vpack.c.bf16 %v4068, %v4068
      %v4209 = vpack.c.bf16 %v4069, %v4069
      %v4210 = vpack.c.bf16 %v4070, %v4070
      %v4211 = vpack.c.bf16 %v4071, %v4071
      %v4212 = vpack.c.bf16 %v4072, %v4072
      %v4213 = vpack.c.bf16 %v4073, %v4073
      %v4214 = vpack.c.bf16 %v4074, %v4074
      %v4215 = vpack.c.bf16 %v4075, %v4075
      %v4216 = vpack.c.bf16 %v4076, %v4076
      %v4217 = vpack.c.bf16 %v4077, %v4077
      %v4218 = vpack.c.bf16 %v4078, %v4078
      %v4219 = vpack.c.bf16 %v4079, %v4079
      %v4220 = vpack.c.bf16 %v4080, %v4080
      %v4221 = vpack.c.bf16 %v4081, %v4081
      %v4222 = vpack.c.bf16 %v4082, %v4082
      %v4223 = vpack.c.bf16 %v4083, %v4083
      %v4224 = vpack.c.bf16 %v4084, %v4084
      %v4225 = vpack.c.bf16 %v4085, %v4085
      %v4226 = vpack.c.bf16 %v4086, %v4086
      %v4227 = vpack.c.bf16 %v4087, %v4087
      %v4228 = vpack.c.bf16 %v4088, %v4088
      %v4229 = vpack.c.bf16 %v4089, %v4089
      %v4230 = vpack.c.bf16 %v4090, %v4090
      %v4231 = vpack.c.bf16 %v4091, %v4091
      %v4232 = vpack.c.bf16 %v4092, %v4092
      %v4233 = vpack.c.bf16 %v4093, %v4093
      %4234 = vst [vmem:[%s177] sm:$0xf] %v4202
      %4235 = vst [vmem:[%s177 + $0x4] sm:$0xf] %v4203
      %4236 = vst [vmem:[%s177 + $0x8] sm:$0xf] %v4204
      %4237 = vst [vmem:[%s177 + $0xc] sm:$0xf] %v4205
      %4238 = vst [vmem:[%s177 + $0x10] sm:$0xf] %v4206
      %4239 = vst [vmem:[%s177 + $0x14] sm:$0xf] %v4207
      %4240 = vst [vmem:[%s177 + $0x18] sm:$0xf] %v4208
      %4241 = vst [vmem:[%s177 + $0x1c] sm:$0xf] %v4209
      %4242 = vst [vmem:[%s177 + $0x20] sm:$0xf] %v4210
      %4243 = vst [vmem:[%s177 + $0x24] sm:$0xf] %v4211
      %4244 = vst [vmem:[%s177 + $0x28] sm:$0xf] %v4212
      %4245 = vst [vmem:[%s177 + $0x2c] sm:$0xf] %v4213
      %4246 = vst [vmem:[%s177 + $0x30] sm:$0xf] %v4214
      %4247 = vst [vmem:[%s177 + $0x34] sm:$0xf] %v4215
      %4248 = vst [vmem:[%s177 + $0x38] sm:$0xf] %v4216
      %4249 = vst [vmem:[%s177 + $0x3c] sm:$0xf] %v4217
      %4250 = vst [vmem:[%s177 + $0x40] sm:$0xf] %v4218
      %4251 = vst [vmem:[%s177 + $0x44] sm:$0xf] %v4219
      %4252 = vst [vmem:[%s177 + $0x48] sm:$0xf] %v4220
      %4253 = vst [vmem:[%s177 + $0x4c] sm:$0xf] %v4221
      %4254 = vst [vmem:[%s177 + $0x50] sm:$0xf] %v4222
      %4255 = vst [vmem:[%s177 + $0x54] sm:$0xf] %v4223
      %4256 = vst [vmem:[%s177 + $0x58] sm:$0xf] %v4224
      %4257 = vst [vmem:[%s177 + $0x5c] sm:$0xf] %v4225
      %4258 = vst [vmem:[%s177 + $0x60] sm:$0xf] %v4226
      %4259 = vst [vmem:[%s177 + $0x64] sm:$0xf] %v4227
      %4260 = vst [vmem:[%s177 + $0x68] sm:$0xf] %v4228
      %4261 = vst [vmem:[%s177 + $0x6c] sm:$0xf] %v4229
      %4262 = vst [vmem:[%s177 + $0x70] sm:$0xf] %v4230
      %4263 = vst [vmem:[%s177 + $0x74] sm:$0xf] %v4231
      %4264 = vst [vmem:[%s177 + $0x78] sm:$0xf] %v4232
      %4265 = vst [vmem:[%s177 + $0x7c] sm:$0xf] %v4233
      %4266 = vst [vmem:[%s181] sm:$0x1] %v4131
      %4267 = vst [vmem:[%s181 + $0x1] sm:$0x1] %v4201
      %p4268 = scmp.lt.s32.totalorder %s15, 1
      %s4269 = scalar_select %p4268, %s15, 1
      %s4270 = smul.addr %s4269, 32
      %s4271 = smul.addr %s4270, 4
      %s4272 = scalar_lea.vmem %s2, %s4271
      %p4273 = scmp.lt.s32.totalorder %s15, 1
      %s4274 = scalar_select %p4273, %s15, 1
      %s4275 = smul.addr %s4274, 2
      %s4276 = scalar_lea.vmem %s3, %s4275
      // Predicated region
      $region29: #{basic_conv2d.2} parent=27 // pred_check
        %p4277 = pneg %p80
      $region30: #{basic_conv2d.2} parent=27 // pred_check_branch
        %4279 = sbr.rel (%p4277) target = $region32
      $region31: #{basic_conv2d.2} parent=27 // pred_region
        _
      $region32: #{basic_conv2d.2} parent=27 // pred_fallthru
        _
      // Predicated region
      $region33: #{basic_conv2d.2} parent=27 // pred_check
        %p4280 = pneg %p106
      $region34: #{basic_conv2d.2} parent=27 // pred_check_branch
        %4282 = sbr.rel (%p4280) target = $region36
      $region35: #{basic_conv2d.2} parent=27 // pred_region
        _
      $region36: #{basic_conv2d.2} parent=27 // pred_fallthru
        _
    $region28: #{basic_conv2d.2} parent=5 // pred_fallthru
      _
    %p4283 = scmp.le.s32.totalorder 2, %s10
    // Predicated region
    $region37: #{basic_conv2d.2} parent=5 // pred_check
      %p4284 = pneg %p4283
    $region38: #{basic_conv2d.2} parent=5 // pred_check_branch
      %4286 = sbr.rel (%p4284) target = $region40
    $region39: #{basic_conv2d.2} parent=5 // pred_region
      %s4287 = ssub.s32 %s10, 2
      // Predicated region
      $region41: #{basic_conv2d.2} parent=39 // pred_check
        %p4288 = pneg %p86
      $region42: #{basic_conv2d.2} parent=39 // pred_check_branch
        %4290 = sbr.rel (%p4288) target = $region44
      $region43: #{basic_conv2d.2} parent=39 // pred_region
        %p4291 = scmp.lt.s32.totalorder %s16, 1
        %s4292 = scalar_select %p4291, %s16, 1
        %s4293 = smul.addr %s4292, 32
        %s4294 = smul.addr %s4293, 4
        %s4295 = scalar_lea.vmem %s2, %s4294
      $region44: #{basic_conv2d.2} parent=39 // pred_fallthru
        _
      // Predicated region
      $region45: #{basic_conv2d.2} parent=39 // pred_check
        %p4296 = pneg %p112
      $region46: #{basic_conv2d.2} parent=39 // pred_check_branch
        %4298 = sbr.rel (%p4296) target = $region48
      $region47: #{basic_conv2d.2} parent=39 // pred_region
        %p4299 = scmp.lt.s32.totalorder %s16, 1
        %s4300 = scalar_select %p4299, %s16, 1
        %s4301 = smul.addr %s4300, 2
        %s4302 = scalar_lea.vmem %s3, %s4301
      $region48: #{basic_conv2d.2} parent=39 // pred_fallthru
        _
    $region40: #{basic_conv2d.2} parent=5 // pred_fallthru
      _
  $region6: #{basic_conv2d.2} parent=0 // loop_footer
    %s14 = sadd.s32 1, %s10
  $region7: #{basic_conv2d.2} parent=0 // loop_footer_branch
    %9 = sbr.rel target = $region3
  $region8: #{basic_conv2d.2} parent=0 // loop_exit
    _

</llo_original>
